<compile_context>
chip_gen: v5e
topology: v5e:2x2
jax: 0.10.0
libtpu: 0.0.40
codegen_flags: <defaults>
</compile_context>

<pallas_src>
import functools

import jax
import jax.numpy as jnp
from jax.experimental import pallas as pl
from jax.experimental.pallas import tpu as pltpu


def _layer_norm(x, gamma, beta, eps=1e-5):
    mean = jnp.mean(x, axis=-1, keepdims=True)
    var = jnp.mean((x - mean) ** 2, axis=-1, keepdims=True)
    return (x - mean) * jax.lax.rsqrt(var + eps) * gamma + beta


def _encoder_layer_kernel(n_head, tq, return_weights,
                          x_ref,
                          wqkv_ref, bqkv_ref,
                          wo_ref, bo_ref,
                          g1_ref, be1_ref, g2_ref, be2_ref,
                          w1_ref, b1_ref, w2_ref, b2_ref,
                          out_ref, *rest):
    if return_weights:
        attnw_ref, q_scr, kv_scr = rest
    else:
        attnw_ref = None
        q_scr, kv_scr = rest

    S, E = x_ref.shape[1], x_ref.shape[2]
    H = n_head
    hd = E // H
    cdt = q_scr.dtype              # MXU compute dtype (bf16 fast path or f32)
    qi = pl.program_id(1)

    # ---- once per batch element: LN1 + fused QKV projection (q pre-scaled),
    #      written head-major into the carried VMEM scratches ----
    @pl.when(qi == 0)
    def _():
        x_all = x_ref[0]                                          # (S, E) f32
        x2 = _layer_norm(x_all, g1_ref[...], be1_ref[...])
        qkv = (jnp.dot(x2.astype(wqkv_ref.dtype), wqkv_ref[...],
                       preferred_element_type=jnp.float32)
               + bqkv_ref[...])                                   # (S, 3E) f32
        q = qkv[:, 0:E]
        k = qkv[:, E:2 * E]
        v = qkv[:, 2 * E:3 * E]
        q_scr[...] = jnp.swapaxes(q.reshape(S, H, hd), 0, 1).astype(cdt)
        kv_scr[0] = jnp.swapaxes(k.reshape(S, H, hd), 0, 1).astype(cdt)
        kv_scr[1] = jnp.swapaxes(v.reshape(S, H, hd), 0, 1).astype(cdt)

    row0 = pl.multiple_of(qi * tq, tq)

    # ---- batched multi-head attention for this query tile: slice the
    #      head-major scratches directly (no per-tile relayout) ----
    qh = q_scr[:, pl.ds(row0, tq), :]                             # (H, tq, hd)
    kh = kv_scr[0]                                                # (H, S, hd)
    vh = kv_scr[1]                                                # (H, S, hd)

    s = jnp.einsum('hqd,hkd->hqk', qh, kh,
                   preferred_element_type=jnp.float32)            # (H, tq, S)
    # TODO(synk): optional additive src_mask (attn_mask) would be added to `s` here.
    s = s - jnp.max(s, axis=-1, keepdims=True)
    p = jnp.exp(s)
    denom = jnp.sum(p, axis=-1, keepdims=True)
    inv = pl.reciprocal(denom, approx=True)                       # EUP slot
    inv = inv * (2.0 - denom * inv)    # one Newton step -> ~f32-exact probs
    p = p * inv

    if attnw_ref is not None:
        attnw_ref[0] = p.astype(attnw_ref.dtype)                  # single block store

    ctx = jnp.einsum('hqk,hkd->hqd', p.astype(cdt), vh,
                     preferred_element_type=jnp.float32)          # (H, tq, hd)
    ctx = jnp.swapaxes(ctx, 0, 1).reshape(tq, E)                  # (tq, E)

    attn_out = (jnp.dot(ctx.astype(wo_ref.dtype), wo_ref[...],
                        preferred_element_type=jnp.float32)
                + bo_ref[...])

    x_rows = x_ref.at[0][pl.ds(row0, tq), :]                      # residual rows (tq, E)
    y = x_rows + attn_out

    # ---- pre_norm_2 + feed-forward ----
    y2 = _layer_norm(y, g2_ref[...], be2_ref[...])
    h1 = jnp.maximum(
        jnp.dot(y2.astype(w1_ref.dtype), w1_ref[...],
                preferred_element_type=jnp.float32) + b1_ref[...], 0.0)
    ff = jnp.dot(h1.astype(w2_ref.dtype), w2_ref[...],
                 preferred_element_type=jnp.float32) + b2_ref[...]
    out_ref[0] = y + ff


def prepare_params(params, n_head, compute_dtype=jnp.bfloat16):
    """One-time packing of PyTorch-layout weights (call OUTSIDE the hot path).

    - wq|wk|wv are transposed to (in,out) and fused into one (E,3E) matrix;
      the 1/sqrt(head_dim) query scale is folded into wq / bq.
    - compute_dtype=bf16 (default) is the MXU fast path on v5e/v6e/v7x: it
      halves weight DMA bytes and the Q/K/V scratch VMEM while keeping f32
      accumulation; LN / softmax math stays f32.  Pass jnp.float32 for an
      exact-precision path.
    """
    E = params["wq"].shape[0]
    hd = E // n_head
    scale = float(hd) ** -0.5
    wqkv = jnp.concatenate(
        [params["wq"].T * scale, params["wk"].T, params["wv"].T], axis=1)   # (E, 3E)
    bqkv = jnp.concatenate(
        [params["bq"] * scale, params["bk"], params["bv"]]).reshape(1, -1)  # (1, 3E)
    return dict(
        wqkv=wqkv.astype(compute_dtype),
        bqkv=bqkv.astype(jnp.float32),
        wo=params["wo"].T.astype(compute_dtype),
        bo=params["bo"].reshape(1, -1).astype(jnp.float32),
        g1=params["g1"].reshape(1, -1).astype(jnp.float32),
        be1=params["be1"].reshape(1, -1).astype(jnp.float32),
        g2=params["g2"].reshape(1, -1).astype(jnp.float32),
        be2=params["be2"].reshape(1, -1).astype(jnp.float32),
        w1=params["w1"].T.astype(compute_dtype),
        b1=params["b1"].reshape(1, -1).astype(jnp.float32),
        w2=params["w2"].T.astype(compute_dtype),
        b2=params["b2"].reshape(1, -1).astype(jnp.float32),
    )


def _vmem_capacity_bytes():
    try:
        return int(pltpu.get_tpu_info().vmem_capacity_bytes)
    except Exception:
        return 64 * 1024 * 1024          # conservative (v7x per-TC)


def _pick_q_tile(S, max_tq):
    for t in (512, 256, 128, 64, 32, 16, 8):
        if t <= max_tq and t <= S and S % t == 0:
            return t
    return S


def transformer_encoder_layer(x, packed, n_head, *, max_tq=None,
                              return_weights=True,
                              attnw_dtype=jnp.float32):
    """x: (B, S, E) f32, packed = prepare_params(...).

    Returns (out (B,S,E) f32, attn_weights (B,H,S,S) attnw_dtype), or
    (out, None) when return_weights=False (skips the B*H*S^2 writeback)."""
    B, S, E = x.shape
    assert E % n_head == 0, "embed_dim must be divisible by n_head"
    H = n_head
    hd = E // H
    n_hid = packed["w1"].shape[1]
    cdt = packed["wqkv"].dtype
    cbytes = jnp.dtype(cdt).itemsize
    awbytes = jnp.dtype(attnw_dtype).itemsize

    vmem_cap = _vmem_capacity_bytes()
    if max_tq is None:
        # Generation-aware default: 64 MiB parts (v7x) -> 256, 128 MiB -> 512.
        max_tq = 256 if vmem_cap <= 64 * 1024 * 1024 else 512
    tq = _pick_q_tile(S, max_tq)
    nq = S // tq

    w_args = (packed["wqkv"], packed["bqkv"], packed["wo"], packed["bo"],
              packed["g1"], packed["be1"], packed["g2"], packed["be2"],
              packed["w1"], packed["b1"], packed["w2"], packed["b2"])
    w_bytes = sum(int(a.size) * a.dtype.itemsize for a in w_args)

    # VMEM estimate: double-buffered x/out/attnw blocks, Q/KV scratches, the
    # transient (S,3E) QKV result at qi==0, score/prob temporaries, FFN temps,
    # plus (single-buffered) weights.  Capped at 85% of physical VMEM.
    est = (2 * S * E * 4
           + 2 * tq * E * 4
           + (2 * H * tq * S * awbytes if return_weights else 0)
           + 3 * S * E * cbytes
           + 3 * S * E * 4
           + 2 * H * tq * S * 4
           + 2 * tq * max(n_hid, E) * 4
           + w_bytes)
    cp_kwargs = dict(dimension_semantics=("parallel", "arbitrary"))
    needed = int(est * 1.25) + (1 << 20)
    if needed > 16 * 1024 * 1024:
        cp_kwargs["vmem_limit_bytes"] = min(max(needed, 32 * 1024 * 1024),
                                            int(vmem_cap * 0.85))

    kernel = functools.partial(_encoder_layer_kernel, H, tq, return_weights)

    out_shapes = [jax.ShapeDtypeStruct((B, S, E), jnp.float32)]
    out_specs = [pl.BlockSpec((1, tq, E), lambda b, qi: (b, qi, 0))]
    if return_weights:
        out_shapes.append(jax.ShapeDtypeStruct((B, H, S, S), attnw_dtype))
        out_specs.append(pl.BlockSpec((1, H, tq, S), lambda b, qi: (b, 0, qi, 0)))

    def call(single_buffer_weights):
        def w_spec(arr):
            nd = arr.ndim
            kw = {"pipeline_mode": pl.Buffered(1)} if single_buffer_weights else {}
            return pl.BlockSpec(arr.shape, lambda b, qi, _nd=nd: (0,) * _nd, **kw)

        in_specs = [pl.BlockSpec((1, S, E), lambda b, qi: (b, 0, 0))] + [
            w_spec(a) for a in w_args]
        return pl.pallas_call(
            kernel,
            out_shape=tuple(out_shapes),
            grid_spec=pltpu.PrefetchScalarGridSpec(
                num_scalar_prefetch=0,
                grid=(B, nq),
                in_specs=in_specs,
                out_specs=out_specs,
                scratch_shapes=[pltpu.VMEM((H, S, hd), cdt),
                                pltpu.VMEM((2, H, S, hd), cdt)]),
            compiler_params=pltpu.CompilerParams(**cp_kwargs),
        )(x, *w_args)

    # Weights have constant index_maps, so double-buffering them only wastes
    # VMEM; request single-buffering, falling back if this JAX build rejects
    # per-BlockSpec pipeline_mode.
    try:
        res = call(True)
    except Exception:
        res = call(False)

    if return_weights:
        return res
    return res[0], None


# ---------------- pure-JAX reference (for verification) ----------------
def reference(x, p, n_head):
    B, S, E = x.shape
    hd = E // n_head

    def ln(y, g, b):
        m = jnp.mean(y, axis=-1, keepdims=True)
        v = jnp.mean((y - m) ** 2, axis=-1, keepdims=True)
        return (y - m) * jax.lax.rsqrt(v + 1e-5) * g + b

    x2 = ln(x, p["g1"], p["be1"])
    q = x2 @ p["wq"].T + p["bq"]
    k = x2 @ p["wk"].T + p["bk"]
    v = x2 @ p["wv"].T + p["bv"]
    q = q.reshape(B, S, n_head, hd).transpose(0, 2, 1, 3) * (float(hd) ** -0.5)
    k = k.reshape(B, S, n_head, hd).transpose(0, 2, 1, 3)
    v = v.reshape(B, S, n_head, hd).transpose(0, 2, 1, 3)
    scores = q @ k.transpose(0, 1, 3, 2)
    w = jax.nn.softmax(scores, axis=-1)                       # (B, H, S, S)
    ctx = (w @ v).transpose(0, 2, 1, 3).reshape(B, S, E)
    attn = ctx @ p["wo"].T + p["bo"]
    x = x + attn
    x2 = ln(x, p["g2"], p["be2"])
    ff = jnp.maximum(x2 @ p["w1"].T + p["b1"], 0.0) @ p["w2"].T + p["b2"]
    return x + ff, w


if __name__ == "__main__":
    B, S, E, H, NHID = 2, 16, 64, 4, 128

    key = jax.random.PRNGKey(0)
    ks = jax.random.split(key, 16)

    def init_linear(kw, kb, in_d, out_d):
        w = jax.random.normal(kw, (out_d, in_d), jnp.float32) * (in_d ** -0.5)
        b = jax.random.normal(kb, (out_d,), jnp.float32) * 0.02
        return w, b

    wq, bq = init_linear(ks[0], ks[1], E, E)
    wk, bk = init_linear(ks[2], ks[3], E, E)
    wv, bv = init_linear(ks[4], ks[5], E, E)
    wo, bo = init_linear(ks[6], ks[7], E, E)
    w1, b1 = init_linear(ks[8], ks[9], E, NHID)
    w2, b2 = init_linear(ks[10], ks[11], NHID, E)
    g1 = 1.0 + 0.05 * jax.random.normal(ks[12], (E,), jnp.float32)
    be1 = 0.05 * jax.random.normal(ks[13], (E,), jnp.float32)
    g2 = 1.0 + 0.05 * jax.random.normal(ks[14], (E,), jnp.float32)
    be2 = 0.05 * jax.random.normal(ks[15], (E,), jnp.float32)

    params = dict(wq=wq, bq=bq, wk=wk, bk=bk, wv=wv, bv=bv, wo=wo, bo=bo,
                  g1=g1, be1=be1, g2=g2, be2=be2,
                  w1=w1, b1=b1, w2=w2, b2=b2)

    x = jax.random.normal(jax.random.PRNGKey(42), (B, S, E), jnp.float32)
    ref_out, ref_w = reference(x, params, H)

    # ---- f32 compute path (tight check). max_tq=8 forces 2 query tiles so
    #      the (B, nq) grid + head-major scratch carry is exercised. ----
    packed32 = prepare_params(params, H, compute_dtype=jnp.float32)
    out32, w32 = transformer_encoder_layer(x, packed32, H, max_tq=8)
    out32, w32 = jax.block_until_ready((out32, w32))
    assert out32.shape == (B, S, E) and w32.shape == (B, H, S, S)
    assert jnp.allclose(w32, ref_w, atol=2e-2, rtol=2e-2)
    assert jnp.allclose(out32, ref_out, atol=2e-2, rtol=2e-2)

    # ---- bf16 MXU fast path (default packing): f32 accumulation, bf16
    #      operands -> looser tolerance vs. the f32 reference. ----
    packed16 = prepare_params(params, H)   # compute_dtype=jnp.bfloat16
    out16, w16 = transformer_encoder_layer(x, packed16, H, max_tq=8)
    out16, w16 = jax.block_until_ready((out16, w16))
    assert out16.shape == (B, S, E) and w16.shape == (B, H, S, S)
    assert jnp.allclose(w16, ref_w, atol=8e-2, rtol=8e-2)
    assert jnp.allclose(out16, ref_out, atol=8e-2, rtol=8e-2)

    print("KERNEL_OK")
</pallas_src>

<mosaic_0001>
module attributes {stable_mosaic.version = 11 : i64} {
  func.func @_encoder_layer_kernel(%arg0: i32, %arg1: i32, %arg2: memref<1x16x64xf32, #tpu.memory_space<vmem>>, %arg3: memref<64x192xf32, #tpu.memory_space<vmem>>, %arg4: memref<1x192xf32, #tpu.memory_space<vmem>>, %arg5: memref<64x64xf32, #tpu.memory_space<vmem>>, %arg6: memref<1x64xf32, #tpu.memory_space<vmem>>, %arg7: memref<1x64xf32, #tpu.memory_space<vmem>>, %arg8: memref<1x64xf32, #tpu.memory_space<vmem>>, %arg9: memref<1x64xf32, #tpu.memory_space<vmem>>, %arg10: memref<1x64xf32, #tpu.memory_space<vmem>>, %arg11: memref<64x128xf32, #tpu.memory_space<vmem>>, %arg12: memref<1x128xf32, #tpu.memory_space<vmem>>, %arg13: memref<128x64xf32, #tpu.memory_space<vmem>>, %arg14: memref<1x64xf32, #tpu.memory_space<vmem>>, %arg15: memref<1x8x64xf32, #tpu.memory_space<vmem>>, %arg16: memref<1x4x8x16xf32, #tpu.memory_space<vmem>>, %arg17: memref<4x16x16xf32, #tpu.memory_space<vmem>>, %arg18: memref<2x4x16x16xf32, #tpu.memory_space<vmem>>) attributes {dimension_semantics = [#tpu.dimension_semantics<parallel>, #tpu.dimension_semantics<arbitrary>], iteration_bounds = array<i64: 2, 2>, scalar_prefetch = 0 : i64, scratch_operands = 2 : i64, tpu.core_type = #tpu.core_type<tc>, window_params = [{transform_indices = @transform_0, window_bounds = array<i64: 1, 16, 64>}, {pipeline_mode = #tpu.pipeline_mode<synchronous>, transform_indices = @transform_1, window_bounds = array<i64: 64, 192>}, {pipeline_mode = #tpu.pipeline_mode<synchronous>, transform_indices = @transform_2, window_bounds = array<i64: 1, 192>}, {pipeline_mode = #tpu.pipeline_mode<synchronous>, transform_indices = @transform_3, window_bounds = array<i64: 64, 64>}, {pipeline_mode = #tpu.pipeline_mode<synchronous>, transform_indices = @transform_4, window_bounds = array<i64: 1, 64>}, {pipeline_mode = #tpu.pipeline_mode<synchronous>, transform_indices = @transform_5, window_bounds = array<i64: 1, 64>}, {pipeline_mode = #tpu.pipeline_mode<synchronous>, transform_indices = @transform_6, window_bounds = array<i64: 1, 64>}, {pipeline_mode = #tpu.pipeline_mode<synchronous>, transform_indices = @transform_7, window_bounds = array<i64: 1, 64>}, {pipeline_mode = #tpu.pipeline_mode<synchronous>, transform_indices = @transform_8, window_bounds = array<i64: 1, 64>}, {pipeline_mode = #tpu.pipeline_mode<synchronous>, transform_indices = @transform_9, window_bounds = array<i64: 64, 128>}, {pipeline_mode = #tpu.pipeline_mode<synchronous>, transform_indices = @transform_10, window_bounds = array<i64: 1, 128>}, {pipeline_mode = #tpu.pipeline_mode<synchronous>, transform_indices = @transform_11, window_bounds = array<i64: 128, 64>}, {pipeline_mode = #tpu.pipeline_mode<synchronous>, transform_indices = @transform_12, window_bounds = array<i64: 1, 64>}, {transform_indices = @transform_13, window_bounds = array<i64: 1, 8, 64>}, {transform_indices = @transform_14, window_bounds = array<i64: 1, 4, 8, 16>}]} {
    %c0_i32 = arith.constant 0 : i32
    %0 = arith.cmpi eq, %arg1, %c0_i32 : i32
    %1 = arith.extui %0 : i1 to i32
    %c0_i32_0 = arith.constant 0 : i32
    %2 = arith.cmpi ne, %1, %c0_i32_0 : i32
    scf.if %2 {
      %c0_49 = arith.constant 0 : index
      %c0_50 = arith.constant 0 : index
      %c0_51 = arith.constant 0 : index
      %82 = vector.load %arg2[%c0_49, %c0_50, %c0_51] : memref<1x16x64xf32, #tpu.memory_space<vmem>>, vector<1x16x64xf32>
      %83 = vector.shape_cast %82 : vector<1x16x64xf32> to vector<16x64xf32>
      %c0_52 = arith.constant 0 : index
      %c0_53 = arith.constant 0 : index
      %84 = vector.load %arg7[%c0_52, %c0_53] : memref<1x64xf32, #tpu.memory_space<vmem>>, vector<1x64xf32>
      %c0_54 = arith.constant 0 : index
      %c0_55 = arith.constant 0 : index
      %85 = vector.load %arg8[%c0_54, %c0_55] : memref<1x64xf32, #tpu.memory_space<vmem>>, vector<1x64xf32>
      %cst_56 = arith.constant dense<0.000000e+00> : vector<16xf32>
      %86 = vector.multi_reduction <add>, %83, %cst_56 [1] : vector<16x64xf32> to vector<16xf32>
      %87 = vector.shape_cast %86 : vector<16xf32> to vector<16x1xf32>
      %cst_57 = arith.constant 6.400000e+01 : f32
      %88 = vector.broadcast %cst_57 : f32 to vector<16x1xf32>
      %89 = arith.divf %87, %88 : vector<16x1xf32>
      %90 = vector.broadcast %89 : vector<16x1xf32> to vector<16x64xf32>
      %91 = arith.subf %83, %90 : vector<16x64xf32>
      %92 = arith.mulf %91, %91 : vector<16x64xf32>
      %cst_58 = arith.constant dense<0.000000e+00> : vector<16xf32>
      %93 = vector.multi_reduction <add>, %92, %cst_58 [1] : vector<16x64xf32> to vector<16xf32>
      %94 = vector.shape_cast %93 : vector<16xf32> to vector<16x1xf32>
      %cst_59 = arith.constant 6.400000e+01 : f32
      %95 = vector.broadcast %cst_59 : f32 to vector<16x1xf32>
      %96 = arith.divf %94, %95 : vector<16x1xf32>
      %97 = vector.broadcast %89 : vector<16x1xf32> to vector<16x64xf32>
      %98 = arith.subf %83, %97 : vector<16x64xf32>
      %cst_60 = arith.constant 9.99999974E-6 : f32
      %99 = vector.broadcast %cst_60 : f32 to vector<16x1xf32>
      %100 = arith.addf %96, %99 : vector<16x1xf32>
      %101 = math.rsqrt %100 : vector<16x1xf32>
      %102 = vector.broadcast %101 : vector<16x1xf32> to vector<16x64xf32>
      %103 = arith.mulf %98, %102 : vector<16x64xf32>
      %104 = vector.broadcast %84 : vector<1x64xf32> to vector<16x64xf32>
      %105 = arith.mulf %103, %104 : vector<16x64xf32>
      %106 = vector.broadcast %85 : vector<1x64xf32> to vector<16x64xf32>
      %107 = arith.addf %105, %106 : vector<16x64xf32>
      %c0_61 = arith.constant 0 : index
      %c0_62 = arith.constant 0 : index
      %108 = vector.load %arg3[%c0_61, %c0_62] : memref<64x192xf32, #tpu.memory_space<vmem>>, vector<64x192xf32>
      %cst_63 = arith.constant dense<0.000000e+00> : vector<16x192xf32>
      %109 = tpu.matmul %107, %108, %cst_63 {dimension_numbers = #tpu.dot_dimension_numbers<[1], [0], [0], [1], [0, 0, 1, 1], [], []>} : vector<16x64xf32>, vector<64x192xf32>, vector<16x192xf32> -> vector<16x192xf32>
      %c0_64 = arith.constant 0 : index
      %c0_65 = arith.constant 0 : index
      %110 = vector.load %arg4[%c0_64, %c0_65] : memref<1x192xf32, #tpu.memory_space<vmem>>, vector<1x192xf32>
      %111 = vector.broadcast %110 : vector<1x192xf32> to vector<16x192xf32>
      %112 = arith.addf %109, %111 : vector<16x192xf32>
      %113 = vector.extract_strided_slice %112 {offsets = [0, 0], sizes = [16, 64], strides = [1, 1]} : vector<16x192xf32> to vector<16x64xf32>
      %114 = vector.extract_strided_slice %112 {offsets = [0, 64], sizes = [16, 64], strides = [1, 1]} : vector<16x192xf32> to vector<16x64xf32>
      %115 = vector.extract_strided_slice %112 {offsets = [0, 128], sizes = [16, 64], strides = [1, 1]} : vector<16x192xf32> to vector<16x64xf32>
      %116 = vector.shape_cast %113 : vector<16x64xf32> to vector<16x4x16xf32>
      %117 = tpu.transpose %116, [1, 0, 2] : vector<16x4x16xf32> -> vector<4x16x16xf32>
      %c0_66 = arith.constant 0 : index
      %c0_67 = arith.constant 0 : index
      %c0_68 = arith.constant 0 : index
      %118 = vector.load %arg17[%c0_66, %c0_67, %c0_68] : memref<4x16x16xf32, #tpu.memory_space<vmem>>, vector<4x16x16xf32>
      tpu.vector_store %arg17[%c0_66, %c0_67, %c0_68], %117 {strides = array<i32>} : memref<4x16x16xf32, #tpu.memory_space<vmem>>, vector<4x16x16xf32>,
      %119 = vector.shape_cast %114 : vector<16x64xf32> to vector<16x4x16xf32>
      %120 = tpu.transpose %119, [1, 0, 2] : vector<16x4x16xf32> -> vector<4x16x16xf32>
      %c0_69 = arith.constant 0 : index
      %c0_70 = arith.constant 0 : index
      %c0_71 = arith.constant 0 : index
      %c0_72 = arith.constant 0 : index
      %121 = vector.load %arg18[%c0_69, %c0_70, %c0_71, %c0_72] : memref<2x4x16x16xf32, #tpu.memory_space<vmem>>, vector<1x4x16x16xf32>
      %122 = vector.shape_cast %121 : vector<1x4x16x16xf32> to vector<4x16x16xf32>
      %123 = vector.shape_cast %120 : vector<4x16x16xf32> to vector<1x4x16x16xf32>
      tpu.vector_store %arg18[%c0_69, %c0_70, %c0_71, %c0_72], %123 {strides = array<i32>} : memref<2x4x16x16xf32, #tpu.memory_space<vmem>>, vector<1x4x16x16xf32>,
      %124 = vector.shape_cast %115 : vector<16x64xf32> to vector<16x4x16xf32>
      %125 = tpu.transpose %124, [1, 0, 2] : vector<16x4x16xf32> -> vector<4x16x16xf32>
      %c1_73 = arith.constant 1 : index
      %c0_74 = arith.constant 0 : index
      %c0_75 = arith.constant 0 : index
      %c0_76 = arith.constant 0 : index
      %126 = vector.load %arg18[%c1_73, %c0_74, %c0_75, %c0_76] : memref<2x4x16x16xf32, #tpu.memory_space<vmem>>, vector<1x4x16x16xf32>
      %127 = vector.shape_cast %126 : vector<1x4x16x16xf32> to vector<4x16x16xf32>
      %128 = vector.shape_cast %125 : vector<4x16x16xf32> to vector<1x4x16x16xf32>
      tpu.vector_store %arg18[%c1_73, %c0_74, %c0_75, %c0_76], %128 {strides = array<i32>} : memref<2x4x16x16xf32, #tpu.memory_space<vmem>>, vector<1x4x16x16xf32>,
    } else {
    }
    %c8_i32 = arith.constant 8 : i32
    %3 = arith.muli %arg1, %c8_i32 : i32
    %4 = tpu.assume_multiple %3, 8 : i32
    %c0 = arith.constant 0 : index
    %5 = arith.index_cast %4 : i32 to index
    %c0_1 = arith.constant 0 : index
    %6 = vector.load %arg17[%c0, %5, %c0_1] : memref<4x16x16xf32, #tpu.memory_space<vmem>>, vector<4x8x16xf32>
    %c0_2 = arith.constant 0 : index
    %c0_3 = arith.constant 0 : index
    %c0_4 = arith.constant 0 : index
    %c0_5 = arith.constant 0 : index
    %7 = vector.load %arg18[%c0_2, %c0_3, %c0_4, %c0_5] : memref<2x4x16x16xf32, #tpu.memory_space<vmem>>, vector<1x4x16x16xf32>
    %8 = vector.shape_cast %7 : vector<1x4x16x16xf32> to vector<4x16x16xf32>
    %c1 = arith.constant 1 : index
    %c0_6 = arith.constant 0 : index
    %c0_7 = arith.constant 0 : index
    %c0_8 = arith.constant 0 : index
    %9 = vector.load %arg18[%c1, %c0_6, %c0_7, %c0_8] : memref<2x4x16x16xf32, #tpu.memory_space<vmem>>, vector<1x4x16x16xf32>
    %10 = vector.shape_cast %9 : vector<1x4x16x16xf32> to vector<4x16x16xf32>
    "tpu.trace_start"() <{level = 10 : i32, message = "hqd,hkd->hqk"}> : () -> ()
    %cst = arith.constant dense<0.000000e+00> : vector<4x8x16xf32>
    %11 = tpu.matmul %6, %8, %cst {dimension_numbers = #tpu.dot_dimension_numbers<[2], [2], [1], [1], [0, 0, 0, 1, 1, 1], [0], [0]>} : vector<4x8x16xf32>, vector<4x16x16xf32>, vector<4x8x16xf32> -> vector<4x8x16xf32>
    "tpu.trace_stop"() : () -> ()
    %cst_9 = arith.constant dense<0xFF800000> : vector<4x8xf32>
    %12 = vector.multi_reduction <maximumf>, %11, %cst_9 [2] : vector<4x8x16xf32> to vector<4x8xf32>
    %13 = vector.shape_cast %12 : vector<4x8xf32> to vector<4x8x1xf32>
    %14 = vector.broadcast %13 : vector<4x8x1xf32> to vector<4x8x16xf32>
    %15 = arith.subf %11, %14 : vector<4x8x16xf32>
    %16 = math.exp %15 : vector<4x8x16xf32>
    %cst_10 = arith.constant dense<0.000000e+00> : vector<4x8xf32>
    %17 = vector.multi_reduction <add>, %16, %cst_10 [2] : vector<4x8x16xf32> to vector<4x8xf32>
    %18 = vector.shape_cast %17 : vector<4x8xf32> to vector<4x8x1xf32>
    %19 = tpu.reciprocal %18 {approx = true} : vector<4x8x1xf32> -> vector<4x8x1xf32>
    %20 = arith.mulf %18, %19 : vector<4x8x1xf32>
    %cst_11 = arith.constant 2.000000e+00 : f32
    %21 = vector.broadcast %cst_11 : f32 to vector<4x8x1xf32>
    %22 = arith.subf %21, %20 : vector<4x8x1xf32>
    %23 = arith.mulf %19, %22 : vector<4x8x1xf32>
    %24 = vector.broadcast %23 : vector<4x8x1xf32> to vector<4x8x16xf32>
    %25 = arith.mulf %16, %24 : vector<4x8x16xf32>
    %c0_12 = arith.constant 0 : index
    %c0_13 = arith.constant 0 : index
    %c0_14 = arith.constant 0 : index
    %c0_15 = arith.constant 0 : index
    %26 = vector.load %arg16[%c0_12, %c0_13, %c0_14, %c0_15] : memref<1x4x8x16xf32, #tpu.memory_space<vmem>>, vector<1x4x8x16xf32>
    %27 = vector.shape_cast %26 : vector<1x4x8x16xf32> to vector<4x8x16xf32>
    %28 = vector.shape_cast %25 : vector<4x8x16xf32> to vector<1x4x8x16xf32>
    tpu.vector_store %arg16[%c0_12, %c0_13, %c0_14, %c0_15], %28 {strides = array<i32>} : memref<1x4x8x16xf32, #tpu.memory_space<vmem>>, vector<1x4x8x16xf32>,
    "tpu.trace_start"() <{level = 10 : i32, message = "hqk,hkd->hqd"}> : () -> ()
    %cst_16 = arith.constant dense<0.000000e+00> : vector<4x8x16xf32>
    %29 = tpu.matmul %25, %10, %cst_16 {dimension_numbers = #tpu.dot_dimension_numbers<[2], [1], [1], [2], [0, 0, 0, 1, 1, 2], [0], [0]>} : vector<4x8x16xf32>, vector<4x16x16xf32>, vector<4x8x16xf32> -> vector<4x8x16xf32>
    "tpu.trace_stop"() : () -> ()
    %30 = tpu.transpose %29, [1, 0, 2] : vector<4x8x16xf32> -> vector<8x4x16xf32>
    %31 = vector.shape_cast %30 : vector<8x4x16xf32> to vector<8x64xf32>
    %c0_17 = arith.constant 0 : index
    %c0_18 = arith.constant 0 : index
    %32 = vector.load %arg5[%c0_17, %c0_18] : memref<64x64xf32, #tpu.memory_space<vmem>>, vector<64x64xf32>
    %cst_19 = arith.constant dense<0.000000e+00> : vector<8x64xf32>
    %33 = tpu.matmul %31, %32, %cst_19 {dimension_numbers = #tpu.dot_dimension_numbers<[1], [0], [0], [1], [0, 0, 1, 1], [], []>} : vector<8x64xf32>, vector<64x64xf32>, vector<8x64xf32> -> vector<8x64xf32>
    %c0_20 = arith.constant 0 : index
    %c0_21 = arith.constant 0 : index
    %34 = vector.load %arg6[%c0_20, %c0_21] : memref<1x64xf32, #tpu.memory_space<vmem>>, vector<1x64xf32>
    %35 = vector.broadcast %34 : vector<1x64xf32> to vector<8x64xf32>
    %36 = arith.addf %33, %35 : vector<8x64xf32>
    %c0_i32_22 = arith.constant 0 : i32
    %c0_i32_23 = arith.constant 0 : i32
    %c0_i32_24 = arith.constant 0 : i32
    %37 = tpu.memref_slice %arg2[%c0_i32_22, %c0_i32_23, %c0_i32_24] : memref<1x16x64xf32, #tpu.memory_space<vmem>> -> memref<1x16x64xf32, #tpu.memory_space<vmem>>
    %38 = tpu.memref_squeeze %37 : memref<1x16x64xf32, #tpu.memory_space<vmem>> -> memref<16x64xf32, #tpu.memory_space<vmem>>
    %39 = arith.index_cast %4 : i32 to index
    %c0_25 = arith.constant 0 : index
    %40 = vector.load %38[%39, %c0_25] : memref<16x64xf32, #tpu.memory_space<vmem>>, vector<8x64xf32>
    %41 = arith.addf %40, %36 : vector<8x64xf32>
    %c0_26 = arith.constant 0 : index
    %c0_27 = arith.constant 0 : index
    %42 = vector.load %arg9[%c0_26, %c0_27] : memref<1x64xf32, #tpu.memory_space<vmem>>, vector<1x64xf32>
    %c0_28 = arith.constant 0 : index
    %c0_29 = arith.constant 0 : index
    %43 = vector.load %arg10[%c0_28, %c0_29] : memref<1x64xf32, #tpu.memory_space<vmem>>, vector<1x64xf32>
    %cst_30 = arith.constant dense<0.000000e+00> : vector<8xf32>
    %44 = vector.multi_reduction <add>, %41, %cst_30 [1] : vector<8x64xf32> to vector<8xf32>
    %45 = vector.shape_cast %44 : vector<8xf32> to vector<8x1xf32>
    %cst_31 = arith.constant 6.400000e+01 : f32
    %46 = vector.broadcast %cst_31 : f32 to vector<8x1xf32>
    %47 = arith.divf %45, %46 : vector<8x1xf32>
    %48 = vector.broadcast %47 : vector<8x1xf32> to vector<8x64xf32>
    %49 = arith.subf %41, %48 : vector<8x64xf32>
    %50 = arith.mulf %49, %49 : vector<8x64xf32>
    %cst_32 = arith.constant dense<0.000000e+00> : vector<8xf32>
    %51 = vector.multi_reduction <add>, %50, %cst_32 [1] : vector<8x64xf32> to vector<8xf32>
    %52 = vector.shape_cast %51 : vector<8xf32> to vector<8x1xf32>
    %cst_33 = arith.constant 6.400000e+01 : f32
    %53 = vector.broadcast %cst_33 : f32 to vector<8x1xf32>
    %54 = arith.divf %52, %53 : vector<8x1xf32>
    %55 = vector.broadcast %47 : vector<8x1xf32> to vector<8x64xf32>
    %56 = arith.subf %41, %55 : vector<8x64xf32>
    %cst_34 = arith.constant 9.99999974E-6 : f32
    %57 = vector.broadcast %cst_34 : f32 to vector<8x1xf32>
    %58 = arith.addf %54, %57 : vector<8x1xf32>
    %59 = math.rsqrt %58 : vector<8x1xf32>
    %60 = vector.broadcast %59 : vector<8x1xf32> to vector<8x64xf32>
    %61 = arith.mulf %56, %60 : vector<8x64xf32>
    %62 = vector.broadcast %42 : vector<1x64xf32> to vector<8x64xf32>
    %63 = arith.mulf %61, %62 : vector<8x64xf32>
    %64 = vector.broadcast %43 : vector<1x64xf32> to vector<8x64xf32>
    %65 = arith.addf %63, %64 : vector<8x64xf32>
    %c0_35 = arith.constant 0 : index
    %c0_36 = arith.constant 0 : index
    %66 = vector.load %arg11[%c0_35, %c0_36] : memref<64x128xf32, #tpu.memory_space<vmem>>, vector<64x128xf32>
    %cst_37 = arith.constant dense<0.000000e+00> : vector<8x128xf32>
    %67 = tpu.matmul %65, %66, %cst_37 {dimension_numbers = #tpu.dot_dimension_numbers<[1], [0], [0], [1], [0, 0, 1, 1], [], []>} : vector<8x64xf32>, vector<64x128xf32>, vector<8x128xf32> -> vector<8x128xf32>
    %c0_38 = arith.constant 0 : index
    %c0_39 = arith.constant 0 : index
    %68 = vector.load %arg12[%c0_38, %c0_39] : memref<1x128xf32, #tpu.memory_space<vmem>>, vector<1x128xf32>
    %69 = vector.broadcast %68 : vector<1x128xf32> to vector<8x128xf32>
    %70 = arith.addf %67, %69 : vector<8x128xf32>
    %cst_40 = arith.constant 0.000000e+00 : f32
    %71 = vector.broadcast %cst_40 : f32 to vector<8x128xf32>
    %72 = arith.maximumf %70, %71 : vector<8x128xf32>
    %c0_41 = arith.constant 0 : index
    %c0_42 = arith.constant 0 : index
    %73 = vector.load %arg13[%c0_41, %c0_42] : memref<128x64xf32, #tpu.memory_space<vmem>>, vector<128x64xf32>
    %cst_43 = arith.constant dense<0.000000e+00> : vector<8x64xf32>
    %74 = tpu.matmul %72, %73, %cst_43 {dimension_numbers = #tpu.dot_dimension_numbers<[1], [0], [0], [1], [0, 0, 1, 1], [], []>} : vector<8x128xf32>, vector<128x64xf32>, vector<8x64xf32> -> vector<8x64xf32>
    %c0_44 = arith.constant 0 : index
    %c0_45 = arith.constant 0 : index
    %75 = vector.load %arg14[%c0_44, %c0_45] : memref<1x64xf32, #tpu.memory_space<vmem>>, vector<1x64xf32>
    %76 = vector.broadcast %75 : vector<1x64xf32> to vector<8x64xf32>
    %77 = arith.addf %74, %76 : vector<8x64xf32>
    %78 = arith.addf %41, %77 : vector<8x64xf32>
    %c0_46 = arith.constant 0 : index
    %c0_47 = arith.constant 0 : index
    %c0_48 = arith.constant 0 : index
    %79 = vector.load %arg15[%c0_46, %c0_47, %c0_48] : memref<1x8x64xf32, #tpu.memory_space<vmem>>, vector<1x8x64xf32>
    %80 = vector.shape_cast %79 : vector<1x8x64xf32> to vector<8x64xf32>
    %81 = vector.shape_cast %78 : vector<8x64xf32> to vector<1x8x64xf32>
    tpu.vector_store %arg15[%c0_46, %c0_47, %c0_48], %81 {strides = array<i32>} : memref<1x8x64xf32, #tpu.memory_space<vmem>>, vector<1x8x64xf32>,
    return
  }
  func.func @transform_0(%arg0: i32, %arg1: i32) -> (i32, i32, i32) {
    %c0_i32 = arith.constant 0 : i32
    %c0_i32_0 = arith.constant 0 : i32
    %c0_i32_1 = arith.constant 0 : i32
    return %arg0, %c0_i32, %c0_i32_0 : i32, i32, i32
  }
  func.func @transform_1(%arg0: i32, %arg1: i32) -> (i32, i32) {
    %c0_i32 = arith.constant 0 : i32
    %c0_i32_0 = arith.constant 0 : i32
    %c0_i32_1 = arith.constant 0 : i32
    return %c0_i32, %c0_i32_0 : i32, i32
  }
  func.func @transform_2(%arg0: i32, %arg1: i32) -> (i32, i32) {
    %c0_i32 = arith.constant 0 : i32
    %c0_i32_0 = arith.constant 0 : i32
    %c0_i32_1 = arith.constant 0 : i32
    return %c0_i32, %c0_i32_0 : i32, i32
  }
  func.func @transform_3(%arg0: i32, %arg1: i32) -> (i32, i32) {
    %c0_i32 = arith.constant 0 : i32
    %c0_i32_0 = arith.constant 0 : i32
    %c0_i32_1 = arith.constant 0 : i32
    return %c0_i32, %c0_i32_0 : i32, i32
  }
  func.func @transform_4(%arg0: i32, %arg1: i32) -> (i32, i32) {
    %c0_i32 = arith.constant 0 : i32
    %c0_i32_0 = arith.constant 0 : i32
    %c0_i32_1 = arith.constant 0 : i32
    return %c0_i32, %c0_i32_0 : i32, i32
  }
  func.func @transform_5(%arg0: i32, %arg1: i32) -> (i32, i32) {
    %c0_i32 = arith.constant 0 : i32
    %c0_i32_0 = arith.constant 0 : i32
    %c0_i32_1 = arith.constant 0 : i32
    return %c0_i32, %c0_i32_0 : i32, i32
  }
  func.func @transform_6(%arg0: i32, %arg1: i32) -> (i32, i32) {
    %c0_i32 = arith.constant 0 : i32
    %c0_i32_0 = arith.constant 0 : i32
    %c0_i32_1 = arith.constant 0 : i32
    return %c0_i32, %c0_i32_0 : i32, i32
  }
  func.func @transform_7(%arg0: i32, %arg1: i32) -> (i32, i32) {
    %c0_i32 = arith.constant 0 : i32
    %c0_i32_0 = arith.constant 0 : i32
    %c0_i32_1 = arith.constant 0 : i32
    return %c0_i32, %c0_i32_0 : i32, i32
  }
  func.func @transform_8(%arg0: i32, %arg1: i32) -> (i32, i32) {
    %c0_i32 = arith.constant 0 : i32
    %c0_i32_0 = arith.constant 0 : i32
    %c0_i32_1 = arith.constant 0 : i32
    return %c0_i32, %c0_i32_0 : i32, i32
  }
  func.func @transform_9(%arg0: i32, %arg1: i32) -> (i32, i32) {
    %c0_i32 = arith.constant 0 : i32
    %c0_i32_0 = arith.constant 0 : i32
    %c0_i32_1 = arith.constant 0 : i32
    return %c0_i32, %c0_i32_0 : i32, i32
  }
  func.func @transform_10(%arg0: i32, %arg1: i32) -> (i32, i32) {
    %c0_i32 = arith.constant 0 : i32
    %c0_i32_0 = arith.constant 0 : i32
    %c0_i32_1 = arith.constant 0 : i32
    return %c0_i32, %c0_i32_0 : i32, i32
  }
  func.func @transform_11(%arg0: i32, %arg1: i32) -> (i32, i32) {
    %c0_i32 = arith.constant 0 : i32
    %c0_i32_0 = arith.constant 0 : i32
    %c0_i32_1 = arith.constant 0 : i32
    return %c0_i32, %c0_i32_0 : i32, i32
  }
  func.func @transform_12(%arg0: i32, %arg1: i32) -> (i32, i32) {
    %c0_i32 = arith.constant 0 : i32
    %c0_i32_0 = arith.constant 0 : i32
    %c0_i32_1 = arith.constant 0 : i32
    return %c0_i32, %c0_i32_0 : i32, i32
  }
  func.func @transform_13(%arg0: i32, %arg1: i32) -> (i32, i32, i32) {
    %c0_i32 = arith.constant 0 : i32
    %c0_i32_0 = arith.constant 0 : i32
    return %arg0, %arg1, %c0_i32 : i32, i32, i32
  }
  func.func @transform_14(%arg0: i32, %arg1: i32) -> (i32, i32, i32, i32) {
    %c0_i32 = arith.constant 0 : i32
    %c0_i32_0 = arith.constant 0 : i32
    %c0_i32_1 = arith.constant 0 : i32
    return %arg0, %c0_i32, %arg1, %c0_i32_0 : i32, i32, i32, i32
  }
}

module attributes {stable_mosaic.version = 11 : i64} {
  func.func @_encoder_layer_kernel(%arg0: i32, %arg1: i32, %arg2: memref<1x16x64xf32, #tpu.memory_space<vmem>>, %arg3: memref<64x192xf32, #tpu.memory_space<vmem>>, %arg4: memref<1x192xf32, #tpu.memory_space<vmem>>, %arg5: memref<64x64xf32, #tpu.memory_space<vmem>>, %arg6: memref<1x64xf32, #tpu.memory_space<vmem>>, %arg7: memref<1x64xf32, #tpu.memory_space<vmem>>, %arg8: memref<1x64xf32, #tpu.memory_space<vmem>>, %arg9: memref<1x64xf32, #tpu.memory_space<vmem>>, %arg10: memref<1x64xf32, #tpu.memory_space<vmem>>, %arg11: memref<64x128xf32, #tpu.memory_space<vmem>>, %arg12: memref<1x128xf32, #tpu.memory_space<vmem>>, %arg13: memref<128x64xf32, #tpu.memory_space<vmem>>, %arg14: memref<1x64xf32, #tpu.memory_space<vmem>>, %arg15: memref<1x8x64xf32, #tpu.memory_space<vmem>>, %arg16: memref<1x4x8x16xf32, #tpu.memory_space<vmem>>, %arg17: memref<4x16x16xf32, #tpu.memory_space<vmem>>, %arg18: memref<2x4x16x16xf32, #tpu.memory_space<vmem>>) attributes {dimension_semantics = [#tpu.dimension_semantics<parallel>, #tpu.dimension_semantics<arbitrary>], iteration_bounds = array<i64: 2, 2>, scalar_prefetch = 0 : i64, scratch_operands = 2 : i64, tpu.core_type = #tpu.core_type<tc>, window_params = [{transform_indices = @transform_0, window_bounds = array<i64: 1, 16, 64>}, {pipeline_mode = #tpu.pipeline_mode<synchronous>, transform_indices = @transform_1, window_bounds = array<i64: 64, 192>}, {pipeline_mode = #tpu.pipeline_mode<synchronous>, transform_indices = @transform_2, window_bounds = array<i64: 1, 192>}, {pipeline_mode = #tpu.pipeline_mode<synchronous>, transform_indices = @transform_3, window_bounds = array<i64: 64, 64>}, {pipeline_mode = #tpu.pipeline_mode<synchronous>, transform_indices = @transform_4, window_bounds = array<i64: 1, 64>}, {pipeline_mode = #tpu.pipeline_mode<synchronous>, transform_indices = @transform_5, window_bounds = array<i64: 1, 64>}, {pipeline_mode = #tpu.pipeline_mode<synchronous>, transform_indices = @transform_6, window_bounds = array<i64: 1, 64>}, {pipeline_mode = #tpu.pipeline_mode<synchronous>, transform_indices = @transform_7, window_bounds = array<i64: 1, 64>}, {pipeline_mode = #tpu.pipeline_mode<synchronous>, transform_indices = @transform_8, window_bounds = array<i64: 1, 64>}, {pipeline_mode = #tpu.pipeline_mode<synchronous>, transform_indices = @transform_9, window_bounds = array<i64: 64, 128>}, {pipeline_mode = #tpu.pipeline_mode<synchronous>, transform_indices = @transform_10, window_bounds = array<i64: 1, 128>}, {pipeline_mode = #tpu.pipeline_mode<synchronous>, transform_indices = @transform_11, window_bounds = array<i64: 128, 64>}, {pipeline_mode = #tpu.pipeline_mode<synchronous>, transform_indices = @transform_12, window_bounds = array<i64: 1, 64>}, {transform_indices = @transform_13, window_bounds = array<i64: 1, 8, 64>}, {transform_indices = @transform_14, window_bounds = array<i64: 1, 4, 8, 16>}]} {
    %c0_i32 = arith.constant 0 : i32
    %0 = arith.cmpi eq, %arg1, %c0_i32 : i32
    %1 = arith.extui %0 : i1 to i32
    %c0_i32_0 = arith.constant 0 : i32
    %2 = arith.cmpi ne, %1, %c0_i32_0 : i32
    scf.if %2 {
      %c0_49 = arith.constant 0 : index
      %c0_50 = arith.constant 0 : index
      %c0_51 = arith.constant 0 : index
      %82 = vector.load %arg2[%c0_49, %c0_50, %c0_51] : memref<1x16x64xf32, #tpu.memory_space<vmem>>, vector<1x16x64xf32>
      %83 = vector.shape_cast %82 : vector<1x16x64xf32> to vector<16x64xf32>
      %c0_52 = arith.constant 0 : index
      %c0_53 = arith.constant 0 : index
      %84 = vector.load %arg7[%c0_52, %c0_53] : memref<1x64xf32, #tpu.memory_space<vmem>>, vector<1x64xf32>
      %c0_54 = arith.constant 0 : index
      %c0_55 = arith.constant 0 : index
      %85 = vector.load %arg8[%c0_54, %c0_55] : memref<1x64xf32, #tpu.memory_space<vmem>>, vector<1x64xf32>
      %cst_56 = arith.constant dense<0.000000e+00> : vector<16xf32>
      %86 = vector.multi_reduction <add>, %83, %cst_56 [1] : vector<16x64xf32> to vector<16xf32>
      %87 = vector.shape_cast %86 : vector<16xf32> to vector<16x1xf32>
      %cst_57 = arith.constant 6.400000e+01 : f32
      %88 = vector.broadcast %cst_57 : f32 to vector<16x1xf32>
      %89 = arith.divf %87, %88 : vector<16x1xf32>
      %90 = vector.broadcast %89 : vector<16x1xf32> to vector<16x64xf32>
      %91 = arith.subf %83, %90 : vector<16x64xf32>
      %92 = arith.mulf %91, %91 : vector<16x64xf32>
      %cst_58 = arith.constant dense<0.000000e+00> : vector<16xf32>
      %93 = vector.multi_reduction <add>, %92, %cst_58 [1] : vector<16x64xf32> to vector<16xf32>
      %94 = vector.shape_cast %93 : vector<16xf32> to vector<16x1xf32>
      %cst_59 = arith.constant 6.400000e+01 : f32
      %95 = vector.broadcast %cst_59 : f32 to vector<16x1xf32>
      %96 = arith.divf %94, %95 : vector<16x1xf32>
      %97 = vector.broadcast %89 : vector<16x1xf32> to vector<16x64xf32>
      %98 = arith.subf %83, %97 : vector<16x64xf32>
      %cst_60 = arith.constant 9.99999974E-6 : f32
      %99 = vector.broadcast %cst_60 : f32 to vector<16x1xf32>
      %100 = arith.addf %96, %99 : vector<16x1xf32>
      %101 = math.rsqrt %100 : vector<16x1xf32>
      %102 = vector.broadcast %101 : vector<16x1xf32> to vector<16x64xf32>
      %103 = arith.mulf %98, %102 : vector<16x64xf32>
      %104 = vector.broadcast %84 : vector<1x64xf32> to vector<16x64xf32>
      %105 = arith.mulf %103, %104 : vector<16x64xf32>
      %106 = vector.broadcast %85 : vector<1x64xf32> to vector<16x64xf32>
      %107 = arith.addf %105, %106 : vector<16x64xf32>
      %c0_61 = arith.constant 0 : index
      %c0_62 = arith.constant 0 : index
      %108 = vector.load %arg3[%c0_61, %c0_62] : memref<64x192xf32, #tpu.memory_space<vmem>>, vector<64x192xf32>
      %cst_63 = arith.constant dense<0.000000e+00> : vector<16x192xf32>
      %109 = tpu.matmul %107, %108, %cst_63 {dimension_numbers = #tpu.dot_dimension_numbers<[1], [0], [0], [1], [0, 0, 1, 1], [], []>} : vector<16x64xf32>, vector<64x192xf32>, vector<16x192xf32> -> vector<16x192xf32>
      %c0_64 = arith.constant 0 : index
      %c0_65 = arith.constant 0 : index
      %110 = vector.load %arg4[%c0_64, %c0_65] : memref<1x192xf32, #tpu.memory_space<vmem>>, vector<1x192xf32>
      %111 = vector.broadcast %110 : vector<1x192xf32> to vector<16x192xf32>
      %112 = arith.addf %109, %111 : vector<16x192xf32>
      %113 = vector.extract_strided_slice %112 {offsets = [0, 0], sizes = [16, 64], strides = [1, 1]} : vector<16x192xf32> to vector<16x64xf32>
      %114 = vector.extract_strided_slice %112 {offsets = [0, 64], sizes = [16, 64], strides = [1, 1]} : vector<16x192xf32> to vector<16x64xf32>
      %115 = vector.extract_strided_slice %112 {offsets = [0, 128], sizes = [16, 64], strides = [1, 1]} : vector<16x192xf32> to vector<16x64xf32>
      %116 = vector.shape_cast %113 : vector<16x64xf32> to vector<16x4x16xf32>
      %117 = tpu.transpose %116, [1, 0, 2] : vector<16x4x16xf32> -> vector<4x16x16xf32>
      %c0_66 = arith.constant 0 : index
      %c0_67 = arith.constant 0 : index
      %c0_68 = arith.constant 0 : index
      %118 = vector.load %arg17[%c0_66, %c0_67, %c0_68] : memref<4x16x16xf32, #tpu.memory_space<vmem>>, vector<4x16x16xf32>
      tpu.vector_store %arg17[%c0_66, %c0_67, %c0_68], %117 {strides = array<i32>} : memref<4x16x16xf32, #tpu.memory_space<vmem>>, vector<4x16x16xf32>,
      %119 = vector.shape_cast %114 : vector<16x64xf32> to vector<16x4x16xf32>
      %120 = tpu.transpose %119, [1, 0, 2] : vector<16x4x16xf32> -> vector<4x16x16xf32>
      %c0_69 = arith.constant 0 : index
      %c0_70 = arith.constant 0 : index
      %c0_71 = arith.constant 0 : index
      %c0_72 = arith.constant 0 : index
      %121 = vector.load %arg18[%c0_69, %c0_70, %c0_71, %c0_72] : memref<2x4x16x16xf32, #tpu.memory_space<vmem>>, vector<1x4x16x16xf32>
      %122 = vector.shape_cast %121 : vector<1x4x16x16xf32> to vector<4x16x16xf32>
      %123 = vector.shape_cast %120 : vector<4x16x16xf32> to vector<1x4x16x16xf32>
      tpu.vector_store %arg18[%c0_69, %c0_70, %c0_71, %c0_72], %123 {strides = array<i32>} : memref<2x4x16x16xf32, #tpu.memory_space<vmem>>, vector<1x4x16x16xf32>,
      %124 = vector.shape_cast %115 : vector<16x64xf32> to vector<16x4x16xf32>
      %125 = tpu.transpose %124, [1, 0, 2] : vector<16x4x16xf32> -> vector<4x16x16xf32>
      %c1_73 = arith.constant 1 : index
      %c0_74 = arith.constant 0 : index
      %c0_75 = arith.constant 0 : index
      %c0_76 = arith.constant 0 : index
      %126 = vector.load %arg18[%c1_73, %c0_74, %c0_75, %c0_76] : memref<2x4x16x16xf32, #tpu.memory_space<vmem>>, vector<1x4x16x16xf32>
      %127 = vector.shape_cast %126 : vector<1x4x16x16xf32> to vector<4x16x16xf32>
      %128 = vector.shape_cast %125 : vector<4x16x16xf32> to vector<1x4x16x16xf32>
      tpu.vector_store %arg18[%c1_73, %c0_74, %c0_75, %c0_76], %128 {strides = array<i32>} : memref<2x4x16x16xf32, #tpu.memory_space<vmem>>, vector<1x4x16x16xf32>,
    } else {
    }
    %c8_i32 = arith.constant 8 : i32
    %3 = arith.muli %arg1, %c8_i32 : i32
    %4 = tpu.assume_multiple %3, 8 : i32
    %c0 = arith.constant 0 : index
    %5 = arith.index_cast %4 : i32 to index
    %c0_1 = arith.constant 0 : index
    %6 = vector.load %arg17[%c0, %5, %c0_1] : memref<4x16x16xf32, #tpu.memory_space<vmem>>, vector<4x8x16xf32>
    %c0_2 = arith.constant 0 : index
    %c0_3 = arith.constant 0 : index
    %c0_4 = arith.constant 0 : index
    %c0_5 = arith.constant 0 : index
    %7 = vector.load %arg18[%c0_2, %c0_3, %c0_4, %c0_5] : memref<2x4x16x16xf32, #tpu.memory_space<vmem>>, vector<1x4x16x16xf32>
    %8 = vector.shape_cast %7 : vector<1x4x16x16xf32> to vector<4x16x16xf32>
    %c1 = arith.constant 1 : index
    %c0_6 = arith.constant 0 : index
    %c0_7 = arith.constant 0 : index
    %c0_8 = arith.constant 0 : index
    %9 = vector.load %arg18[%c1, %c0_6, %c0_7, %c0_8] : memref<2x4x16x16xf32, #tpu.memory_space<vmem>>, vector<1x4x16x16xf32>
    %10 = vector.shape_cast %9 : vector<1x4x16x16xf32> to vector<4x16x16xf32>
    "tpu.trace_start"() <{level = 10 : i32, message = "hqd,hkd->hqk"}> : () -> ()
    %cst = arith.constant dense<0.000000e+00> : vector<4x8x16xf32>
    %11 = tpu.matmul %6, %8, %cst {dimension_numbers = #tpu.dot_dimension_numbers<[2], [2], [1], [1], [0, 0, 0, 1, 1, 1], [0], [0]>} : vector<4x8x16xf32>, vector<4x16x16xf32>, vector<4x8x16xf32> -> vector<4x8x16xf32>
    "tpu.trace_stop"() : () -> ()
    %cst_9 = arith.constant dense<0xFF800000> : vector<4x8xf32>
    %12 = vector.multi_reduction <maximumf>, %11, %cst_9 [2] : vector<4x8x16xf32> to vector<4x8xf32>
    %13 = vector.shape_cast %12 : vector<4x8xf32> to vector<4x8x1xf32>
    %14 = vector.broadcast %13 : vector<4x8x1xf32> to vector<4x8x16xf32>
    %15 = arith.subf %11, %14 : vector<4x8x16xf32>
    %16 = math.exp %15 : vector<4x8x16xf32>
    %cst_10 = arith.constant dense<0.000000e+00> : vector<4x8xf32>
    %17 = vector.multi_reduction <add>, %16, %cst_10 [2] : vector<4x8x16xf32> to vector<4x8xf32>
    %18 = vector.shape_cast %17 : vector<4x8xf32> to vector<4x8x1xf32>
    %19 = tpu.reciprocal %18 {approx = true} : vector<4x8x1xf32> -> vector<4x8x1xf32>
    %20 = arith.mulf %18, %19 : vector<4x8x1xf32>
    %cst_11 = arith.constant 2.000000e+00 : f32
    %21 = vector.broadcast %cst_11 : f32 to vector<4x8x1xf32>
    %22 = arith.subf %21, %20 : vector<4x8x1xf32>
    %23 = arith.mulf %19, %22 : vector<4x8x1xf32>
    %24 = vector.broadcast %23 : vector<4x8x1xf32> to vector<4x8x16xf32>
    %25 = arith.mulf %16, %24 : vector<4x8x16xf32>
    %c0_12 = arith.constant 0 : index
    %c0_13 = arith.constant 0 : index
    %c0_14 = arith.constant 0 : index
    %c0_15 = arith.constant 0 : index
    %26 = vector.load %arg16[%c0_12, %c0_13, %c0_14, %c0_15] : memref<1x4x8x16xf32, #tpu.memory_space<vmem>>, vector<1x4x8x16xf32>
    %27 = vector.shape_cast %26 : vector<1x4x8x16xf32> to vector<4x8x16xf32>
    %28 = vector.shape_cast %25 : vector<4x8x16xf32> to vector<1x4x8x16xf32>
    tpu.vector_store %arg16[%c0_12, %c0_13, %c0_14, %c0_15], %28 {strides = array<i32>} : memref<1x4x8x16xf32, #tpu.memory_space<vmem>>, vector<1x4x8x16xf32>,
    "tpu.trace_start"() <{level = 10 : i32, message = "hqk,hkd->hqd"}> : () -> ()
    %cst_16 = arith.constant dense<0.000000e+00> : vector<4x8x16xf32>
    %29 = tpu.matmul %25, %10, %cst_16 {dimension_numbers = #tpu.dot_dimension_numbers<[2], [1], [1], [2], [0, 0, 0, 1, 1, 2], [0], [0]>} : vector<4x8x16xf32>, vector<4x16x16xf32>, vector<4x8x16xf32> -> vector<4x8x16xf32>
    "tpu.trace_stop"() : () -> ()
    %30 = tpu.transpose %29, [1, 0, 2] : vector<4x8x16xf32> -> vector<8x4x16xf32>
    %31 = vector.shape_cast %30 : vector<8x4x16xf32> to vector<8x64xf32>
    %c0_17 = arith.constant 0 : index
    %c0_18 = arith.constant 0 : index
    %32 = vector.load %arg5[%c0_17, %c0_18] : memref<64x64xf32, #tpu.memory_space<vmem>>, vector<64x64xf32>
    %cst_19 = arith.constant dense<0.000000e+00> : vector<8x64xf32>
    %33 = tpu.matmul %31, %32, %cst_19 {dimension_numbers = #tpu.dot_dimension_numbers<[1], [0], [0], [1], [0, 0, 1, 1], [], []>} : vector<8x64xf32>, vector<64x64xf32>, vector<8x64xf32> -> vector<8x64xf32>
    %c0_20 = arith.constant 0 : index
    %c0_21 = arith.constant 0 : index
    %34 = vector.load %arg6[%c0_20, %c0_21] : memref<1x64xf32, #tpu.memory_space<vmem>>, vector<1x64xf32>
    %35 = vector.broadcast %34 : vector<1x64xf32> to vector<8x64xf32>
    %36 = arith.addf %33, %35 : vector<8x64xf32>
    %c0_i32_22 = arith.constant 0 : i32
    %c0_i32_23 = arith.constant 0 : i32
    %c0_i32_24 = arith.constant 0 : i32
    %37 = tpu.memref_slice %arg2[%c0_i32_22, %c0_i32_23, %c0_i32_24] : memref<1x16x64xf32, #tpu.memory_space<vmem>> -> memref<1x16x64xf32, #tpu.memory_space<vmem>>
    %38 = tpu.memref_squeeze %37 : memref<1x16x64xf32, #tpu.memory_space<vmem>> -> memref<16x64xf32, #tpu.memory_space<vmem>>
    %39 = arith.index_cast %4 : i32 to index
    %c0_25 = arith.constant 0 : index
    %40 = vector.load %38[%39, %c0_25] : memref<16x64xf32, #tpu.memory_space<vmem>>, vector<8x64xf32>
    %41 = arith.addf %40, %36 : vector<8x64xf32>
    %c0_26 = arith.constant 0 : index
    %c0_27 = arith.constant 0 : index
    %42 = vector.load %arg9[%c0_26, %c0_27] : memref<1x64xf32, #tpu.memory_space<vmem>>, vector<1x64xf32>
    %c0_28 = arith.constant 0 : index
    %c0_29 = arith.constant 0 : index
    %43 = vector.load %arg10[%c0_28, %c0_29] : memref<1x64xf32, #tpu.memory_space<vmem>>, vector<1x64xf32>
    %cst_30 = arith.constant dense<0.000000e+00> : vector<8xf32>
    %44 = vector.multi_reduction <add>, %41, %cst_30 [1] : vector<8x64xf32> to vector<8xf32>
    %45 = vector.shape_cast %44 : vector<8xf32> to vector<8x1xf32>
    %cst_31 = arith.constant 6.400000e+01 : f32
    %46 = vector.broadcast %cst_31 : f32 to vector<8x1xf32>
    %47 = arith.divf %45, %46 : vector<8x1xf32>
    %48 = vector.broadcast %47 : vector<8x1xf32> to vector<8x64xf32>
    %49 = arith.subf %41, %48 : vector<8x64xf32>
    %50 = arith.mulf %49, %49 : vector<8x64xf32>
    %cst_32 = arith.constant dense<0.000000e+00> : vector<8xf32>
    %51 = vector.multi_reduction <add>, %50, %cst_32 [1] : vector<8x64xf32> to vector<8xf32>
    %52 = vector.shape_cast %51 : vector<8xf32> to vector<8x1xf32>
    %cst_33 = arith.constant 6.400000e+01 : f32
    %53 = vector.broadcast %cst_33 : f32 to vector<8x1xf32>
    %54 = arith.divf %52, %53 : vector<8x1xf32>
    %55 = vector.broadcast %47 : vector<8x1xf32> to vector<8x64xf32>
    %56 = arith.subf %41, %55 : vector<8x64xf32>
    %cst_34 = arith.constant 9.99999974E-6 : f32
    %57 = vector.broadcast %cst_34 : f32 to vector<8x1xf32>
    %58 = arith.addf %54, %57 : vector<8x1xf32>
    %59 = math.rsqrt %58 : vector<8x1xf32>
    %60 = vector.broadcast %59 : vector<8x1xf32> to vector<8x64xf32>
    %61 = arith.mulf %56, %60 : vector<8x64xf32>
    %62 = vector.broadcast %42 : vector<1x64xf32> to vector<8x64xf32>
    %63 = arith.mulf %61, %62 : vector<8x64xf32>
    %64 = vector.broadcast %43 : vector<1x64xf32> to vector<8x64xf32>
    %65 = arith.addf %63, %64 : vector<8x64xf32>
    %c0_35 = arith.constant 0 : index
    %c0_36 = arith.constant 0 : index
    %66 = vector.load %arg11[%c0_35, %c0_36] : memref<64x128xf32, #tpu.memory_space<vmem>>, vector<64x128xf32>
    %cst_37 = arith.constant dense<0.000000e+00> : vector<8x128xf32>
    %67 = tpu.matmul %65, %66, %cst_37 {dimension_numbers = #tpu.dot_dimension_numbers<[1], [0], [0], [1], [0, 0, 1, 1], [], []>} : vector<8x64xf32>, vector<64x128xf32>, vector<8x128xf32> -> vector<8x128xf32>
    %c0_38 = arith.constant 0 : index
    %c0_39 = arith.constant 0 : index
    %68 = vector.load %arg12[%c0_38, %c0_39] : memref<1x128xf32, #tpu.memory_space<vmem>>, vector<1x128xf32>
    %69 = vector.broadcast %68 : vector<1x128xf32> to vector<8x128xf32>
    %70 = arith.addf %67, %69 : vector<8x128xf32>
    %cst_40 = arith.constant 0.000000e+00 : f32
    %71 = vector.broadcast %cst_40 : f32 to vector<8x128xf32>
    %72 = arith.maximumf %70, %71 : vector<8x128xf32>
    %c0_41 = arith.constant 0 : index
    %c0_42 = arith.constant 0 : index
    %73 = vector.load %arg13[%c0_41, %c0_42] : memref<128x64xf32, #tpu.memory_space<vmem>>, vector<128x64xf32>
    %cst_43 = arith.constant dense<0.000000e+00> : vector<8x64xf32>
    %74 = tpu.matmul %72, %73, %cst_43 {dimension_numbers = #tpu.dot_dimension_numbers<[1], [0], [0], [1], [0, 0, 1, 1], [], []>} : vector<8x128xf32>, vector<128x64xf32>, vector<8x64xf32> -> vector<8x64xf32>
    %c0_44 = arith.constant 0 : index
    %c0_45 = arith.constant 0 : index
    %75 = vector.load %arg14[%c0_44, %c0_45] : memref<1x64xf32, #tpu.memory_space<vmem>>, vector<1x64xf32>
    %76 = vector.broadcast %75 : vector<1x64xf32> to vector<8x64xf32>
    %77 = arith.addf %74, %76 : vector<8x64xf32>
    %78 = arith.addf %41, %77 : vector<8x64xf32>
    %c0_46 = arith.constant 0 : index
    %c0_47 = arith.constant 0 : index
    %c0_48 = arith.constant 0 : index
    %79 = vector.load %arg15[%c0_46, %c0_47, %c0_48] : memref<1x8x64xf32, #tpu.memory_space<vmem>>, vector<1x8x64xf32>
    %80 = vector.shape_cast %79 : vector<1x8x64xf32> to vector<8x64xf32>
    %81 = vector.shape_cast %78 : vector<8x64xf32> to vector<1x8x64xf32>
    tpu.vector_store %arg15[%c0_46, %c0_47, %c0_48], %81 {strides = array<i32>} : memref<1x8x64xf32, #tpu.memory_space<vmem>>, vector<1x8x64xf32>,
    return
  }
  func.func @transform_0(%arg0: i32, %arg1: i32) -> (i32, i32, i32) {
    %c0_i32 = arith.constant 0 : i32
    %c0_i32_0 = arith.constant 0 : i32
    %c0_i32_1 = arith.constant 0 : i32
    return %arg0, %c0_i32, %c0_i32_0 : i32, i32, i32
  }
  func.func @transform_1(%arg0: i32, %arg1: i32) -> (i32, i32) {
    %c0_i32 = arith.constant 0 : i32
    %c0_i32_0 = arith.constant 0 : i32
    %c0_i32_1 = arith.constant 0 : i32
    return %c0_i32, %c0_i32_0 : i32, i32
  }
  func.func @transform_2(%arg0: i32, %arg1: i32) -> (i32, i32) {
    %c0_i32 = arith.constant 0 : i32
    %c0_i32_0 = arith.constant 0 : i32
    %c0_i32_1 = arith.constant 0 : i32
    return %c0_i32, %c0_i32_0 : i32, i32
  }
  func.func @transform_3(%arg0: i32, %arg1: i32) -> (i32, i32) {
    %c0_i32 = arith.constant 0 : i32
    %c0_i32_0 = arith.constant 0 : i32
    %c0_i32_1 = arith.constant 0 : i32
    return %c0_i32, %c0_i32_0 : i32, i32
  }
  func.func @transform_4(%arg0: i32, %arg1: i32) -> (i32, i32) {
    %c0_i32 = arith.constant 0 : i32
    %c0_i32_0 = arith.constant 0 : i32
    %c0_i32_1 = arith.constant 0 : i32
    return %c0_i32, %c0_i32_0 : i32, i32
  }
  func.func @transform_5(%arg0: i32, %arg1: i32) -> (i32, i32) {
    %c0_i32 = arith.constant 0 : i32
    %c0_i32_0 = arith.constant 0 : i32
    %c0_i32_1 = arith.constant 0 : i32
    return %c0_i32, %c0_i32_0 : i32, i32
  }
  func.func @transform_6(%arg0: i32, %arg1: i32) -> (i32, i32) {
    %c0_i32 = arith.constant 0 : i32
    %c0_i32_0 = arith.constant 0 : i32
    %c0_i32_1 = arith.constant 0 : i32
    return %c0_i32, %c0_i32_0 : i32, i32
  }
  func.func @transform_7(%arg0: i32, %arg1: i32) -> (i32, i32) {
    %c0_i32 = arith.constant 0 : i32
    %c0_i32_0 = arith.constant 0 : i32
    %c0_i32_1 = arith.constant 0 : i32
    return %c0_i32, %c0_i32_0 : i32, i32
  }
  func.func @transform_8(%arg0: i32, %arg1: i32) -> (i32, i32) {
    %c0_i32 = arith.constant 0 : i32
    %c0_i32_0 = arith.constant 0 : i32
    %c0_i32_1 = arith.constant 0 : i32
    return %c0_i32, %c0_i32_0 : i32, i32
  }
  func.func @transform_9(%arg0: i32, %arg1: i32) -> (i32, i32) {
    %c0_i32 = arith.constant 0 : i32
    %c0_i32_0 = arith.constant 0 : i32
    %c0_i32_1 = arith.constant 0 : i32
    return %c0_i32, %c0_i32_0 : i32, i32
  }
  func.func @transform_10(%arg0: i32, %arg1: i32) -> (i32, i32) {
    %c0_i32 = arith.constant 0 : i32
    %c0_i32_0 = arith.constant 0 : i32
    %c0_i32_1 = arith.constant 0 : i32
    return %c0_i32, %c0_i32_0 : i32, i32
  }
  func.func @transform_11(%arg0: i32, %arg1: i32) -> (i32, i32) {
    %c0_i32 = arith.constant 0 : i32
    %c0_i32_0 = arith.constant 0 : i32
    %c0_i32_1 = arith.constant 0 : i32
    return %c0_i32, %c0_i32_0 : i32, i32
  }
  func.func @transform_12(%arg0: i32, %arg1: i32) -> (i32, i32) {
    %c0_i32 = arith.constant 0 : i32
    %c0_i32_0 = arith.constant 0 : i32
    %c0_i32_1 = arith.constant 0 : i32
    return %c0_i32, %c0_i32_0 : i32, i32
  }
  func.func @transform_13(%arg0: i32, %arg1: i32) -> (i32, i32, i32) {
    %c0_i32 = arith.constant 0 : i32
    %c0_i32_0 = arith.constant 0 : i32
    return %arg0, %arg1, %c0_i32 : i32, i32, i32
  }
  func.func @transform_14(%arg0: i32, %arg1: i32) -> (i32, i32, i32, i32) {
    %c0_i32 = arith.constant 0 : i32
    %c0_i32_0 = arith.constant 0 : i32
    %c0_i32_1 = arith.constant 0 : i32
    return %arg0, %c0_i32, %arg1, %c0_i32_0 : i32, i32, i32, i32
  }
}

</mosaic_0001>

<llo_original>
// kernel: tpu_custom_call.1
$region0: #{tpu_custom_call.1}
  #allocation0 [shape = 'u32[]', space=smem, size = 0x4, offset = 0x4, fixed_abs, tag = 'smem constant byte address 0x4 - core index']
  #allocation1 [shape = 'u32[72,128]{1,0:T(1,128)}', space=vmem, size = 0x9000, scoped, tag = 'internal scratch']
  #allocation2 [shape = 'f32[4,16,16]{2,1,0:T(8,128)}', space=vmem, size = 0x8000, scoped, tag = 'scratch operand']
  #allocation3 [shape = 'f32[2,4,16,16]{3,2,1,0:T(8,128)}', space=vmem, size = 0x10000, scoped, tag = 'scratch operand']
  %s0 = inlined_call_operand.hbm [shape: f32[2,16,64], index: 0, kind: input, shape index: {}]
  %s1 = inlined_call_operand.vmem [shape: f32[64,192], index: 1, kind: input, shape index: {}]
  %s2 = inlined_call_operand.hbm [shape: f32[1,192], index: 2, kind: input, shape index: {}]
  %s3 = inlined_call_operand.vmem [shape: f32[64,64], index: 3, kind: input, shape index: {}]
  %s4 = inlined_call_operand.vmem [shape: f32[1,64], index: 4, kind: input, shape index: {}]
  %s5 = inlined_call_operand.vmem [shape: f32[1,64], index: 5, kind: input, shape index: {}]
  %s6 = inlined_call_operand.vmem [shape: f32[1,64], index: 6, kind: input, shape index: {}]
  %s7 = inlined_call_operand.vmem [shape: f32[1,64], index: 7, kind: input, shape index: {}]
  %s8 = inlined_call_operand.vmem [shape: f32[1,64], index: 8, kind: input, shape index: {}]
  %s9 = inlined_call_operand.hbm [shape: f32[64,128], index: 9, kind: input, shape index: {}]
  %s10 = inlined_call_operand.vmem [shape: f32[1,128], index: 10, kind: input, shape index: {}]
  %s11 = inlined_call_operand.vmem [shape: f32[128,64], index: 11, kind: input, shape index: {}]
  %s12 = inlined_call_operand.vmem [shape: f32[1,64], index: 12, kind: input, shape index: {}]
  %s13 = inlined_call_operand.hbm [shape: f32[2,16,64], index: 13, kind: output, shape index: {0}]
  %s14 = inlined_call_operand.hbm [shape: f32[2,4,16,16], index: 14, kind: output, shape index: {1}]
  %15 = xla_tuple %s13, %s14
  %s16 = sld [smem:[#allocation0]]
  $region109: #{tpu_custom_call.1} parent=0
    _
  %s18 = ssub.s32 1, %s16
  %s19 = scalar_select 0, %s18, %s16
  $region1: #{tpu_custom_call.1} parent=0
    #allocation4 [shape = 'u8[16384]{0}', space=vmem, size = 0x4000, scoped, tag = 'input window, operand 0']
    #allocation5 [shape = 's32[2]{0}', space=sflag, size = 0x8, scoped, tag = 'scoped memory for tpu_custom_call.1']
    #allocation6 [shape = 's32[2]{0}', space=sflag, size = 0x8, scoped, tag = 'scoped memory for tpu_custom_call.1']
    #allocation7 [shape = 'u8[1024]{0}', space=vmem, size = 0x400, scoped, tag = 'input window, operand 2, single buffered']
    #allocation8 [shape = 's32[1]{0}', space=sflag, size = 0x4, scoped, tag = 'scoped memory for tpu_custom_call.1']
    #allocation9 [shape = 'u8[32768]{0}', space=vmem, size = 0x8000, scoped, tag = 'input window, operand 9, single buffered']
    #allocation10 [shape = 'u8[8192]{0}', space=vmem, size = 0x2000, scoped, tag = 'output window, operand 0']
    #allocation11 [shape = 'u8[32768]{0}', space=vmem, size = 0x8000, scoped, tag = 'output window, operand 1']
    #allocation12 [shape = 's32[2]{0}', space=sflag, size = 0x8, scoped, tag = 'scoped memory for tpu_custom_call.1']
    %20 = vsyncpa [#allocation5], 0
    %s21 = scalar_lea.sflag [#allocation5], 1
    %22 = vsyncpa %s21, 0
    %23 = vsyncpa [#allocation8], 0
    %24 = vsyncpa [#allocation6], 0
    %s25 = scalar_lea.sflag [#allocation6], 1
    %26 = vsyncpa %s25, 0
    %27 = vsyncpa [#allocation12], 0
    %s28 = scalar_lea.sflag [#allocation12], 1
    %29 = vsyncpa %s28, 0
    loop: start=0, step=1, limit=6
    $region2: #{tpu_custom_call.1} parent=1 // loop_pre_header
      _
    $region3: #{tpu_custom_call.1} parent=1 // loop_header
      %s31 = sphi 0, %s35
      %p32 = scmp.ge.s32.totalorder %s31, 6
      %s38 = sphi 0, %s50
      %s39 = sphi 0, %s46
      %s40 = sphi 0, %s38
      %s41 = sphi 0, %s39
      %s42 = sphi 0, %s40
      %s43 = sphi 0, %s41
      %s53 = sphi 0, %s55
      %s56 = sphi 0, %s53
      %s57 = sphi 0, %s56
      %s73 = sphi 0, %s57
      %s77 = sphi 0, %s77
      %s79 = sphi 0, %s77
      %s80 = sphi 0, %s79
      %s94 = sphi 0, %s80
      %s98 = sphi 0, %s98
      %s100 = sphi 0, %s98
      %s101 = sphi 0, %s100
      %s115 = sphi 0, %s101
      %s119 = sphi 0, %s119
      %s121 = sphi 0, %s119
      %s122 = sphi 0, %s121
      %s136 = sphi 0, %s122
      %s140 = sphi 0, %s140
      %s142 = sphi 0, %s140
      %s143 = sphi 0, %s142
      %s157 = sphi 0, %s143
      %s161 = sphi 0, %s161
      %s163 = sphi 0, %s161
      %s164 = sphi 0, %s163
      %s178 = sphi 0, %s164
      %s182 = sphi 0, %s182
      %s184 = sphi 0, %s182
      %s185 = sphi 0, %s184
      %s199 = sphi 0, %s185
      %s203 = sphi 0, %s203
      %s205 = sphi 0, %s203
      %s206 = sphi 0, %s205
      %s220 = sphi 0, %s206
      %s224 = sphi 0, %s224
      %s226 = sphi 0, %s224
      %s227 = sphi 0, %s226
      %s241 = sphi 0, %s227
      %s245 = sphi 0, %s245
      %s247 = sphi 0, %s245
      %s248 = sphi 0, %s247
      %s262 = sphi 0, %s248
      %s266 = sphi 0, %s266
      %s268 = sphi 0, %s266
      %s269 = sphi 0, %s268
      %s283 = sphi 0, %s269
      %s287 = sphi 0, %s287
      %s289 = sphi 0, %s287
      %s290 = sphi 0, %s289
      %s304 = sphi 0, %s290
      %s308 = sphi 0, %s308
      %s310 = sphi 0, %s308
      %s311 = sphi 0, %s310
      %s325 = sphi 0, %s311
      %s333 = sphi 0, %s335
      %s336 = sphi 0, %s333
      %s337 = sphi 0, %s336
      %s353 = sphi 0, %s337
      %s361 = sphi 0, %s363
      %s364 = sphi 0, %s361
      %s365 = sphi 0, %s364
      %s381 = sphi 0, %s365
    $region4: #{tpu_custom_call.1} parent=1 // loop_header_branch
      %34 = sbr.rel (%p32) target = $region8
    $region5: #{tpu_custom_call.1} parent=1 // loop_body
      %s36 = ssub.s32 %s31, 1
      %s37 = ssub.s32 %s31, 2
      %s44 = sadd.s32 1, %s39
      %p45 = scmp.ge.s32.totalorder %s44, 2
      %s46 = scalar_select %p45, 0, %s44
      %s47 = sadd.s32 1, %s38
      %s48 = scalar_select %p45, %s47, %s38
      %p49 = scmp.ge.s32.totalorder %s48, 2
      %s50 = scalar_select %p49, 0, %s48
      %s51 = ssub.s32 %s38, %s50
      %p52 = scmp.eq.s32.totalorder %s51, 0
      %s54 = sadd.s32 %s53, 1
      %s55 = scalar_select %p52, %s53, %s54
      %p58 = pneg %p52
      %p59 = scmp.eq.s32.totalorder %s31, 3
      %p60 = por %p58, %p59
      %p61 = scmp.ne.s32.totalorder %s53, %s56
      %p62 = scmp.eq.s32.totalorder %s31, 0
      %p63 = por %p61, %p62
      %p64 = scmp.ne.s32.totalorder %s53, %s56
      %p65 = scmp.eq.s32.totalorder %s36, 3
      %p66 = por %p64, %p65
      %p67 = scmp.ne.s32.totalorder %s56, %s57
      %p68 = scmp.eq.s32.totalorder %s36, 0
      %p69 = por %p67, %p68
      %p70 = scmp.ne.s32.totalorder %s56, %s57
      %p71 = scmp.eq.s32.totalorder %s37, 3
      %p72 = por %p70, %p71
      %p74 = scmp.ne.s32.totalorder %s57, %s73
      %p75 = scmp.eq.s32.totalorder %s37, 0
      %p76 = por %p74, %p75
      %s78 = sadd.s32 %s77, 1
      %p81 = scmp.eq.s32.totalorder %s31, 3
      %p82 = scmp.ne.s32.totalorder %s77, %s79
      %p83 = scmp.eq.s32.totalorder %s31, 0
      %p84 = por %p82, %p83
      %p85 = scmp.ne.s32.totalorder %s77, %s79
      %p86 = scmp.eq.s32.totalorder %s36, 3
      %p87 = por %p85, %p86
      %p88 = scmp.ne.s32.totalorder %s79, %s80
      %p89 = scmp.eq.s32.totalorder %s36, 0
      %p90 = por %p88, %p89
      %p91 = scmp.ne.s32.totalorder %s79, %s80
      %p92 = scmp.eq.s32.totalorder %s37, 3
      %p93 = por %p91, %p92
      %p95 = scmp.ne.s32.totalorder %s80, %s94
      %p96 = scmp.eq.s32.totalorder %s37, 0
      %p97 = por %p95, %p96
      %s99 = sadd.s32 %s98, 1
      %p102 = scmp.eq.s32.totalorder %s31, 3
      %p103 = scmp.ne.s32.totalorder %s98, %s100
      %p104 = scmp.eq.s32.totalorder %s31, 0
      %p105 = por %p103, %p104
      %p106 = scmp.ne.s32.totalorder %s98, %s100
      %p107 = scmp.eq.s32.totalorder %s36, 3
      %p108 = por %p106, %p107
      %p109 = scmp.ne.s32.totalorder %s100, %s101
      %p110 = scmp.eq.s32.totalorder %s36, 0
      %p111 = por %p109, %p110
      %p112 = scmp.ne.s32.totalorder %s100, %s101
      %p113 = scmp.eq.s32.totalorder %s37, 3
      %p114 = por %p112, %p113
      %p116 = scmp.ne.s32.totalorder %s101, %s115
      %p117 = scmp.eq.s32.totalorder %s37, 0
      %p118 = por %p116, %p117
      %s120 = sadd.s32 %s119, 1
      %p123 = scmp.eq.s32.totalorder %s31, 3
      %p124 = scmp.ne.s32.totalorder %s119, %s121
      %p125 = scmp.eq.s32.totalorder %s31, 0
      %p126 = por %p124, %p125
      %p127 = scmp.ne.s32.totalorder %s119, %s121
      %p128 = scmp.eq.s32.totalorder %s36, 3
      %p129 = por %p127, %p128
      %p130 = scmp.ne.s32.totalorder %s121, %s122
      %p131 = scmp.eq.s32.totalorder %s36, 0
      %p132 = por %p130, %p131
      %p133 = scmp.ne.s32.totalorder %s121, %s122
      %p134 = scmp.eq.s32.totalorder %s37, 3
      %p135 = por %p133, %p134
      %p137 = scmp.ne.s32.totalorder %s122, %s136
      %p138 = scmp.eq.s32.totalorder %s37, 0
      %p139 = por %p137, %p138
      %s141 = sadd.s32 %s140, 1
      %p144 = scmp.eq.s32.totalorder %s31, 3
      %p145 = scmp.ne.s32.totalorder %s140, %s142
      %p146 = scmp.eq.s32.totalorder %s31, 0
      %p147 = por %p145, %p146
      %p148 = scmp.ne.s32.totalorder %s140, %s142
      %p149 = scmp.eq.s32.totalorder %s36, 3
      %p150 = por %p148, %p149
      %p151 = scmp.ne.s32.totalorder %s142, %s143
      %p152 = scmp.eq.s32.totalorder %s36, 0
      %p153 = por %p151, %p152
      %p154 = scmp.ne.s32.totalorder %s142, %s143
      %p155 = scmp.eq.s32.totalorder %s37, 3
      %p156 = por %p154, %p155
      %p158 = scmp.ne.s32.totalorder %s143, %s157
      %p159 = scmp.eq.s32.totalorder %s37, 0
      %p160 = por %p158, %p159
      %s162 = sadd.s32 %s161, 1
      %p165 = scmp.eq.s32.totalorder %s31, 3
      %p166 = scmp.ne.s32.totalorder %s161, %s163
      %p167 = scmp.eq.s32.totalorder %s31, 0
      %p168 = por %p166, %p167
      %p169 = scmp.ne.s32.totalorder %s161, %s163
      %p170 = scmp.eq.s32.totalorder %s36, 3
      %p171 = por %p169, %p170
      %p172 = scmp.ne.s32.totalorder %s163, %s164
      %p173 = scmp.eq.s32.totalorder %s36, 0
      %p174 = por %p172, %p173
      %p175 = scmp.ne.s32.totalorder %s163, %s164
      %p176 = scmp.eq.s32.totalorder %s37, 3
      %p177 = por %p175, %p176
      %p179 = scmp.ne.s32.totalorder %s164, %s178
      %p180 = scmp.eq.s32.totalorder %s37, 0
      %p181 = por %p179, %p180
      %s183 = sadd.s32 %s182, 1
      %p186 = scmp.eq.s32.totalorder %s31, 3
      %p187 = scmp.ne.s32.totalorder %s182, %s184
      %p188 = scmp.eq.s32.totalorder %s31, 0
      %p189 = por %p187, %p188
      %p190 = scmp.ne.s32.totalorder %s182, %s184
      %p191 = scmp.eq.s32.totalorder %s36, 3
      %p192 = por %p190, %p191
      %p193 = scmp.ne.s32.totalorder %s184, %s185
      %p194 = scmp.eq.s32.totalorder %s36, 0
      %p195 = por %p193, %p194
      %p196 = scmp.ne.s32.totalorder %s184, %s185
      %p197 = scmp.eq.s32.totalorder %s37, 3
      %p198 = por %p196, %p197
      %p200 = scmp.ne.s32.totalorder %s185, %s199
      %p201 = scmp.eq.s32.totalorder %s37, 0
      %p202 = por %p200, %p201
      %s204 = sadd.s32 %s203, 1
      %p207 = scmp.eq.s32.totalorder %s31, 3
      %p208 = scmp.ne.s32.totalorder %s203, %s205
      %p209 = scmp.eq.s32.totalorder %s31, 0
      %p210 = por %p208, %p209
      %p211 = scmp.ne.s32.totalorder %s203, %s205
      %p212 = scmp.eq.s32.totalorder %s36, 3
      %p213 = por %p211, %p212
      %p214 = scmp.ne.s32.totalorder %s205, %s206
      %p215 = scmp.eq.s32.totalorder %s36, 0
      %p216 = por %p214, %p215
      %p217 = scmp.ne.s32.totalorder %s205, %s206
      %p218 = scmp.eq.s32.totalorder %s37, 3
      %p219 = por %p217, %p218
      %p221 = scmp.ne.s32.totalorder %s206, %s220
      %p222 = scmp.eq.s32.totalorder %s37, 0
      %p223 = por %p221, %p222
      %s225 = sadd.s32 %s224, 1
      %p228 = scmp.eq.s32.totalorder %s31, 3
      %p229 = scmp.ne.s32.totalorder %s224, %s226
      %p230 = scmp.eq.s32.totalorder %s31, 0
      %p231 = por %p229, %p230
      %p232 = scmp.ne.s32.totalorder %s224, %s226
      %p233 = scmp.eq.s32.totalorder %s36, 3
      %p234 = por %p232, %p233
      %p235 = scmp.ne.s32.totalorder %s226, %s227
      %p236 = scmp.eq.s32.totalorder %s36, 0
      %p237 = por %p235, %p236
      %p238 = scmp.ne.s32.totalorder %s226, %s227
      %p239 = scmp.eq.s32.totalorder %s37, 3
      %p240 = por %p238, %p239
      %p242 = scmp.ne.s32.totalorder %s227, %s241
      %p243 = scmp.eq.s32.totalorder %s37, 0
      %p244 = por %p242, %p243
      %s246 = sadd.s32 %s245, 1
      %p249 = scmp.eq.s32.totalorder %s31, 3
      %p250 = scmp.ne.s32.totalorder %s245, %s247
      %p251 = scmp.eq.s32.totalorder %s31, 0
      %p252 = por %p250, %p251
      %p253 = scmp.ne.s32.totalorder %s245, %s247
      %p254 = scmp.eq.s32.totalorder %s36, 3
      %p255 = por %p253, %p254
      %p256 = scmp.ne.s32.totalorder %s247, %s248
      %p257 = scmp.eq.s32.totalorder %s36, 0
      %p258 = por %p256, %p257
      %p259 = scmp.ne.s32.totalorder %s247, %s248
      %p260 = scmp.eq.s32.totalorder %s37, 3
      %p261 = por %p259, %p260
      %p263 = scmp.ne.s32.totalorder %s248, %s262
      %p264 = scmp.eq.s32.totalorder %s37, 0
      %p265 = por %p263, %p264
      %s267 = sadd.s32 %s266, 1
      %p270 = scmp.eq.s32.totalorder %s31, 3
      %p271 = scmp.ne.s32.totalorder %s266, %s268
      %p272 = scmp.eq.s32.totalorder %s31, 0
      %p273 = por %p271, %p272
      %p274 = scmp.ne.s32.totalorder %s266, %s268
      %p275 = scmp.eq.s32.totalorder %s36, 3
      %p276 = por %p274, %p275
      %p277 = scmp.ne.s32.totalorder %s268, %s269
      %p278 = scmp.eq.s32.totalorder %s36, 0
      %p279 = por %p277, %p278
      %p280 = scmp.ne.s32.totalorder %s268, %s269
      %p281 = scmp.eq.s32.totalorder %s37, 3
      %p282 = por %p280, %p281
      %p284 = scmp.ne.s32.totalorder %s269, %s283
      %p285 = scmp.eq.s32.totalorder %s37, 0
      %p286 = por %p284, %p285
      %s288 = sadd.s32 %s287, 1
      %p291 = scmp.eq.s32.totalorder %s31, 3
      %p292 = scmp.ne.s32.totalorder %s287, %s289
      %p293 = scmp.eq.s32.totalorder %s31, 0
      %p294 = por %p292, %p293
      %p295 = scmp.ne.s32.totalorder %s287, %s289
      %p296 = scmp.eq.s32.totalorder %s36, 3
      %p297 = por %p295, %p296
      %p298 = scmp.ne.s32.totalorder %s289, %s290
      %p299 = scmp.eq.s32.totalorder %s36, 0
      %p300 = por %p298, %p299
      %p301 = scmp.ne.s32.totalorder %s289, %s290
      %p302 = scmp.eq.s32.totalorder %s37, 3
      %p303 = por %p301, %p302
      %p305 = scmp.ne.s32.totalorder %s290, %s304
      %p306 = scmp.eq.s32.totalorder %s37, 0
      %p307 = por %p305, %p306
      %s309 = sadd.s32 %s308, 1
      %p312 = scmp.eq.s32.totalorder %s31, 3
      %p313 = scmp.ne.s32.totalorder %s308, %s310
      %p314 = scmp.eq.s32.totalorder %s31, 0
      %p315 = por %p313, %p314
      %p316 = scmp.ne.s32.totalorder %s308, %s310
      %p317 = scmp.eq.s32.totalorder %s36, 3
      %p318 = por %p316, %p317
      %p319 = scmp.ne.s32.totalorder %s310, %s311
      %p320 = scmp.eq.s32.totalorder %s36, 0
      %p321 = por %p319, %p320
      %p322 = scmp.ne.s32.totalorder %s310, %s311
      %p323 = scmp.eq.s32.totalorder %s37, 3
      %p324 = por %p322, %p323
      %p326 = scmp.ne.s32.totalorder %s311, %s325
      %p327 = scmp.eq.s32.totalorder %s37, 0
      %p328 = por %p326, %p327
      %s329 = ssub.s32 %s38, %s50
      %s330 = ssub.s32 %s39, %s46
      %s331 = sor.u32 %s329, %s330
      %p332 = scmp.eq.s32.totalorder %s331, 0
      %s334 = sadd.s32 %s333, 1
      %s335 = scalar_select %p332, %s333, %s334
      %p338 = pneg %p332
      %p339 = scmp.eq.s32.totalorder %s31, 3
      %p340 = por %p338, %p339
      %p341 = scmp.ne.s32.totalorder %s333, %s336
      %p342 = scmp.eq.s32.totalorder %s31, 0
      %p343 = por %p341, %p342
      %p344 = scmp.ne.s32.totalorder %s333, %s336
      %p345 = scmp.eq.s32.totalorder %s36, 3
      %p346 = por %p344, %p345
      %p347 = scmp.ne.s32.totalorder %s336, %s337
      %p348 = scmp.eq.s32.totalorder %s36, 0
      %p349 = por %p347, %p348
      %p350 = scmp.ne.s32.totalorder %s336, %s337
      %p351 = scmp.eq.s32.totalorder %s37, 3
      %p352 = por %p350, %p351
      %p354 = scmp.ne.s32.totalorder %s337, %s353
      %p355 = scmp.eq.s32.totalorder %s37, 0
      %p356 = por %p354, %p355
      %s357 = ssub.s32 %s38, %s50
      %s358 = ssub.s32 %s39, %s46
      %s359 = sor.u32 %s357, %s358
      %p360 = scmp.eq.s32.totalorder %s359, 0
      %s362 = sadd.s32 %s361, 1
      %s363 = scalar_select %p360, %s361, %s362
      %p366 = pneg %p360
      %p367 = scmp.eq.s32.totalorder %s31, 3
      %p368 = por %p366, %p367
      %p369 = scmp.ne.s32.totalorder %s361, %s364
      %p370 = scmp.eq.s32.totalorder %s31, 0
      %p371 = por %p369, %p370
      %p372 = scmp.ne.s32.totalorder %s361, %s364
      %p373 = scmp.eq.s32.totalorder %s36, 3
      %p374 = por %p372, %p373
      %p375 = scmp.ne.s32.totalorder %s364, %s365
      %p376 = scmp.eq.s32.totalorder %s36, 0
      %p377 = por %p375, %p376
      %p378 = scmp.ne.s32.totalorder %s364, %s365
      %p379 = scmp.eq.s32.totalorder %s37, 3
      %p380 = por %p378, %p379
      %p382 = scmp.ne.s32.totalorder %s365, %s381
      %p383 = scmp.eq.s32.totalorder %s37, 0
      %p384 = por %p382, %p383
      %p385 = scmp.le.s32.totalorder 1, %s31
      %p386 = scmp.lt.s32.totalorder %s31, 5
      %p387 = pnand %p385, %p386
      %p388 = pneg %p387
      // Predicated region
      $region9: #{tpu_custom_call.1} parent=5 // pred_check
        _
      $region10: #{tpu_custom_call.1} parent=5 // pred_check_branch
        %390 = sbr.rel (%p387) target = $region12
      $region11: #{tpu_custom_call.1} parent=5 // pred_region
        %s391 = ssub.s32 %s31, 1
        // Predicated region
        $region13: #{tpu_custom_call.1} parent=11 // pred_check
          %p392 = pneg %p90
        $region14: #{tpu_custom_call.1} parent=11 // pred_check_branch
          %394 = sbr.rel (%p392) target = $region16
        $region15: #{tpu_custom_call.1} parent=11 // pred_region
          _
        $region16: #{tpu_custom_call.1} parent=11 // pred_fallthru
          _
        // Predicated region
        $region17: #{tpu_custom_call.1} parent=11 // pred_check
          %p395 = pneg %p111
        $region18: #{tpu_custom_call.1} parent=11 // pred_check_branch
          %397 = sbr.rel (%p395) target = $region20
        $region19: #{tpu_custom_call.1} parent=11 // pred_region
          %399 = vsyncadd [#allocation8], 0
          %s401 = sshll.u32 %s2, 4
          %s402 = int_to_ptr.hbm [resolvable:$true] %s401
          %s403 = sshll.u32 [#allocation7], 4
          %s404 = int_to_ptr.vmem [resolvable:$true] %s403
          %406 = dma.hbm_to_vmem [thread:$0]  %s402, 32, %s404, [#allocation8]
        $region20: #{tpu_custom_call.1} parent=11 // pred_fallthru
          _
        // Predicated region
        $region21: #{tpu_custom_call.1} parent=11 // pred_check
          %p407 = pneg %p132
        $region22: #{tpu_custom_call.1} parent=11 // pred_check_branch
          %409 = sbr.rel (%p407) target = $region24
        $region23: #{tpu_custom_call.1} parent=11 // pred_region
          _
        $region24: #{tpu_custom_call.1} parent=11 // pred_fallthru
          _
        // Predicated region
        $region25: #{tpu_custom_call.1} parent=11 // pred_check
          %p410 = pneg %p153
        $region26: #{tpu_custom_call.1} parent=11 // pred_check_branch
          %412 = sbr.rel (%p410) target = $region28
        $region27: #{tpu_custom_call.1} parent=11 // pred_region
          _
        $region28: #{tpu_custom_call.1} parent=11 // pred_fallthru
          _
        // Predicated region
        $region29: #{tpu_custom_call.1} parent=11 // pred_check
          %p413 = pneg %p174
        $region30: #{tpu_custom_call.1} parent=11 // pred_check_branch
          %415 = sbr.rel (%p413) target = $region32
        $region31: #{tpu_custom_call.1} parent=11 // pred_region
          _
        $region32: #{tpu_custom_call.1} parent=11 // pred_fallthru
          _
        // Predicated region
        $region33: #{tpu_custom_call.1} parent=11 // pred_check
          %p416 = pneg %p195
        $region34: #{tpu_custom_call.1} parent=11 // pred_check_branch
          %418 = sbr.rel (%p416) target = $region36
        $region35: #{tpu_custom_call.1} parent=11 // pred_region
          _
        $region36: #{tpu_custom_call.1} parent=11 // pred_fallthru
          _
        // Predicated region
        $region37: #{tpu_custom_call.1} parent=11 // pred_check
          %p419 = pneg %p216
        $region38: #{tpu_custom_call.1} parent=11 // pred_check_branch
          %421 = sbr.rel (%p419) target = $region40
        $region39: #{tpu_custom_call.1} parent=11 // pred_region
          _
        $region40: #{tpu_custom_call.1} parent=11 // pred_fallthru
          _
        // Predicated region
        $region41: #{tpu_custom_call.1} parent=11 // pred_check
          %p422 = pneg %p237
        $region42: #{tpu_custom_call.1} parent=11 // pred_check_branch
          %424 = sbr.rel (%p422) target = $region44
        $region43: #{tpu_custom_call.1} parent=11 // pred_region
          _
        $region44: #{tpu_custom_call.1} parent=11 // pred_fallthru
          _
        // Predicated region
        $region45: #{tpu_custom_call.1} parent=11 // pred_check
          %p425 = pneg %p258
        $region46: #{tpu_custom_call.1} parent=11 // pred_check_branch
          %427 = sbr.rel (%p425) target = $region48
        $region47: #{tpu_custom_call.1} parent=11 // pred_region
          %429 = vsyncadd [#allocation8], 0
          %s430 = sshll.u32 %s9, 4
          %s431 = int_to_ptr.hbm [resolvable:$true] %s430
          %s432 = sshll.u32 [#allocation9], 4
          %s433 = int_to_ptr.vmem [resolvable:$true] %s432
          %438 = dma.hbm_to_vmem [thread:$0]  %s431, 1024, %s433, [#allocation8], 128, 128, 8
        $region48: #{tpu_custom_call.1} parent=11 // pred_fallthru
          _
        // Predicated region
        $region49: #{tpu_custom_call.1} parent=11 // pred_check
          %p439 = pneg %p279
        $region50: #{tpu_custom_call.1} parent=11 // pred_check_branch
          %441 = sbr.rel (%p439) target = $region52
        $region51: #{tpu_custom_call.1} parent=11 // pred_region
          _
        $region52: #{tpu_custom_call.1} parent=11 // pred_fallthru
          _
        // Predicated region
        $region53: #{tpu_custom_call.1} parent=11 // pred_check
          %p442 = pneg %p300
        $region54: #{tpu_custom_call.1} parent=11 // pred_check_branch
          %444 = sbr.rel (%p442) target = $region56
        $region55: #{tpu_custom_call.1} parent=11 // pred_region
          _
        $region56: #{tpu_custom_call.1} parent=11 // pred_fallthru
          _
        // Predicated region
        $region57: #{tpu_custom_call.1} parent=11 // pred_check
          %p445 = pneg %p321
        $region58: #{tpu_custom_call.1} parent=11 // pred_check_branch
          %447 = sbr.rel (%p445) target = $region60
        $region59: #{tpu_custom_call.1} parent=11 // pred_region
          _
        $region60: #{tpu_custom_call.1} parent=11 // pred_fallthru
          _
      $region12: #{tpu_custom_call.1} parent=5 // pred_fallthru
        _
      %p448 = scmp.lt.s32.totalorder %s31, 4
      // Predicated region
      $region61: #{tpu_custom_call.1} parent=5 // pred_check
        %p449 = pneg %p448
      $region62: #{tpu_custom_call.1} parent=5 // pred_check_branch
        %451 = sbr.rel (%p449) target = $region64
      $region63: #{tpu_custom_call.1} parent=5 // pred_region
        // Predicated region
        $region65: #{tpu_custom_call.1} parent=63 // pred_check
          %p452 = pneg %p63
        $region66: #{tpu_custom_call.1} parent=63 // pred_check_branch
          %454 = sbr.rel (%p452) target = $region68
        $region67: #{tpu_custom_call.1} parent=63 // pred_region
          %s455 = sand.u32 %s53, 1
          %s456 = scalar_lea.sflag [#allocation5], %s455
          %s457 = sand.u32 %s53, 1
          %s458 = smul.addr %s457, 16
          %s459 = scalar_lea.vmem [#allocation4], %s458
          %461 = vsyncadd %s456, 0
          %s462 = smul.addr %s38, 2
          %s463 = smul.addr %s462, 8
          %s464 = scalar_lea.hbm %s0, %s463
          %s465 = sshll.u32 %s464, 4
          %s466 = int_to_ptr.hbm [resolvable:$true] %s465
          %s467 = sshll.u32 %s459, 4
          %s468 = int_to_ptr.vmem [resolvable:$true] %s467
          %473 = dma.hbm_to_vmem [thread:$0]  %s466, 256, %s468, %s456, 128, 128, 8
        $region68: #{tpu_custom_call.1} parent=63 // pred_fallthru
          _
      $region64: #{tpu_custom_call.1} parent=5 // pred_fallthru
        _
      %p474 = scmp.le.s32.totalorder 1, %s31
      %p475 = scmp.lt.s32.totalorder %s31, 5
      %p476 = pnand %p474, %p475
      %p477 = pneg %p476
      // Predicated region
      $region69: #{tpu_custom_call.1} parent=5 // pred_check
        _
      $region70: #{tpu_custom_call.1} parent=5 // pred_check_branch
        %479 = sbr.rel (%p476) target = $region72
      $region71: #{tpu_custom_call.1} parent=5 // pred_region
        %s480 = ssub.s32 %s31, 1
        %s481 = sand.u32 %s56, 1
        %s482 = scalar_lea.sflag [#allocation5], %s481
        %s483 = sand.u32 %s56, 1
        %s484 = smul.addr %s483, 16
        %s485 = scalar_lea.vmem [#allocation4], %s484
        // Predicated region
        $region73: #{tpu_custom_call.1} parent=71 // pred_check
          %p486 = pneg %p69
        $region74: #{tpu_custom_call.1} parent=71 // pred_check_branch
          %488 = sbr.rel (%p486) target = $region76
        $region75: #{tpu_custom_call.1} parent=71 // pred_region
          %490 = dma.done %s482, 256
        $region76: #{tpu_custom_call.1} parent=71 // pred_fallthru
          _
        // Predicated region
        $region77: #{tpu_custom_call.1} parent=71 // pred_check
          %p491 = pneg %p111
        $region78: #{tpu_custom_call.1} parent=71 // pred_check_branch
          %493 = sbr.rel (%p491) target = $region80
        $region79: #{tpu_custom_call.1} parent=71 // pred_region
          %495 = dma.done [#allocation8], 32
        $region80: #{tpu_custom_call.1} parent=71 // pred_fallthru
          _
        // Predicated region
        $region81: #{tpu_custom_call.1} parent=71 // pred_check
          %p496 = pneg %p258
        $region82: #{tpu_custom_call.1} parent=71 // pred_check_branch
          %498 = sbr.rel (%p496) target = $region84
        $region83: #{tpu_custom_call.1} parent=71 // pred_region
          %500 = dma.done [#allocation8], 1024
        $region84: #{tpu_custom_call.1} parent=71 // pred_fallthru
          _
        %s501 = sand.u32 %s56, 1
        %s502 = scalar_lea.sflag [#allocation5], %s501
        %s503 = sand.u32 %s56, 1
        %s504 = smul.addr %s503, 16
        %s505 = scalar_lea.vmem [#allocation4], %s504
        %p506 = pneg %p69
        %p507 = pneg %p66
        %p508 = pneg %p90
        %p509 = pneg %p87
        %p510 = pneg %p111
        %p511 = pneg %p108
        %p512 = pneg %p132
        %p513 = pneg %p129
        %p514 = pneg %p153
        %p515 = pneg %p150
        %p516 = pneg %p174
        %p517 = pneg %p171
        %p518 = pneg %p195
        %p519 = pneg %p192
        %p520 = pneg %p216
        %p521 = pneg %p213
        %p522 = pneg %p237
        %p523 = pneg %p234
        %p524 = pneg %p258
        %p525 = pneg %p255
        %p526 = pneg %p279
        %p527 = pneg %p276
        %p528 = pneg %p300
        %p529 = pneg %p297
        %p530 = pneg %p321
        %p531 = pneg %p318
        %p532 = pneg %p349
        %p533 = pneg %p346
        %s534 = sand.u32 %s336, 1
        %s535 = scalar_lea.sflag [#allocation6], %s534
        %s536 = sand.u32 %s336, 1
        %s537 = smul.addr %s536, 8
        %s538 = scalar_lea.vmem [#allocation10], %s537
        %p539 = pneg %p377
        %p540 = pneg %p374
        %s541 = sand.u32 %s364, 1
        %s542 = scalar_lea.sflag [#allocation12], %s541
        %s543 = sand.u32 %s364, 1
        %s544 = smul.addr %s543, 32
        %s545 = scalar_lea.vmem [#allocation11], %s544
        %p546 = scmp.eq.s32.totalorder %s41, 0
        // Predicated region
        $region85: #{tpu_custom_call.1} parent=71 // pred_check
          %p547 = pneg %p546
        $region86: #{tpu_custom_call.1} parent=71 // pred_check_branch
          %549 = sbr.rel (%p547) target = $region88
        $region87: #{tpu_custom_call.1} parent=71 // pred_region
          %v550 = vld [vmem:[%s485] sm:$0xff]
          %v551 = vld [vmem:[%s485 + $0x8] sm:$0xff]
          %v552 = vld [vmem:[%s5] sm:$0x1]
          %v553 = vld [vmem:[%s6] sm:$0x1]
          %vm554 = vcmask 523264
          %v555 = vsel %vm554, %v550, 0.0
          %556 = vadd.xlane.f32.xlu0 %v555
          %v557 = vpop.xlane.xlu0 %556
          %v558 = vsel %vm554, %v551, 0.0
          %559 = vadd.xlane.f32.xlu0 %v558
          %v560 = vpop.xlane.xlu0 %559
          %v561 = vrcp.pop 64.0
          %v562 = vmul.f32 64.0, %v561
          %v563 = vsub.f32 1.0, %v562
          %v564 = vmul.f32 %v561, %v563
          %v565 = vadd.f32 %v561, %v564
          %vm566 = vweird.f32 %v561
          %v567 = vsel %vm566, %v561, %v565
          %v568 = vmul.f32 %v557, %v567
          %v569 = vmul.f32 %v560, %v567
          %v570 = vsub.f32 %v550, %v568
          %v571 = vsub.f32 %v551, %v569
          %v572 = vmul.f32 %v570, %v570
          %v573 = vmul.f32 %v571, %v571
          %v574 = vsel %vm554, %v572, 0.0
          %575 = vadd.xlane.f32.xlu0 %v574
          %v576 = vpop.xlane.xlu0 %575
          %v577 = vsel %vm554, %v573, 0.0
          %578 = vadd.xlane.f32.xlu0 %v577
          %v579 = vpop.xlane.xlu0 %578
          %v580 = vmul.f32 %v576, %v567
          %v581 = vmul.f32 %v579, %v567
          %v582 = vadd.f32 %v580, 1e-05
          %v583 = vadd.f32 %v581, 1e-05
          %v584 = vrsqrt.pop %v582
          %v585 = vmul.f32 %v584, %v582
          %v586 = vmul.f32 %v585, %v584
          %v587 = vmul.f32 0.5, %v586
          %v588 = vsub.f32 1.5, %v587
          %v589 = vmul.f32 %v584, %v588
          %vm590 = vweird.f32 %v582
          %vm591 = vweird.f32 %v584
          %vm592 = vmor %vm590, %vm591
          %v593 = vsel %vm592, %v584, %v589
          %v594 = vrsqrt.pop %v583
          %v595 = vmul.f32 %v594, %v583
          %v596 = vmul.f32 %v595, %v594
          %v597 = vmul.f32 0.5, %v596
          %v598 = vsub.f32 1.5, %v597
          %v599 = vmul.f32 %v594, %v598
          %vm600 = vweird.f32 %v583
          %vm601 = vweird.f32 %v594
          %vm602 = vmor %vm600, %vm601
          %v603 = vsel %vm602, %v594, %v599
          %v604 = vmul.f32 %v570, %v593
          %v605 = vmul.f32 %v571, %v603
          %v607 = vperm.slane %v552, 0
          %v609 = vmul.f32 %v604, %v607
          %v610 = vmul.f32 %v605, %v607
          %v612 = vperm.slane %v553, 0
          %v614 = vadd.f32 %v609, %v612
          %v615 = vadd.f32 %v610, %v612
          %v616 = vld [vmem:[%s1] sm:$0xff]
          %v617 = vld [vmem:[%s1 + $0x8] sm:$0xff]
          %v618 = vld [vmem:[%s1 + $0x10] sm:$0xff]
          %v619 = vld [vmem:[%s1 + $0x18] sm:$0xff]
          %v620 = vld [vmem:[%s1 + $0x20] sm:$0xff]
          %v621 = vld [vmem:[%s1 + $0x28] sm:$0xff]
          %v622 = vld [vmem:[%s1 + $0x30] sm:$0xff]
          %v623 = vld [vmem:[%s1 + $0x38] sm:$0xff]
          %v624 = vld [vmem:[%s1 + $0x40] sm:$0xff]
          %v625 = vld [vmem:[%s1 + $0x48] sm:$0xff]
          %v626 = vld [vmem:[%s1 + $0x50] sm:$0xff]
          %v627 = vld [vmem:[%s1 + $0x58] sm:$0xff]
          %v628 = vld [vmem:[%s1 + $0x60] sm:$0xff]
          %v629 = vld [vmem:[%s1 + $0x68] sm:$0xff]
          %v630 = vld [vmem:[%s1 + $0x70] sm:$0xff]
          %v631 = vld [vmem:[%s1 + $0x78] sm:$0xff]
          %v632 = vld [vmem:[#allocation7] sm:$0x3]
          %v634 = vperm.slane %v632, 0
          %v635 = vperm.slane %v632, 1
          %v639 = vsel %vm554, %v614, 0
          %v642 = vsel %vm554, %v615, 0
          %644 = vmatpush.msra.mxu0 0.0
          %645 = vmatpush.msra.mxu0 0.0
          %646 = vmatpush.msra.mxu0 0.0
          %647 = vmatpush.msra.mxu0 0.0
          %648 = vmatpush.msra.mxu0 0.0
          %649 = vmatpush.msra.mxu0 0.0
          %650 = vmatpush.msra.mxu0 0.0
          %651 = vmatpush.msra.mxu0 0.0
          %652 = vmatpush.msra.mxu0 %v630
          %653 = vmatpush.msra.mxu0 %v628
          %654 = vmatpush.msra.mxu0 %v626
          %655 = vmatpush.msra.mxu0 %v624
          %656 = vmatpush.msra.mxu0 %v622
          %657 = vmatpush.msra.mxu0 %v620
          %658 = vmatpush.msra.mxu0 %v618
          %659 = vmatpush.msra.mxu0 %v616
          %660 = vmatmul.f32.gmra.mxu0 %v639
          %v661 = vpop.f32.mrf.mxu0
          %v662 = vadd.f32 %v634, %v661
          %663 = vmatmul.f32.gmra.mxu0 %v642
          %v664 = vpop.f32.mrf.mxu0
          %v665 = vadd.f32 %v634, %v664
          %666 = vdwg.mxu0
          %667 = vmatpush.msra.mxu0 0.0
          %668 = vmatpush.msra.mxu0 0.0
          %669 = vmatpush.msra.mxu0 0.0
          %670 = vmatpush.msra.mxu0 0.0
          %671 = vmatpush.msra.mxu0 0.0
          %672 = vmatpush.msra.mxu0 0.0
          %673 = vmatpush.msra.mxu0 0.0
          %674 = vmatpush.msra.mxu0 0.0
          %675 = vmatpush.msra.mxu0 %v631
          %676 = vmatpush.msra.mxu0 %v629
          %677 = vmatpush.msra.mxu0 %v627
          %678 = vmatpush.msra.mxu0 %v625
          %679 = vmatpush.msra.mxu0 %v623
          %680 = vmatpush.msra.mxu0 %v621
          %681 = vmatpush.msra.mxu0 %v619
          %682 = vmatpush.msra.mxu0 %v617
          %683 = vmatmul.f32.gmra.mxu0 %v639
          %v684 = vpop.f32.mrf.mxu0
          %v685 = vadd.f32 %v635, %v684
          %686 = vmatmul.f32.gmra.mxu0 %v642
          %v687 = vpop.f32.mrf.mxu0
          %v688 = vadd.f32 %v635, %v687
          %689 = vdwg.mxu0
          %692 = vrot.lane.b32.xlu0 %v662, 112
          %v693 = vpop.permute.xlu0 %692
          %694 = vrot.lane.b32.xlu0 %v665, 112
          %v695 = vpop.permute.xlu0 %694
          %698 = vrot.lane.b32.xlu0 %v662, 96
          %v699 = vpop.permute.xlu0 %698
          %700 = vrot.lane.b32.xlu0 %v665, 96
          %v701 = vpop.permute.xlu0 %700
          %704 = vrot.lane.b32.xlu0 %v662, 80
          %v705 = vpop.permute.xlu0 %704
          %706 = vrot.lane.b32.xlu0 %v665, 80
          %v707 = vpop.permute.xlu0 %706
          %v710 = vrot.slane %v699, 4
          %vm711 = vcmask 1047556
          %v712 = vsel %vm711, %v710, %v662
          %v713 = vrot.slane %v662, 4
          %v714 = vsel %vm711, %v699, %v713
          %v716 = vunpack.c.l.s4 1983009808
          %v717 = vunpack.c.0.s8 %v716
          %v718 = vperm.slane %v712, %v717
          %v720 = vunpack.c.l.s4 1983009808
          %v721 = vunpack.c.0.s8 %v720
          %v722 = vperm.slane %v714, %v721
          %v723 = vrot.slane %v705, 4
          %v724 = vsel %vm711, %v723, %v693
          %v725 = vrot.slane %v693, 4
          %v726 = vsel %vm711, %v705, %v725
          %v728 = vunpack.c.l.s4 1983009808
          %v729 = vunpack.c.0.s8 %v728
          %v730 = vperm.slane %v724, %v729
          %v732 = vunpack.c.l.s4 1983009808
          %v733 = vunpack.c.0.s8 %v732
          %v734 = vperm.slane %v726, %v733
          %v735 = vrot.slane %v730, 4
          %v736 = vsel %vm711, %v735, %v718
          %v737 = vrot.slane %v718, 4
          %v738 = vsel %vm711, %v730, %v737
          %v740 = vunpack.c.l.s4 1934713408
          %v741 = vunpack.c.0.s8 %v740
          %v742 = vperm.slane %v736, %v741
          %v744 = vunpack.c.l.s4 1934713408
          %v745 = vunpack.c.0.s8 %v744
          %v746 = vperm.slane %v738, %v745
          %v747 = vrot.slane %v734, 4
          %v748 = vsel %vm711, %v747, %v722
          %v749 = vrot.slane %v722, 4
          %v750 = vsel %vm711, %v734, %v749
          %v752 = vunpack.c.l.s4 1934713408
          %v753 = vunpack.c.0.s8 %v752
          %v754 = vperm.slane %v748, %v753
          %v756 = vunpack.c.l.s4 1934713408
          %v757 = vunpack.c.0.s8 %v756
          %v758 = vperm.slane %v750, %v757
          %v759 = vrot.slane %v742, 4
          %v760 = vsel %vm711, 0.0, %v759
          %v761 = vrot.slane %v746, 4
          %v762 = vsel %vm711, 0.0, %v761
          %v763 = vrot.slane %v754, 4
          %v764 = vsel %vm711, 0.0, %v763
          %v765 = vrot.slane %v758, 4
          %v766 = vsel %vm711, 0.0, %v765
          %v767 = vrot.slane %v701, 4
          %v768 = vsel %vm711, %v767, %v665
          %v769 = vrot.slane %v665, 4
          %v770 = vsel %vm711, %v701, %v769
          %v772 = vunpack.c.l.s4 1983009808
          %v773 = vunpack.c.0.s8 %v772
          %v774 = vperm.slane %v768, %v773
          %v776 = vunpack.c.l.s4 1983009808
          %v777 = vunpack.c.0.s8 %v776
          %v778 = vperm.slane %v770, %v777
          %v779 = vrot.slane %v707, 4
          %v780 = vsel %vm711, %v779, %v695
          %v781 = vrot.slane %v695, 4
          %v782 = vsel %vm711, %v707, %v781
          %v784 = vunpack.c.l.s4 1983009808
          %v785 = vunpack.c.0.s8 %v784
          %v786 = vperm.slane %v780, %v785
          %v788 = vunpack.c.l.s4 1983009808
          %v789 = vunpack.c.0.s8 %v788
          %v790 = vperm.slane %v782, %v789
          %v791 = vrot.slane %v786, 4
          %v792 = vsel %vm711, %v791, %v774
          %v793 = vrot.slane %v774, 4
          %v794 = vsel %vm711, %v786, %v793
          %v796 = vunpack.c.l.s4 1934713408
          %v797 = vunpack.c.0.s8 %v796
          %v798 = vperm.slane %v792, %v797
          %v800 = vunpack.c.l.s4 1934713408
          %v801 = vunpack.c.0.s8 %v800
          %v802 = vperm.slane %v794, %v801
          %v803 = vrot.slane %v790, 4
          %v804 = vsel %vm711, %v803, %v778
          %v805 = vrot.slane %v778, 4
          %v806 = vsel %vm711, %v790, %v805
          %v808 = vunpack.c.l.s4 1934713408
          %v809 = vunpack.c.0.s8 %v808
          %v810 = vperm.slane %v804, %v809
          %v812 = vunpack.c.l.s4 1934713408
          %v813 = vunpack.c.0.s8 %v812
          %v814 = vperm.slane %v806, %v813
          %v815 = vrot.slane %v798, 4
          %v816 = vsel %vm711, 0.0, %v815
          %v817 = vrot.slane %v802, 4
          %v818 = vsel %vm711, 0.0, %v817
          %v819 = vrot.slane %v810, 4
          %v820 = vsel %vm711, 0.0, %v819
          %v821 = vrot.slane %v814, 4
          %v822 = vsel %vm711, 0.0, %v821
          %v823 = vsel %vm711, %v761, %v742
          %v825 = vunpack.c.l.s4 1983009808
          %v826 = vunpack.c.0.s8 %v825
          %v827 = vperm.slane %v823, %v826
          %v828 = vrot.slane %v762, 4
          %v829 = vsel %vm711, %v828, %v760
          %v831 = vunpack.c.l.s4 1983009808
          %v832 = vunpack.c.0.s8 %v831
          %v833 = vperm.slane %v829, %v832
          %v834 = vsel %vm711, %v765, %v754
          %v836 = vunpack.c.l.s4 1983009808
          %v837 = vunpack.c.0.s8 %v836
          %v838 = vperm.slane %v834, %v837
          %v839 = vrot.slane %v766, 4
          %v840 = vsel %vm711, %v839, %v764
          %v842 = vunpack.c.l.s4 1983009808
          %v843 = vunpack.c.0.s8 %v842
          %v844 = vperm.slane %v840, %v843
          %v845 = vrot.slane %v833, 4
          %v846 = vsel %vm711, %v845, %v827
          %v847 = vrot.slane %v827, 4
          %v848 = vsel %vm711, %v833, %v847
          %v850 = vunpack.c.l.s4 1934713408
          %v851 = vunpack.c.0.s8 %v850
          %v852 = vperm.slane %v846, %v851
          %v854 = vunpack.c.l.s4 1934713408
          %v855 = vunpack.c.0.s8 %v854
          %v856 = vperm.slane %v848, %v855
          %v857 = vrot.slane %v844, 4
          %v858 = vsel %vm711, %v857, %v838
          %v859 = vrot.slane %v838, 4
          %v860 = vsel %vm711, %v844, %v859
          %v862 = vunpack.c.l.s4 1934713408
          %v863 = vunpack.c.0.s8 %v862
          %v864 = vperm.slane %v858, %v863
          %v866 = vunpack.c.l.s4 1934713408
          %v867 = vunpack.c.0.s8 %v866
          %v868 = vperm.slane %v860, %v867
          %v869 = vrot.slane %v864, 4
          %v870 = vsel %vm711, %v869, %v852
          %v871 = vrot.slane %v852, 4
          %v872 = vsel %vm711, %v864, %v871
          %v873 = vrot.slane %v868, 4
          %v874 = vsel %vm711, %v873, %v856
          %v875 = vrot.slane %v856, 4
          %v876 = vsel %vm711, %v868, %v875
          %v877 = vsel %vm711, %v817, %v798
          %v879 = vunpack.c.l.s4 1983009808
          %v880 = vunpack.c.0.s8 %v879
          %v881 = vperm.slane %v877, %v880
          %v882 = vrot.slane %v818, 4
          %v883 = vsel %vm711, %v882, %v816
          %v885 = vunpack.c.l.s4 1983009808
          %v886 = vunpack.c.0.s8 %v885
          %v887 = vperm.slane %v883, %v886
          %v888 = vsel %vm711, %v821, %v810
          %v890 = vunpack.c.l.s4 1983009808
          %v891 = vunpack.c.0.s8 %v890
          %v892 = vperm.slane %v888, %v891
          %v893 = vrot.slane %v822, 4
          %v894 = vsel %vm711, %v893, %v820
          %v896 = vunpack.c.l.s4 1983009808
          %v897 = vunpack.c.0.s8 %v896
          %v898 = vperm.slane %v894, %v897
          %v899 = vrot.slane %v887, 4
          %v900 = vsel %vm711, %v899, %v881
          %v901 = vrot.slane %v881, 4
          %v902 = vsel %vm711, %v887, %v901
          %v904 = vunpack.c.l.s4 1934713408
          %v905 = vunpack.c.0.s8 %v904
          %v906 = vperm.slane %v900, %v905
          %v908 = vunpack.c.l.s4 1934713408
          %v909 = vunpack.c.0.s8 %v908
          %v910 = vperm.slane %v902, %v909
          %v911 = vrot.slane %v898, 4
          %v912 = vsel %vm711, %v911, %v892
          %v913 = vrot.slane %v892, 4
          %v914 = vsel %vm711, %v898, %v913
          %v916 = vunpack.c.l.s4 1934713408
          %v917 = vunpack.c.0.s8 %v916
          %v918 = vperm.slane %v912, %v917
          %v920 = vunpack.c.l.s4 1934713408
          %v921 = vunpack.c.0.s8 %v920
          %v922 = vperm.slane %v914, %v921
          %v923 = vrot.slane %v918, 4
          %v924 = vsel %vm711, %v923, %v906
          %v925 = vrot.slane %v906, 4
          %v926 = vsel %vm711, %v918, %v925
          %v927 = vrot.slane %v922, 4
          %v928 = vsel %vm711, %v927, %v910
          %v929 = vrot.slane %v910, 4
          %v930 = vsel %vm711, %v922, %v929
          %vm931 = vcmask 130048
          %932 = vst.msk [vmem:[#allocation2] sm:$0xff] %vm931, %v870
          %933 = vst.msk [vmem:[#allocation2 + $0x8] sm:$0xff] %vm931, %v924
          %934 = vst.msk [vmem:[#allocation2 + $0x10] sm:$0xff] %vm931, %v872
          %935 = vst.msk [vmem:[#allocation2 + $0x18] sm:$0xff] %vm931, %v926
          %936 = vst.msk [vmem:[#allocation2 + $0x20] sm:$0xff] %vm931, %v874
          %937 = vst.msk [vmem:[#allocation2 + $0x28] sm:$0xff] %vm931, %v928
          %938 = vst.msk [vmem:[#allocation2 + $0x30] sm:$0xff] %vm931, %v876
          %939 = vst.msk [vmem:[#allocation2 + $0x38] sm:$0xff] %vm931, %v930
          %940 = vrot.lane.b32.xlu0 %v662, 64
          %v941 = vpop.permute.xlu0 %940
          %942 = vrot.lane.b32.xlu0 %v665, 64
          %v943 = vpop.permute.xlu0 %942
          %944 = vrot.lane.b32.xlu0 %v693, 64
          %v945 = vpop.permute.xlu0 %944
          %946 = vrot.lane.b32.xlu0 %v695, 64
          %v947 = vpop.permute.xlu0 %946
          %948 = vrot.lane.b32.xlu0 %v699, 64
          %v949 = vpop.permute.xlu0 %948
          %950 = vrot.lane.b32.xlu0 %v701, 64
          %v951 = vpop.permute.xlu0 %950
          %952 = vrot.lane.b32.xlu0 %v705, 64
          %v953 = vpop.permute.xlu0 %952
          %954 = vrot.lane.b32.xlu0 %v707, 64
          %v955 = vpop.permute.xlu0 %954
          %v964 = vrot.slane %v949, 4
          %v965 = vsel %vm711, %v964, %v941
          %v966 = vrot.slane %v941, 4
          %v967 = vsel %vm711, %v949, %v966
          %v969 = vunpack.c.l.s4 1983009808
          %v970 = vunpack.c.0.s8 %v969
          %v971 = vperm.slane %v965, %v970
          %v973 = vunpack.c.l.s4 1983009808
          %v974 = vunpack.c.0.s8 %v973
          %v975 = vperm.slane %v967, %v974
          %v976 = vrot.slane %v953, 4
          %v977 = vsel %vm711, %v976, %v945
          %v978 = vrot.slane %v945, 4
          %v979 = vsel %vm711, %v953, %v978
          %v981 = vunpack.c.l.s4 1983009808
          %v982 = vunpack.c.0.s8 %v981
          %v983 = vperm.slane %v977, %v982
          %v985 = vunpack.c.l.s4 1983009808
          %v986 = vunpack.c.0.s8 %v985
          %v987 = vperm.slane %v979, %v986
          %v988 = vrot.slane %v983, 4
          %v989 = vsel %vm711, %v988, %v971
          %v990 = vrot.slane %v971, 4
          %v991 = vsel %vm711, %v983, %v990
          %v993 = vunpack.c.l.s4 1934713408
          %v994 = vunpack.c.0.s8 %v993
          %v995 = vperm.slane %v989, %v994
          %v997 = vunpack.c.l.s4 1934713408
          %v998 = vunpack.c.0.s8 %v997
          %v999 = vperm.slane %v991, %v998
          %v1000 = vrot.slane %v987, 4
          %v1001 = vsel %vm711, %v1000, %v975
          %v1002 = vrot.slane %v975, 4
          %v1003 = vsel %vm711, %v987, %v1002
          %v1005 = vunpack.c.l.s4 1934713408
          %v1006 = vunpack.c.0.s8 %v1005
          %v1007 = vperm.slane %v1001, %v1006
          %v1009 = vunpack.c.l.s4 1934713408
          %v1010 = vunpack.c.0.s8 %v1009
          %v1011 = vperm.slane %v1003, %v1010
          %v1012 = vrot.slane %v995, 4
          %v1013 = vsel %vm711, 0.0, %v1012
          %v1014 = vrot.slane %v999, 4
          %v1015 = vsel %vm711, 0.0, %v1014
          %v1016 = vrot.slane %v1007, 4
          %v1017 = vsel %vm711, 0.0, %v1016
          %v1018 = vrot.slane %v1011, 4
          %v1019 = vsel %vm711, 0.0, %v1018
          %v1020 = vrot.slane %v951, 4
          %v1021 = vsel %vm711, %v1020, %v943
          %v1022 = vrot.slane %v943, 4
          %v1023 = vsel %vm711, %v951, %v1022
          %v1025 = vunpack.c.l.s4 1983009808
          %v1026 = vunpack.c.0.s8 %v1025
          %v1027 = vperm.slane %v1021, %v1026
          %v1029 = vunpack.c.l.s4 1983009808
          %v1030 = vunpack.c.0.s8 %v1029
          %v1031 = vperm.slane %v1023, %v1030
          %v1032 = vrot.slane %v955, 4
          %v1033 = vsel %vm711, %v1032, %v947
          %v1034 = vrot.slane %v947, 4
          %v1035 = vsel %vm711, %v955, %v1034
          %v1037 = vunpack.c.l.s4 1983009808
          %v1038 = vunpack.c.0.s8 %v1037
          %v1039 = vperm.slane %v1033, %v1038
          %v1041 = vunpack.c.l.s4 1983009808
          %v1042 = vunpack.c.0.s8 %v1041
          %v1043 = vperm.slane %v1035, %v1042
          %v1044 = vrot.slane %v1039, 4
          %v1045 = vsel %vm711, %v1044, %v1027
          %v1046 = vrot.slane %v1027, 4
          %v1047 = vsel %vm711, %v1039, %v1046
          %v1049 = vunpack.c.l.s4 1934713408
          %v1050 = vunpack.c.0.s8 %v1049
          %v1051 = vperm.slane %v1045, %v1050
          %v1053 = vunpack.c.l.s4 1934713408
          %v1054 = vunpack.c.0.s8 %v1053
          %v1055 = vperm.slane %v1047, %v1054
          %v1056 = vrot.slane %v1043, 4
          %v1057 = vsel %vm711, %v1056, %v1031
          %v1058 = vrot.slane %v1031, 4
          %v1059 = vsel %vm711, %v1043, %v1058
          %v1061 = vunpack.c.l.s4 1934713408
          %v1062 = vunpack.c.0.s8 %v1061
          %v1063 = vperm.slane %v1057, %v1062
          %v1065 = vunpack.c.l.s4 1934713408
          %v1066 = vunpack.c.0.s8 %v1065
          %v1067 = vperm.slane %v1059, %v1066
          %v1068 = vrot.slane %v1051, 4
          %v1069 = vsel %vm711, 0.0, %v1068
          %v1070 = vrot.slane %v1055, 4
          %v1071 = vsel %vm711, 0.0, %v1070
          %v1072 = vrot.slane %v1063, 4
          %v1073 = vsel %vm711, 0.0, %v1072
          %v1074 = vrot.slane %v1067, 4
          %v1075 = vsel %vm711, 0.0, %v1074
          %v1076 = vsel %vm711, %v1014, %v995
          %v1078 = vunpack.c.l.s4 1983009808
          %v1079 = vunpack.c.0.s8 %v1078
          %v1080 = vperm.slane %v1076, %v1079
          %v1081 = vrot.slane %v1015, 4
          %v1082 = vsel %vm711, %v1081, %v1013
          %v1084 = vunpack.c.l.s4 1983009808
          %v1085 = vunpack.c.0.s8 %v1084
          %v1086 = vperm.slane %v1082, %v1085
          %v1087 = vsel %vm711, %v1018, %v1007
          %v1089 = vunpack.c.l.s4 1983009808
          %v1090 = vunpack.c.0.s8 %v1089
          %v1091 = vperm.slane %v1087, %v1090
          %v1092 = vrot.slane %v1019, 4
          %v1093 = vsel %vm711, %v1092, %v1017
          %v1095 = vunpack.c.l.s4 1983009808
          %v1096 = vunpack.c.0.s8 %v1095
          %v1097 = vperm.slane %v1093, %v1096
          %v1098 = vrot.slane %v1086, 4
          %v1099 = vsel %vm711, %v1098, %v1080
          %v1100 = vrot.slane %v1080, 4
          %v1101 = vsel %vm711, %v1086, %v1100
          %v1103 = vunpack.c.l.s4 1934713408
          %v1104 = vunpack.c.0.s8 %v1103
          %v1105 = vperm.slane %v1099, %v1104
          %v1107 = vunpack.c.l.s4 1934713408
          %v1108 = vunpack.c.0.s8 %v1107
          %v1109 = vperm.slane %v1101, %v1108
          %v1110 = vrot.slane %v1097, 4
          %v1111 = vsel %vm711, %v1110, %v1091
          %v1112 = vrot.slane %v1091, 4
          %v1113 = vsel %vm711, %v1097, %v1112
          %v1115 = vunpack.c.l.s4 1934713408
          %v1116 = vunpack.c.0.s8 %v1115
          %v1117 = vperm.slane %v1111, %v1116
          %v1119 = vunpack.c.l.s4 1934713408
          %v1120 = vunpack.c.0.s8 %v1119
          %v1121 = vperm.slane %v1113, %v1120
          %v1122 = vrot.slane %v1117, 4
          %v1123 = vsel %vm711, %v1122, %v1105
          %v1124 = vrot.slane %v1105, 4
          %v1125 = vsel %vm711, %v1117, %v1124
          %v1126 = vrot.slane %v1121, 4
          %v1127 = vsel %vm711, %v1126, %v1109
          %v1128 = vrot.slane %v1109, 4
          %v1129 = vsel %vm711, %v1121, %v1128
          %v1130 = vsel %vm711, %v1070, %v1051
          %v1132 = vunpack.c.l.s4 1983009808
          %v1133 = vunpack.c.0.s8 %v1132
          %v1134 = vperm.slane %v1130, %v1133
          %v1135 = vrot.slane %v1071, 4
          %v1136 = vsel %vm711, %v1135, %v1069
          %v1138 = vunpack.c.l.s4 1983009808
          %v1139 = vunpack.c.0.s8 %v1138
          %v1140 = vperm.slane %v1136, %v1139
          %v1141 = vsel %vm711, %v1074, %v1063
          %v1143 = vunpack.c.l.s4 1983009808
          %v1144 = vunpack.c.0.s8 %v1143
          %v1145 = vperm.slane %v1141, %v1144
          %v1146 = vrot.slane %v1075, 4
          %v1147 = vsel %vm711, %v1146, %v1073
          %v1149 = vunpack.c.l.s4 1983009808
          %v1150 = vunpack.c.0.s8 %v1149
          %v1151 = vperm.slane %v1147, %v1150
          %v1152 = vrot.slane %v1140, 4
          %v1153 = vsel %vm711, %v1152, %v1134
          %v1154 = vrot.slane %v1134, 4
          %v1155 = vsel %vm711, %v1140, %v1154
          %v1157 = vunpack.c.l.s4 1934713408
          %v1158 = vunpack.c.0.s8 %v1157
          %v1159 = vperm.slane %v1153, %v1158
          %v1161 = vunpack.c.l.s4 1934713408
          %v1162 = vunpack.c.0.s8 %v1161
          %v1163 = vperm.slane %v1155, %v1162
          %v1164 = vrot.slane %v1151, 4
          %v1165 = vsel %vm711, %v1164, %v1145
          %v1166 = vrot.slane %v1145, 4
          %v1167 = vsel %vm711, %v1151, %v1166
          %v1169 = vunpack.c.l.s4 1934713408
          %v1170 = vunpack.c.0.s8 %v1169
          %v1171 = vperm.slane %v1165, %v1170
          %v1173 = vunpack.c.l.s4 1934713408
          %v1174 = vunpack.c.0.s8 %v1173
          %v1175 = vperm.slane %v1167, %v1174
          %v1176 = vrot.slane %v1171, 4
          %v1177 = vsel %vm711, %v1176, %v1159
          %v1178 = vrot.slane %v1159, 4
          %v1179 = vsel %vm711, %v1171, %v1178
          %v1180 = vrot.slane %v1175, 4
          %v1181 = vsel %vm711, %v1180, %v1163
          %v1182 = vrot.slane %v1163, 4
          %v1183 = vsel %vm711, %v1175, %v1182
          %1184 = vst.msk [vmem:[#allocation3] sm:$0xff] %vm931, %v1123
          %1185 = vst.msk [vmem:[#allocation3 + $0x8] sm:$0xff] %vm931, %v1177
          %1186 = vst.msk [vmem:[#allocation3 + $0x10] sm:$0xff] %vm931, %v1125
          %1187 = vst.msk [vmem:[#allocation3 + $0x18] sm:$0xff] %vm931, %v1179
          %1188 = vst.msk [vmem:[#allocation3 + $0x20] sm:$0xff] %vm931, %v1127
          %1189 = vst.msk [vmem:[#allocation3 + $0x28] sm:$0xff] %vm931, %v1181
          %1190 = vst.msk [vmem:[#allocation3 + $0x30] sm:$0xff] %vm931, %v1129
          %1191 = vst.msk [vmem:[#allocation3 + $0x38] sm:$0xff] %vm931, %v1183
          %1194 = vrot.lane.b32.xlu0 %v685, 112
          %v1195 = vpop.permute.xlu0 %1194
          %1196 = vrot.lane.b32.xlu0 %v688, 112
          %v1197 = vpop.permute.xlu0 %1196
          %1200 = vrot.lane.b32.xlu0 %v685, 96
          %v1201 = vpop.permute.xlu0 %1200
          %1202 = vrot.lane.b32.xlu0 %v688, 96
          %v1203 = vpop.permute.xlu0 %1202
          %1206 = vrot.lane.b32.xlu0 %v685, 80
          %v1207 = vpop.permute.xlu0 %1206
          %1208 = vrot.lane.b32.xlu0 %v688, 80
          %v1209 = vpop.permute.xlu0 %1208
          %v1212 = vrot.slane %v1201, 4
          %v1213 = vsel %vm711, %v1212, %v685
          %v1214 = vrot.slane %v685, 4
          %v1215 = vsel %vm711, %v1201, %v1214
          %v1217 = vunpack.c.l.s4 1983009808
          %v1218 = vunpack.c.0.s8 %v1217
          %v1219 = vperm.slane %v1213, %v1218
          %v1221 = vunpack.c.l.s4 1983009808
          %v1222 = vunpack.c.0.s8 %v1221
          %v1223 = vperm.slane %v1215, %v1222
          %v1224 = vrot.slane %v1207, 4
          %v1225 = vsel %vm711, %v1224, %v1195
          %v1226 = vrot.slane %v1195, 4
          %v1227 = vsel %vm711, %v1207, %v1226
          %v1229 = vunpack.c.l.s4 1983009808
          %v1230 = vunpack.c.0.s8 %v1229
          %v1231 = vperm.slane %v1225, %v1230
          %v1233 = vunpack.c.l.s4 1983009808
          %v1234 = vunpack.c.0.s8 %v1233
          %v1235 = vperm.slane %v1227, %v1234
          %v1236 = vrot.slane %v1231, 4
          %v1237 = vsel %vm711, %v1236, %v1219
          %v1238 = vrot.slane %v1219, 4
          %v1239 = vsel %vm711, %v1231, %v1238
          %v1241 = vunpack.c.l.s4 1934713408
          %v1242 = vunpack.c.0.s8 %v1241
          %v1243 = vperm.slane %v1237, %v1242
          %v1245 = vunpack.c.l.s4 1934713408
          %v1246 = vunpack.c.0.s8 %v1245
          %v1247 = vperm.slane %v1239, %v1246
          %v1248 = vrot.slane %v1235, 4
          %v1249 = vsel %vm711, %v1248, %v1223
          %v1250 = vrot.slane %v1223, 4
          %v1251 = vsel %vm711, %v1235, %v1250
          %v1253 = vunpack.c.l.s4 1934713408
          %v1254 = vunpack.c.0.s8 %v1253
          %v1255 = vperm.slane %v1249, %v1254
          %v1257 = vunpack.c.l.s4 1934713408
          %v1258 = vunpack.c.0.s8 %v1257
          %v1259 = vperm.slane %v1251, %v1258
          %v1260 = vrot.slane %v1243, 4
          %v1261 = vsel %vm711, 0.0, %v1260
          %v1262 = vrot.slane %v1247, 4
          %v1263 = vsel %vm711, 0.0, %v1262
          %v1264 = vrot.slane %v1255, 4
          %v1265 = vsel %vm711, 0.0, %v1264
          %v1266 = vrot.slane %v1259, 4
          %v1267 = vsel %vm711, 0.0, %v1266
          %v1268 = vrot.slane %v1203, 4
          %v1269 = vsel %vm711, %v1268, %v688
          %v1270 = vrot.slane %v688, 4
          %v1271 = vsel %vm711, %v1203, %v1270
          %v1273 = vunpack.c.l.s4 1983009808
          %v1274 = vunpack.c.0.s8 %v1273
          %v1275 = vperm.slane %v1269, %v1274
          %v1277 = vunpack.c.l.s4 1983009808
          %v1278 = vunpack.c.0.s8 %v1277
          %v1279 = vperm.slane %v1271, %v1278
          %v1280 = vrot.slane %v1209, 4
          %v1281 = vsel %vm711, %v1280, %v1197
          %v1282 = vrot.slane %v1197, 4
          %v1283 = vsel %vm711, %v1209, %v1282
          %v1285 = vunpack.c.l.s4 1983009808
          %v1286 = vunpack.c.0.s8 %v1285
          %v1287 = vperm.slane %v1281, %v1286
          %v1289 = vunpack.c.l.s4 1983009808
          %v1290 = vunpack.c.0.s8 %v1289
          %v1291 = vperm.slane %v1283, %v1290
          %v1292 = vrot.slane %v1287, 4
          %v1293 = vsel %vm711, %v1292, %v1275
          %v1294 = vrot.slane %v1275, 4
          %v1295 = vsel %vm711, %v1287, %v1294
          %v1297 = vunpack.c.l.s4 1934713408
          %v1298 = vunpack.c.0.s8 %v1297
          %v1299 = vperm.slane %v1293, %v1298
          %v1301 = vunpack.c.l.s4 1934713408
          %v1302 = vunpack.c.0.s8 %v1301
          %v1303 = vperm.slane %v1295, %v1302
          %v1304 = vrot.slane %v1291, 4
          %v1305 = vsel %vm711, %v1304, %v1279
          %v1306 = vrot.slane %v1279, 4
          %v1307 = vsel %vm711, %v1291, %v1306
          %v1309 = vunpack.c.l.s4 1934713408
          %v1310 = vunpack.c.0.s8 %v1309
          %v1311 = vperm.slane %v1305, %v1310
          %v1313 = vunpack.c.l.s4 1934713408
          %v1314 = vunpack.c.0.s8 %v1313
          %v1315 = vperm.slane %v1307, %v1314
          %v1316 = vrot.slane %v1299, 4
          %v1317 = vsel %vm711, 0.0, %v1316
          %v1318 = vrot.slane %v1303, 4
          %v1319 = vsel %vm711, 0.0, %v1318
          %v1320 = vrot.slane %v1311, 4
          %v1321 = vsel %vm711, 0.0, %v1320
          %v1322 = vrot.slane %v1315, 4
          %v1323 = vsel %vm711, 0.0, %v1322
          %v1324 = vsel %vm711, %v1262, %v1243
          %v1326 = vunpack.c.l.s4 1983009808
          %v1327 = vunpack.c.0.s8 %v1326
          %v1328 = vperm.slane %v1324, %v1327
          %v1329 = vrot.slane %v1263, 4
          %v1330 = vsel %vm711, %v1329, %v1261
          %v1332 = vunpack.c.l.s4 1983009808
          %v1333 = vunpack.c.0.s8 %v1332
          %v1334 = vperm.slane %v1330, %v1333
          %v1335 = vsel %vm711, %v1266, %v1255
          %v1337 = vunpack.c.l.s4 1983009808
          %v1338 = vunpack.c.0.s8 %v1337
          %v1339 = vperm.slane %v1335, %v1338
          %v1340 = vrot.slane %v1267, 4
          %v1341 = vsel %vm711, %v1340, %v1265
          %v1343 = vunpack.c.l.s4 1983009808
          %v1344 = vunpack.c.0.s8 %v1343
          %v1345 = vperm.slane %v1341, %v1344
          %v1346 = vrot.slane %v1334, 4
          %v1347 = vsel %vm711, %v1346, %v1328
          %v1348 = vrot.slane %v1328, 4
          %v1349 = vsel %vm711, %v1334, %v1348
          %v1351 = vunpack.c.l.s4 1934713408
          %v1352 = vunpack.c.0.s8 %v1351
          %v1353 = vperm.slane %v1347, %v1352
          %v1355 = vunpack.c.l.s4 1934713408
          %v1356 = vunpack.c.0.s8 %v1355
          %v1357 = vperm.slane %v1349, %v1356
          %v1358 = vrot.slane %v1345, 4
          %v1359 = vsel %vm711, %v1358, %v1339
          %v1360 = vrot.slane %v1339, 4
          %v1361 = vsel %vm711, %v1345, %v1360
          %v1363 = vunpack.c.l.s4 1934713408
          %v1364 = vunpack.c.0.s8 %v1363
          %v1365 = vperm.slane %v1359, %v1364
          %v1367 = vunpack.c.l.s4 1934713408
          %v1368 = vunpack.c.0.s8 %v1367
          %v1369 = vperm.slane %v1361, %v1368
          %v1370 = vrot.slane %v1365, 4
          %v1371 = vsel %vm711, %v1370, %v1353
          %v1372 = vrot.slane %v1353, 4
          %v1373 = vsel %vm711, %v1365, %v1372
          %v1374 = vrot.slane %v1369, 4
          %v1375 = vsel %vm711, %v1374, %v1357
          %v1376 = vrot.slane %v1357, 4
          %v1377 = vsel %vm711, %v1369, %v1376
          %v1378 = vsel %vm711, %v1318, %v1299
          %v1380 = vunpack.c.l.s4 1983009808
          %v1381 = vunpack.c.0.s8 %v1380
          %v1382 = vperm.slane %v1378, %v1381
          %v1383 = vrot.slane %v1319, 4
          %v1384 = vsel %vm711, %v1383, %v1317
          %v1386 = vunpack.c.l.s4 1983009808
          %v1387 = vunpack.c.0.s8 %v1386
          %v1388 = vperm.slane %v1384, %v1387
          %v1389 = vsel %vm711, %v1322, %v1311
          %v1391 = vunpack.c.l.s4 1983009808
          %v1392 = vunpack.c.0.s8 %v1391
          %v1393 = vperm.slane %v1389, %v1392
          %v1394 = vrot.slane %v1323, 4
          %v1395 = vsel %vm711, %v1394, %v1321
          %v1397 = vunpack.c.l.s4 1983009808
          %v1398 = vunpack.c.0.s8 %v1397
          %v1399 = vperm.slane %v1395, %v1398
          %v1400 = vrot.slane %v1388, 4
          %v1401 = vsel %vm711, %v1400, %v1382
          %v1402 = vrot.slane %v1382, 4
          %v1403 = vsel %vm711, %v1388, %v1402
          %v1405 = vunpack.c.l.s4 1934713408
          %v1406 = vunpack.c.0.s8 %v1405
          %v1407 = vperm.slane %v1401, %v1406
          %v1409 = vunpack.c.l.s4 1934713408
          %v1410 = vunpack.c.0.s8 %v1409
          %v1411 = vperm.slane %v1403, %v1410
          %v1412 = vrot.slane %v1399, 4
          %v1413 = vsel %vm711, %v1412, %v1393
          %v1414 = vrot.slane %v1393, 4
          %v1415 = vsel %vm711, %v1399, %v1414
          %v1417 = vunpack.c.l.s4 1934713408
          %v1418 = vunpack.c.0.s8 %v1417
          %v1419 = vperm.slane %v1413, %v1418
          %v1421 = vunpack.c.l.s4 1934713408
          %v1422 = vunpack.c.0.s8 %v1421
          %v1423 = vperm.slane %v1415, %v1422
          %v1424 = vrot.slane %v1419, 4
          %v1425 = vsel %vm711, %v1424, %v1407
          %v1426 = vrot.slane %v1407, 4
          %v1427 = vsel %vm711, %v1419, %v1426
          %v1428 = vrot.slane %v1423, 4
          %v1429 = vsel %vm711, %v1428, %v1411
          %v1430 = vrot.slane %v1411, 4
          %v1431 = vsel %vm711, %v1423, %v1430
          %s1432 = scalar_lea.vmem [#allocation3], 64
          %1433 = vst.msk [vmem:[%s1432] sm:$0xff] %vm931, %v1371
          %1434 = vst.msk [vmem:[%s1432 + $0x8] sm:$0xff] %vm931, %v1425
          %1435 = vst.msk [vmem:[%s1432 + $0x10] sm:$0xff] %vm931, %v1373
          %1436 = vst.msk [vmem:[%s1432 + $0x18] sm:$0xff] %vm931, %v1427
          %1437 = vst.msk [vmem:[%s1432 + $0x20] sm:$0xff] %vm931, %v1375
          %1438 = vst.msk [vmem:[%s1432 + $0x28] sm:$0xff] %vm931, %v1429
          %1439 = vst.msk [vmem:[%s1432 + $0x30] sm:$0xff] %vm931, %v1377
          %1440 = vst.msk [vmem:[%s1432 + $0x38] sm:$0xff] %vm931, %v1431
        $region88: #{tpu_custom_call.1} parent=71 // pred_fallthru
          _
        %s1441 = smul.u32 %s41, 8
        %s1442 = scalar_lea.vmem [#allocation2], %s1441
        %v1443 = vld [vmem:[%s1442] sm:$0xff]
        %v1444 = vld [vmem:[%s1442 + $0x10] sm:$0xff]
        %v1445 = vld [vmem:[%s1442 + $0x20] sm:$0xff]
        %v1446 = vld [vmem:[%s1442 + $0x30] sm:$0xff]
        %v1447 = vld [vmem:[#allocation3] sm:$0xff]
        %v1448 = vld [vmem:[#allocation3 + $0x8] sm:$0xff]
        %v1449 = vld [vmem:[#allocation3 + $0x10] sm:$0xff]
        %v1450 = vld [vmem:[#allocation3 + $0x18] sm:$0xff]
        %v1451 = vld [vmem:[#allocation3 + $0x20] sm:$0xff]
        %v1452 = vld [vmem:[#allocation3 + $0x28] sm:$0xff]
        %v1453 = vld [vmem:[#allocation3 + $0x30] sm:$0xff]
        %v1454 = vld [vmem:[#allocation3 + $0x38] sm:$0xff]
        %s1455 = scalar_lea.vmem [#allocation3], 64
        %v1456 = vld [vmem:[%s1455] sm:$0xff]
        %v1457 = vld [vmem:[%s1455 + $0x8] sm:$0xff]
        %v1458 = vld [vmem:[%s1455 + $0x10] sm:$0xff]
        %v1459 = vld [vmem:[%s1455 + $0x18] sm:$0xff]
        %v1460 = vld [vmem:[%s1455 + $0x20] sm:$0xff]
        %v1461 = vld [vmem:[%s1455 + $0x28] sm:$0xff]
        %v1462 = vld [vmem:[%s1455 + $0x30] sm:$0xff]
        %v1463 = vld [vmem:[%s1455 + $0x38] sm:$0xff]
        %vm1464 = vcmask 130048
        %v1466 = vsel %vm1464, %v1443, 0
        %v1469 = vsel %vm1464, %v1447, 0
        %v1472 = vsel %vm1464, %v1448, 0
        %1474 = vmatpush.xpose.msra.mxu0 0.0
        %1475 = vmatpush.xpose.msra.mxu0 0.0
        %1476 = vmatpush.xpose.msra.mxu0 0.0
        %1477 = vmatpush.xpose.msra.mxu0 0.0
        %1478 = vmatpush.xpose.msra.mxu0 0.0
        %1479 = vmatpush.xpose.msra.mxu0 0.0
        %1480 = vmatpush.xpose.msra.mxu0 0.0
        %1481 = vmatpush.xpose.msra.mxu0 0.0
        %1482 = vmatpush.xpose.msra.mxu0 0.0
        %1483 = vmatpush.xpose.msra.mxu0 0.0
        %1484 = vmatpush.xpose.msra.mxu0 0.0
        %1485 = vmatpush.xpose.msra.mxu0 0.0
        %1486 = vmatpush.xpose.msra.mxu0 0.0
        %1487 = vmatpush.xpose.msra.mxu0 0.0
        %1488 = vmatpush.xpose.msra.mxu0 %v1472
        %1489 = vmatpush.xpose.msra.mxu0 %v1469
        %1490 = vmatmul.f32.gmra.mxu0 %v1466
        %v1491 = vpop.f32.mrf.mxu0
        %v1492 = vadd.f32 0.0, %v1491
        %1493 = vdwg.mxu0
        %v1495 = vsel %vm1464, %v1444, 0
        %v1498 = vsel %vm1464, %v1449, 0
        %v1501 = vsel %vm1464, %v1450, 0
        %1503 = vmatpush.xpose.msra.mxu0 0.0
        %1504 = vmatpush.xpose.msra.mxu0 0.0
        %1505 = vmatpush.xpose.msra.mxu0 0.0
        %1506 = vmatpush.xpose.msra.mxu0 0.0
        %1507 = vmatpush.xpose.msra.mxu0 0.0
        %1508 = vmatpush.xpose.msra.mxu0 0.0
        %1509 = vmatpush.xpose.msra.mxu0 0.0
        %1510 = vmatpush.xpose.msra.mxu0 0.0
        %1511 = vmatpush.xpose.msra.mxu0 0.0
        %1512 = vmatpush.xpose.msra.mxu0 0.0
        %1513 = vmatpush.xpose.msra.mxu0 0.0
        %1514 = vmatpush.xpose.msra.mxu0 0.0
        %1515 = vmatpush.xpose.msra.mxu0 0.0
        %1516 = vmatpush.xpose.msra.mxu0 0.0
        %1517 = vmatpush.xpose.msra.mxu0 %v1501
        %1518 = vmatpush.xpose.msra.mxu0 %v1498
        %1519 = vmatmul.f32.gmra.mxu0 %v1495
        %v1520 = vpop.f32.mrf.mxu0
        %v1521 = vadd.f32 0.0, %v1520
        %1522 = vdwg.mxu0
        %v1524 = vsel %vm1464, %v1445, 0
        %v1527 = vsel %vm1464, %v1451, 0
        %v1530 = vsel %vm1464, %v1452, 0
        %1532 = vmatpush.xpose.msra.mxu0 0.0
        %1533 = vmatpush.xpose.msra.mxu0 0.0
        %1534 = vmatpush.xpose.msra.mxu0 0.0
        %1535 = vmatpush.xpose.msra.mxu0 0.0
        %1536 = vmatpush.xpose.msra.mxu0 0.0
        %1537 = vmatpush.xpose.msra.mxu0 0.0
        %1538 = vmatpush.xpose.msra.mxu0 0.0
        %1539 = vmatpush.xpose.msra.mxu0 0.0
        %1540 = vmatpush.xpose.msra.mxu0 0.0
        %1541 = vmatpush.xpose.msra.mxu0 0.0
        %1542 = vmatpush.xpose.msra.mxu0 0.0
        %1543 = vmatpush.xpose.msra.mxu0 0.0
        %1544 = vmatpush.xpose.msra.mxu0 0.0
        %1545 = vmatpush.xpose.msra.mxu0 0.0
        %1546 = vmatpush.xpose.msra.mxu0 %v1530
        %1547 = vmatpush.xpose.msra.mxu0 %v1527
        %1548 = vmatmul.f32.gmra.mxu0 %v1524
        %v1549 = vpop.f32.mrf.mxu0
        %v1550 = vadd.f32 0.0, %v1549
        %1551 = vdwg.mxu0
        %v1553 = vsel %vm1464, %v1446, 0
        %v1556 = vsel %vm1464, %v1453, 0
        %v1559 = vsel %vm1464, %v1454, 0
        %1561 = vmatpush.xpose.msra.mxu0 0.0
        %1562 = vmatpush.xpose.msra.mxu0 0.0
        %1563 = vmatpush.xpose.msra.mxu0 0.0
        %1564 = vmatpush.xpose.msra.mxu0 0.0
        %1565 = vmatpush.xpose.msra.mxu0 0.0
        %1566 = vmatpush.xpose.msra.mxu0 0.0
        %1567 = vmatpush.xpose.msra.mxu0 0.0
        %1568 = vmatpush.xpose.msra.mxu0 0.0
        %1569 = vmatpush.xpose.msra.mxu0 0.0
        %1570 = vmatpush.xpose.msra.mxu0 0.0
        %1571 = vmatpush.xpose.msra.mxu0 0.0
        %1572 = vmatpush.xpose.msra.mxu0 0.0
        %1573 = vmatpush.xpose.msra.mxu0 0.0
        %1574 = vmatpush.xpose.msra.mxu0 0.0
        %1575 = vmatpush.xpose.msra.mxu0 %v1559
        %1576 = vmatpush.xpose.msra.mxu0 %v1556
        %1577 = vmatmul.f32.gmra.mxu0 %v1553
        %v1578 = vpop.f32.mrf.mxu0
        %v1579 = vadd.f32 0.0, %v1578
        %1580 = vdwg.mxu0
        %v1581 = vsel %vm1464, %v1492, -inf
        %1582 = vmax.xlane.f32.xlu0 %v1581
        %v1583 = vpop.xlane.xlu0 %1582
        %v1584 = vsel %vm1464, %v1521, -inf
        %1585 = vmax.xlane.f32.xlu0 %v1584
        %v1586 = vpop.xlane.xlu0 %1585
        %v1587 = vsel %vm1464, %v1550, -inf
        %1588 = vmax.xlane.f32.xlu0 %v1587
        %v1589 = vpop.xlane.xlu0 %1588
        %v1590 = vsel %vm1464, %v1579, -inf
        %1591 = vmax.xlane.f32.xlu0 %v1590
        %v1592 = vpop.xlane.xlu0 %1591
        %v1593 = vsub.f32 %v1492, %v1583
        %v1594 = vsub.f32 %v1521, %v1586
        %v1595 = vsub.f32 %v1550, %v1589
        %v1596 = vsub.f32 %v1579, %v1592
        %v1597 = vmul.f32 %v1593, 1.442695
        %v1598 = vpow.pop %v1597
        %v1599 = vmul.f32 %v1594, 1.442695
        %v1600 = vpow.pop %v1599
        %v1601 = vmul.f32 %v1595, 1.442695
        %v1602 = vpow.pop %v1601
        %v1603 = vmul.f32 %v1596, 1.442695
        %v1604 = vpow.pop %v1603
        %v1605 = vsel %vm1464, %v1598, 0.0
        %1606 = vadd.xlane.f32.xlu0 %v1605
        %v1607 = vpop.xlane.xlu0 %1606
        %v1608 = vsel %vm1464, %v1600, 0.0
        %1609 = vadd.xlane.f32.xlu0 %v1608
        %v1610 = vpop.xlane.xlu0 %1609
        %v1611 = vsel %vm1464, %v1602, 0.0
        %1612 = vadd.xlane.f32.xlu0 %v1611
        %v1613 = vpop.xlane.xlu0 %1612
        %v1614 = vsel %vm1464, %v1604, 0.0
        %1615 = vadd.xlane.f32.xlu0 %v1614
        %v1616 = vpop.xlane.xlu0 %1615
        %v1617 = vrcp.pop %v1607
        %v1618 = vrcp.pop %v1610
        %v1619 = vrcp.pop %v1613
        %v1620 = vrcp.pop %v1616
        %v1621 = vmul.f32 %v1607, %v1617
        %v1622 = vmul.f32 %v1610, %v1618
        %v1623 = vmul.f32 %v1613, %v1619
        %v1624 = vmul.f32 %v1616, %v1620
        %v1625 = vsub.f32 2.0, %v1621
        %v1626 = vsub.f32 2.0, %v1622
        %v1627 = vsub.f32 2.0, %v1623
        %v1628 = vsub.f32 2.0, %v1624
        %v1629 = vmul.f32 %v1617, %v1625
        %v1630 = vmul.f32 %v1618, %v1626
        %v1631 = vmul.f32 %v1619, %v1627
        %v1632 = vmul.f32 %v1620, %v1628
        %v1633 = vmul.f32 %v1598, %v1629
        %v1634 = vmul.f32 %v1600, %v1630
        %v1635 = vmul.f32 %v1602, %v1631
        %v1636 = vmul.f32 %v1604, %v1632
        %1637 = vst.msk [vmem:[%s545] sm:$0xff] %vm1464, %v1633
        %1638 = vst.msk [vmem:[%s545 + $0x8] sm:$0xff] %vm1464, %v1634
        %1639 = vst.msk [vmem:[%s545 + $0x10] sm:$0xff] %vm1464, %v1635
        %1640 = vst.msk [vmem:[%s545 + $0x18] sm:$0xff] %vm1464, %v1636
        %v1642 = vsel %vm1464, %v1633, 0
        %1644 = vmatpush.msra.mxu0 0.0
        %1645 = vmatpush.msra.mxu0 0.0
        %1646 = vmatpush.msra.mxu0 0.0
        %1647 = vmatpush.msra.mxu0 0.0
        %1648 = vmatpush.msra.mxu0 0.0
        %1649 = vmatpush.msra.mxu0 0.0
        %1650 = vmatpush.msra.mxu0 0.0
        %1651 = vmatpush.msra.mxu0 0.0
        %1652 = vmatpush.msra.mxu0 0.0
        %1653 = vmatpush.msra.mxu0 0.0
        %1654 = vmatpush.msra.mxu0 0.0
        %1655 = vmatpush.msra.mxu0 0.0
        %1656 = vmatpush.msra.mxu0 0.0
        %1657 = vmatpush.msra.mxu0 0.0
        %1658 = vmatpush.msra.mxu0 %v1457
        %1659 = vmatpush.msra.mxu0 %v1456
        %1660 = vmatmul.f32.gmra.mxu0 %v1642
        %v1661 = vpop.f32.mrf.mxu0
        %v1662 = vadd.f32 0.0, %v1661
        %1663 = vdwg.mxu0
        %v1665 = vsel %vm1464, %v1634, 0
        %1667 = vmatpush.msra.mxu0 0.0
        %1668 = vmatpush.msra.mxu0 0.0
        %1669 = vmatpush.msra.mxu0 0.0
        %1670 = vmatpush.msra.mxu0 0.0
        %1671 = vmatpush.msra.mxu0 0.0
        %1672 = vmatpush.msra.mxu0 0.0
        %1673 = vmatpush.msra.mxu0 0.0
        %1674 = vmatpush.msra.mxu0 0.0
        %1675 = vmatpush.msra.mxu0 0.0
        %1676 = vmatpush.msra.mxu0 0.0
        %1677 = vmatpush.msra.mxu0 0.0
        %1678 = vmatpush.msra.mxu0 0.0
        %1679 = vmatpush.msra.mxu0 0.0
        %1680 = vmatpush.msra.mxu0 0.0
        %1681 = vmatpush.msra.mxu0 %v1459
        %1682 = vmatpush.msra.mxu0 %v1458
        %1683 = vmatmul.f32.gmra.mxu0 %v1665
        %v1684 = vpop.f32.mrf.mxu0
        %v1685 = vadd.f32 0.0, %v1684
        %1686 = vdwg.mxu0
        %v1688 = vsel %vm1464, %v1635, 0
        %1690 = vmatpush.msra.mxu0 0.0
        %1691 = vmatpush.msra.mxu0 0.0
        %1692 = vmatpush.msra.mxu0 0.0
        %1693 = vmatpush.msra.mxu0 0.0
        %1694 = vmatpush.msra.mxu0 0.0
        %1695 = vmatpush.msra.mxu0 0.0
        %1696 = vmatpush.msra.mxu0 0.0
        %1697 = vmatpush.msra.mxu0 0.0
        %1698 = vmatpush.msra.mxu0 0.0
        %1699 = vmatpush.msra.mxu0 0.0
        %1700 = vmatpush.msra.mxu0 0.0
        %1701 = vmatpush.msra.mxu0 0.0
        %1702 = vmatpush.msra.mxu0 0.0
        %1703 = vmatpush.msra.mxu0 0.0
        %1704 = vmatpush.msra.mxu0 %v1461
        %1705 = vmatpush.msra.mxu0 %v1460
        %1706 = vmatmul.f32.gmra.mxu0 %v1688
        %v1707 = vpop.f32.mrf.mxu0
        %v1708 = vadd.f32 0.0, %v1707
        %1709 = vdwg.mxu0
        %v1711 = vsel %vm1464, %v1636, 0
        %1713 = vmatpush.msra.mxu0 0.0
        %1714 = vmatpush.msra.mxu0 0.0
        %1715 = vmatpush.msra.mxu0 0.0
        %1716 = vmatpush.msra.mxu0 0.0
        %1717 = vmatpush.msra.mxu0 0.0
        %1718 = vmatpush.msra.mxu0 0.0
        %1719 = vmatpush.msra.mxu0 0.0
        %1720 = vmatpush.msra.mxu0 0.0
        %1721 = vmatpush.msra.mxu0 0.0
        %1722 = vmatpush.msra.mxu0 0.0
        %1723 = vmatpush.msra.mxu0 0.0
        %1724 = vmatpush.msra.mxu0 0.0
        %1725 = vmatpush.msra.mxu0 0.0
        %1726 = vmatpush.msra.mxu0 0.0
        %1727 = vmatpush.msra.mxu0 %v1463
        %1728 = vmatpush.msra.mxu0 %v1462
        %1729 = vmatmul.f32.gmra.mxu0 %v1711
        %v1730 = vpop.f32.mrf.mxu0
        %v1731 = vadd.f32 0.0, %v1730
        %1732 = vdwg.mxu0
        %v1733 = vrot.slane %v1708, 4
        %vm1734 = vcmask 1047556
        %v1735 = vsel %vm1734, %v1733, %v1662
        %v1736 = vrot.slane %v1662, 4
        %v1737 = vsel %vm1734, %v1708, %v1736
        %v1739 = vunpack.c.l.s4 1983009808
        %v1740 = vunpack.c.0.s8 %v1739
        %v1741 = vperm.slane %v1735, %v1740
        %v1743 = vunpack.c.l.s4 1983009808
        %v1744 = vunpack.c.0.s8 %v1743
        %v1745 = vperm.slane %v1737, %v1744
        %v1746 = vrot.slane %v1731, 4
        %v1747 = vsel %vm1734, %v1746, %v1685
        %v1748 = vrot.slane %v1685, 4
        %v1749 = vsel %vm1734, %v1731, %v1748
        %v1751 = vunpack.c.l.s4 1983009808
        %v1752 = vunpack.c.0.s8 %v1751
        %v1753 = vperm.slane %v1747, %v1752
        %v1755 = vunpack.c.l.s4 1983009808
        %v1756 = vunpack.c.0.s8 %v1755
        %v1757 = vperm.slane %v1749, %v1756
        %v1758 = vrot.slane %v1753, 4
        %v1759 = vsel %vm1734, %v1758, %v1741
        %v1760 = vrot.slane %v1741, 4
        %v1761 = vsel %vm1734, %v1753, %v1760
        %v1763 = vunpack.c.l.s4 1934713408
        %v1764 = vunpack.c.0.s8 %v1763
        %v1765 = vperm.slane %v1759, %v1764
        %v1767 = vunpack.c.l.s4 1934713408
        %v1768 = vunpack.c.0.s8 %v1767
        %v1769 = vperm.slane %v1761, %v1768
        %v1770 = vrot.slane %v1757, 4
        %v1771 = vsel %vm1734, %v1770, %v1745
        %v1772 = vrot.slane %v1745, 4
        %v1773 = vsel %vm1734, %v1757, %v1772
        %v1775 = vunpack.c.l.s4 1934713408
        %v1776 = vunpack.c.0.s8 %v1775
        %v1777 = vperm.slane %v1771, %v1776
        %v1779 = vunpack.c.l.s4 1934713408
        %v1780 = vunpack.c.0.s8 %v1779
        %v1781 = vperm.slane %v1773, %v1780
        %v1782 = vrot.slane %v1765, 4
        %v1783 = vsel %vm1734, 0.0, %v1782
        %v1784 = vrot.slane %v1769, 4
        %v1785 = vsel %vm1734, 0.0, %v1784
        %v1786 = vrot.slane %v1777, 4
        %v1787 = vsel %vm1734, 0.0, %v1786
        %v1788 = vrot.slane %v1781, 4
        %v1789 = vsel %vm1734, 0.0, %v1788
        %v1790 = vsel %vm1734, %v1784, %v1765
        %v1792 = vunpack.c.l.s4 1983009808
        %v1793 = vunpack.c.0.s8 %v1792
        %v1794 = vperm.slane %v1790, %v1793
        %v1795 = vrot.slane %v1785, 4
        %v1796 = vsel %vm1734, %v1795, %v1783
        %v1798 = vunpack.c.l.s4 1983009808
        %v1799 = vunpack.c.0.s8 %v1798
        %v1800 = vperm.slane %v1796, %v1799
        %v1801 = vsel %vm1734, %v1788, %v1777
        %v1803 = vunpack.c.l.s4 1983009808
        %v1804 = vunpack.c.0.s8 %v1803
        %v1805 = vperm.slane %v1801, %v1804
        %v1806 = vrot.slane %v1789, 4
        %v1807 = vsel %vm1734, %v1806, %v1787
        %v1809 = vunpack.c.l.s4 1983009808
        %v1810 = vunpack.c.0.s8 %v1809
        %v1811 = vperm.slane %v1807, %v1810
        %v1812 = vrot.slane %v1800, 4
        %v1813 = vsel %vm1734, %v1812, %v1794
        %v1814 = vrot.slane %v1794, 4
        %v1815 = vsel %vm1734, %v1800, %v1814
        %v1817 = vunpack.c.l.s4 1934713408
        %v1818 = vunpack.c.0.s8 %v1817
        %v1819 = vperm.slane %v1813, %v1818
        %v1821 = vunpack.c.l.s4 1934713408
        %v1822 = vunpack.c.0.s8 %v1821
        %v1823 = vperm.slane %v1815, %v1822
        %v1824 = vrot.slane %v1811, 4
        %v1825 = vsel %vm1734, %v1824, %v1805
        %v1826 = vrot.slane %v1805, 4
        %v1827 = vsel %vm1734, %v1811, %v1826
        %v1829 = vunpack.c.l.s4 1934713408
        %v1830 = vunpack.c.0.s8 %v1829
        %v1831 = vperm.slane %v1825, %v1830
        %v1833 = vunpack.c.l.s4 1934713408
        %v1834 = vunpack.c.0.s8 %v1833
        %v1835 = vperm.slane %v1827, %v1834
        %v1836 = vrot.slane %v1831, 4
        %v1837 = vsel %vm1734, %v1836, %v1819
        %v1838 = vrot.slane %v1819, 4
        %v1839 = vsel %vm1734, %v1831, %v1838
        %v1840 = vrot.slane %v1835, 4
        %v1841 = vsel %vm1734, %v1840, %v1823
        %v1842 = vrot.slane %v1823, 4
        %v1843 = vsel %vm1734, %v1835, %v1842
        %1845 = vrot.lane.b32.xlu0 %v1839, 16
        %v1846 = vpop.permute.xlu0 %1845
        %1849 = vrot.lane.b32.xlu0 %v1841, 32
        %v1850 = vpop.permute.xlu0 %1849
        %1853 = vrot.lane.b32.xlu0 %v1843, 48
        %v1854 = vpop.permute.xlu0 %1853
        %v1856 = vsel %vm1464, %v1837, %v1846
        %vm1857 = vcmask 261120
        %v1858 = vsel %vm1857, %v1856, %v1850
        %vm1859 = vcmask 392192
        %v1860 = vsel %vm1859, %v1858, %v1854
        %v1861 = vld [vmem:[%s3] sm:$0xff]
        %v1862 = vld [vmem:[%s3 + $0x8] sm:$0xff]
        %v1863 = vld [vmem:[%s3 + $0x10] sm:$0xff]
        %v1864 = vld [vmem:[%s3 + $0x18] sm:$0xff]
        %v1865 = vld [vmem:[%s3 + $0x20] sm:$0xff]
        %v1866 = vld [vmem:[%s3 + $0x28] sm:$0xff]
        %v1867 = vld [vmem:[%s3 + $0x30] sm:$0xff]
        %v1868 = vld [vmem:[%s3 + $0x38] sm:$0xff]
        %v1869 = vld [vmem:[%s4] sm:$0x1]
        %v1871 = vperm.slane %v1869, 0
        %vm1873 = vcmask 523264
        %v1875 = vsel %vm1873, %v1860, 0
        %1877 = vmatpush.msra.mxu0 0.0
        %1878 = vmatpush.msra.mxu0 0.0
        %1879 = vmatpush.msra.mxu0 0.0
        %1880 = vmatpush.msra.mxu0 0.0
        %1881 = vmatpush.msra.mxu0 0.0
        %1882 = vmatpush.msra.mxu0 0.0
        %1883 = vmatpush.msra.mxu0 0.0
        %1884 = vmatpush.msra.mxu0 0.0
        %1885 = vmatpush.msra.mxu0 %v1868
        %1886 = vmatpush.msra.mxu0 %v1867
        %1887 = vmatpush.msra.mxu0 %v1866
        %1888 = vmatpush.msra.mxu0 %v1865
        %1889 = vmatpush.msra.mxu0 %v1864
        %1890 = vmatpush.msra.mxu0 %v1863
        %1891 = vmatpush.msra.mxu0 %v1862
        %1892 = vmatpush.msra.mxu0 %v1861
        %1893 = vmatmul.f32.gmra.mxu0 %v1875
        %v1894 = vpop.f32.mrf.mxu0
        %v1895 = vadd.f32 %v1871, %v1894
        %1896 = vdwg.mxu0
        %s1897 = scalar_lea.vmem %s485, %s1441 [#allocation4]
        %v1898 = vld [vmem:[%s1897] sm:$0xff]
        %v1899 = vadd.f32 %v1898, %v1895
        %v1900 = vld [vmem:[%s7] sm:$0x1]
        %v1901 = vld [vmem:[%s8] sm:$0x1]
        %v1902 = vsel %vm1873, %v1899, 0.0
        %1903 = vadd.xlane.f32.xlu0 %v1902
        %v1904 = vpop.xlane.xlu0 %1903
        %v1905 = vrcp.pop 64.0
        %v1906 = vmul.f32 64.0, %v1905
        %v1907 = vsub.f32 1.0, %v1906
        %v1908 = vmul.f32 %v1905, %v1907
        %v1909 = vadd.f32 %v1905, %v1908
        %vm1910 = vweird.f32 %v1905
        %v1911 = vsel %vm1910, %v1905, %v1909
        %v1912 = vmul.f32 %v1904, %v1911
        %v1913 = vsub.f32 %v1899, %v1912
        %v1914 = vmul.f32 %v1913, %v1913
        %v1915 = vsel %vm1873, %v1914, 0.0
        %1916 = vadd.xlane.f32.xlu0 %v1915
        %v1917 = vpop.xlane.xlu0 %1916
        %v1918 = vmul.f32 %v1917, %v1911
        %v1919 = vadd.f32 %v1918, 1e-05
        %v1920 = vrsqrt.pop %v1919
        %v1921 = vmul.f32 %v1920, %v1919
        %v1922 = vmul.f32 %v1921, %v1920
        %v1923 = vmul.f32 0.5, %v1922
        %v1924 = vsub.f32 1.5, %v1923
        %v1925 = vmul.f32 %v1920, %v1924
        %vm1926 = vweird.f32 %v1919
        %vm1927 = vweird.f32 %v1920
        %vm1928 = vmor %vm1926, %vm1927
        %v1929 = vsel %vm1928, %v1920, %v1925
        %v1930 = vmul.f32 %v1913, %v1929
        %v1932 = vperm.slane %v1900, 0
        %v1934 = vmul.f32 %v1930, %v1932
        %v1936 = vperm.slane %v1901, 0
        %v1938 = vadd.f32 %v1934, %v1936
        %v1939 = vld [vmem:[#allocation9] sm:$0xff]
        %v1940 = vld [vmem:[#allocation9 + $0x8] sm:$0xff]
        %v1941 = vld [vmem:[#allocation9 + $0x10] sm:$0xff]
        %v1942 = vld [vmem:[#allocation9 + $0x18] sm:$0xff]
        %v1943 = vld [vmem:[#allocation9 + $0x20] sm:$0xff]
        %v1944 = vld [vmem:[#allocation9 + $0x28] sm:$0xff]
        %v1945 = vld [vmem:[#allocation9 + $0x30] sm:$0xff]
        %v1946 = vld [vmem:[#allocation9 + $0x38] sm:$0xff]
        %v1947 = vld [vmem:[%s10] sm:$0x1]
        %v1949 = vperm.slane %v1947, 0
        %v1952 = vsel %vm1873, %v1938, 0
        %1954 = vmatpush.msra.mxu0 0.0
        %1955 = vmatpush.msra.mxu0 0.0
        %1956 = vmatpush.msra.mxu0 0.0
        %1957 = vmatpush.msra.mxu0 0.0
        %1958 = vmatpush.msra.mxu0 0.0
        %1959 = vmatpush.msra.mxu0 0.0
        %1960 = vmatpush.msra.mxu0 0.0
        %1961 = vmatpush.msra.mxu0 0.0
        %1962 = vmatpush.msra.mxu0 %v1946
        %1963 = vmatpush.msra.mxu0 %v1945
        %1964 = vmatpush.msra.mxu0 %v1944
        %1965 = vmatpush.msra.mxu0 %v1943
        %1966 = vmatpush.msra.mxu0 %v1942
        %1967 = vmatpush.msra.mxu0 %v1941
        %1968 = vmatpush.msra.mxu0 %v1940
        %1969 = vmatpush.msra.mxu0 %v1939
        %1970 = vmatmul.f32.gmra.mxu0 %v1952
        %v1971 = vpop.f32.mrf.mxu0
        %v1972 = vadd.f32 %v1949, %v1971
        %1973 = vdwg.mxu0
        %v1974 = vmax.f32 %v1972, 0.0
        %v1975 = vld [vmem:[%s11] sm:$0xff]
        %v1976 = vld [vmem:[%s11 + $0x8] sm:$0xff]
        %v1977 = vld [vmem:[%s11 + $0x10] sm:$0xff]
        %v1978 = vld [vmem:[%s11 + $0x18] sm:$0xff]
        %v1979 = vld [vmem:[%s11 + $0x20] sm:$0xff]
        %v1980 = vld [vmem:[%s11 + $0x28] sm:$0xff]
        %v1981 = vld [vmem:[%s11 + $0x30] sm:$0xff]
        %v1982 = vld [vmem:[%s11 + $0x38] sm:$0xff]
        %v1983 = vld [vmem:[%s11 + $0x40] sm:$0xff]
        %v1984 = vld [vmem:[%s11 + $0x48] sm:$0xff]
        %v1985 = vld [vmem:[%s11 + $0x50] sm:$0xff]
        %v1986 = vld [vmem:[%s11 + $0x58] sm:$0xff]
        %v1987 = vld [vmem:[%s11 + $0x60] sm:$0xff]
        %v1988 = vld [vmem:[%s11 + $0x68] sm:$0xff]
        %v1989 = vld [vmem:[%s11 + $0x70] sm:$0xff]
        %v1990 = vld [vmem:[%s11 + $0x78] sm:$0xff]
        %v1991 = vld [vmem:[%s12] sm:$0x1]
        %v1993 = vperm.slane %v1991, 0
        %1995 = vmatpush.msra.mxu0 %v1990
        %1996 = vmatpush.msra.mxu0 %v1989
        %1997 = vmatpush.msra.mxu0 %v1988
        %1998 = vmatpush.msra.mxu0 %v1987
        %1999 = vmatpush.msra.mxu0 %v1986
        %2000 = vmatpush.msra.mxu0 %v1985
        %2001 = vmatpush.msra.mxu0 %v1984
        %2002 = vmatpush.msra.mxu0 %v1983
        %2003 = vmatpush.msra.mxu0 %v1982
        %2004 = vmatpush.msra.mxu0 %v1981
        %2005 = vmatpush.msra.mxu0 %v1980
        %2006 = vmatpush.msra.mxu0 %v1979
        %2007 = vmatpush.msra.mxu0 %v1978
        %2008 = vmatpush.msra.mxu0 %v1977
        %2009 = vmatpush.msra.mxu0 %v1976
        %2010 = vmatpush.msra.mxu0 %v1975
        %2011 = vmatmul.f32.gmra.mxu0 %v1974
        %v2012 = vpop.f32.mrf.mxu0
        %v2013 = vadd.f32 %v1993, %v2012
        %2014 = vdwg.mxu0
        %v2015 = vadd.f32 %v1899, %v2013
        %2016 = vst.msk [vmem:[%s538] sm:$0xff] %vm1873, %v2015
        %s2017 = sand.u32 %s336, 1
        %s2018 = scalar_lea.sflag [#allocation6], %s2017
        %s2019 = sand.u32 %s336, 1
        %s2020 = smul.addr %s2019, 8
        %s2021 = scalar_lea.vmem [#allocation10], %s2020
        %s2022 = sand.u32 %s364, 1
        %s2023 = scalar_lea.sflag [#allocation12], %s2022
        %s2024 = sand.u32 %s364, 1
        %s2025 = smul.addr %s2024, 32
        %s2026 = scalar_lea.vmem [#allocation11], %s2025
        // Predicated region
        $region89: #{tpu_custom_call.1} parent=71 // pred_check
          %p2027 = pneg %p346
        $region90: #{tpu_custom_call.1} parent=71 // pred_check_branch
          %2029 = sbr.rel (%p2027) target = $region92
        $region91: #{tpu_custom_call.1} parent=71 // pred_region
          %2031 = vsyncadd %s2018, 0
          %s2032 = smul.addr %s40, 2
          %s2033 = sadd.s32 %s41, %s2032
          %s2034 = smul.addr %s2033, 8
          %s2035 = scalar_lea.hbm %s13, %s2034
          %s2037 = sshll.u32 %s2021, 4
          %s2038 = int_to_ptr.vmem [resolvable:$true] %s2037
          %s2039 = sshll.u32 %s2035, 4
          %s2040 = int_to_ptr.hbm [resolvable:$true] %s2039
          %2042 = dma.vmem_to_hbm [thread:$0]  %s2038, 128, %s2040, %s2018
        $region92: #{tpu_custom_call.1} parent=71 // pred_fallthru
          _
        // Predicated region
        $region93: #{tpu_custom_call.1} parent=71 // pred_check
          %p2043 = pneg %p374
        $region94: #{tpu_custom_call.1} parent=71 // pred_check_branch
          %2045 = sbr.rel (%p2043) target = $region96
        $region95: #{tpu_custom_call.1} parent=71 // pred_region
          %2047 = vsyncadd %s2023, 0
          %s2048 = smul.addr %s40, 8
          %s2049 = sadd.s32 %s41, %s2048
          %s2050 = smul.addr %s2049, 8
          %s2051 = scalar_lea.hbm %s14, %s2050
          %s2052 = sshll.u32 %s2026, 4
          %s2053 = int_to_ptr.vmem [resolvable:$true] %s2052
          %s2054 = sshll.u32 %s2051, 4
          %s2055 = int_to_ptr.hbm [resolvable:$true] %s2054
          %2060 = dma.vmem_to_hbm [thread:$0]  %s2053, 512, %s2055, %s2023, 128, 256, 8
        $region96: #{tpu_custom_call.1} parent=71 // pred_fallthru
          _
      $region72: #{tpu_custom_call.1} parent=5 // pred_fallthru
        _
      %p2061 = scmp.le.s32.totalorder 2, %s31
      // Predicated region
      $region97: #{tpu_custom_call.1} parent=5 // pred_check
        %p2062 = pneg %p2061
      $region98: #{tpu_custom_call.1} parent=5 // pred_check_branch
        %2064 = sbr.rel (%p2062) target = $region100
      $region99: #{tpu_custom_call.1} parent=5 // pred_region
        %s2065 = ssub.s32 %s31, 2
        // Predicated region
        $region101: #{tpu_custom_call.1} parent=99 // pred_check
          %p2066 = pneg %p352
        $region102: #{tpu_custom_call.1} parent=99 // pred_check_branch
          %2068 = sbr.rel (%p2066) target = $region104
        $region103: #{tpu_custom_call.1} parent=99 // pred_region
          %s2069 = sand.u32 %s337, 1
          %s2070 = scalar_lea.sflag [#allocation6], %s2069
          %s2071 = sand.u32 %s337, 1
          %s2072 = smul.addr %s2071, 8
          %s2073 = scalar_lea.vmem [#allocation10], %s2072
          %2075 = dma.done %s2070, 128
        $region104: #{tpu_custom_call.1} parent=99 // pred_fallthru
          _
        // Predicated region
        $region105: #{tpu_custom_call.1} parent=99 // pred_check
          %p2076 = pneg %p380
        $region106: #{tpu_custom_call.1} parent=99 // pred_check_branch
          %2078 = sbr.rel (%p2076) target = $region108
        $region107: #{tpu_custom_call.1} parent=99 // pred_region
          %s2079 = sand.u32 %s365, 1
          %s2080 = scalar_lea.sflag [#allocation12], %s2079
          %s2081 = sand.u32 %s365, 1
          %s2082 = smul.addr %s2081, 32
          %s2083 = scalar_lea.vmem [#allocation11], %s2082
          %2085 = dma.done %s2080, 512
        $region108: #{tpu_custom_call.1} parent=99 // pred_fallthru
          _
      $region100: #{tpu_custom_call.1} parent=5 // pred_fallthru
        _
    $region6: #{tpu_custom_call.1} parent=1 // loop_footer
      %s35 = sadd.s32 1, %s31
    $region7: #{tpu_custom_call.1} parent=1 // loop_footer_branch
      %30 = sbr.rel target = $region3
    $region8: #{tpu_custom_call.1} parent=1 // loop_exit
      _
    %2086 = vsyncpa [#allocation5], 1
    %s2087 = scalar_lea.sflag [#allocation5], 1
    %2088 = vsyncpa %s2087, 1
    %2089 = vsyncpa [#allocation8], 1
    %2090 = vsyncpa [#allocation6], 1
    %s2091 = scalar_lea.sflag [#allocation6], 1
    %2092 = vsyncpa %s2091, 1
    %2093 = vsyncpa [#allocation12], 1
    %s2094 = scalar_lea.sflag [#allocation12], 1
    %2095 = vsyncpa %s2094, 1

// kernel: tpu_custom_call.1
$region0: #{tpu_custom_call.1}
  #allocation0 [shape = 'u32[]', space=smem, size = 0x4, offset = 0x4, fixed_abs, tag = 'smem constant byte address 0x4 - core index']
  #allocation1 [shape = 'u32[72,128]{1,0:T(1,128)}', space=vmem, size = 0x9000, scoped, tag = 'internal scratch']
  #allocation2 [shape = 'f32[4,16,16]{2,1,0:T(8,128)}', space=vmem, size = 0x8000, scoped, tag = 'scratch operand']
  #allocation3 [shape = 'f32[2,4,16,16]{3,2,1,0:T(8,128)}', space=vmem, size = 0x10000, scoped, tag = 'scratch operand']
  %s0 = inlined_call_operand.hbm [shape: f32[2,16,64], index: 0, kind: input, shape index: {}]
  %s1 = inlined_call_operand.vmem [shape: f32[64,192], index: 1, kind: input, shape index: {}]
  %s2 = inlined_call_operand.hbm [shape: f32[1,192], index: 2, kind: input, shape index: {}]
  %s3 = inlined_call_operand.vmem [shape: f32[64,64], index: 3, kind: input, shape index: {}]
  %s4 = inlined_call_operand.vmem [shape: f32[1,64], index: 4, kind: input, shape index: {}]
  %s5 = inlined_call_operand.vmem [shape: f32[1,64], index: 5, kind: input, shape index: {}]
  %s6 = inlined_call_operand.vmem [shape: f32[1,64], index: 6, kind: input, shape index: {}]
  %s7 = inlined_call_operand.vmem [shape: f32[1,64], index: 7, kind: input, shape index: {}]
  %s8 = inlined_call_operand.vmem [shape: f32[1,64], index: 8, kind: input, shape index: {}]
  %s9 = inlined_call_operand.hbm [shape: f32[64,128], index: 9, kind: input, shape index: {}]
  %s10 = inlined_call_operand.vmem [shape: f32[1,128], index: 10, kind: input, shape index: {}]
  %s11 = inlined_call_operand.vmem [shape: f32[128,64], index: 11, kind: input, shape index: {}]
  %s12 = inlined_call_operand.vmem [shape: f32[1,64], index: 12, kind: input, shape index: {}]
  %s13 = inlined_call_operand.hbm [shape: f32[2,16,64], index: 13, kind: output, shape index: {0}]
  %s14 = inlined_call_operand.hbm [shape: f32[2,4,16,16], index: 14, kind: output, shape index: {1}]
  %15 = xla_tuple %s13, %s14
  %s16 = sld [smem:[#allocation0]]
  $region109: #{tpu_custom_call.1} parent=0
    _
  %s18 = ssub.s32 1, %s16
  %s19 = scalar_select 0, %s18, %s16
  $region1: #{tpu_custom_call.1} parent=0
    #allocation4 [shape = 'u8[16384]{0}', space=vmem, size = 0x4000, scoped, tag = 'input window, operand 0']
    #allocation5 [shape = 's32[2]{0}', space=sflag, size = 0x8, scoped, tag = 'scoped memory for tpu_custom_call.1']
    #allocation6 [shape = 's32[2]{0}', space=sflag, size = 0x8, scoped, tag = 'scoped memory for tpu_custom_call.1']
    #allocation7 [shape = 'u8[1024]{0}', space=vmem, size = 0x400, scoped, tag = 'input window, operand 2, single buffered']
    #allocation8 [shape = 's32[1]{0}', space=sflag, size = 0x4, scoped, tag = 'scoped memory for tpu_custom_call.1']
    #allocation9 [shape = 'u8[32768]{0}', space=vmem, size = 0x8000, scoped, tag = 'input window, operand 9, single buffered']
    #allocation10 [shape = 'u8[8192]{0}', space=vmem, size = 0x2000, scoped, tag = 'output window, operand 0']
    #allocation11 [shape = 'u8[32768]{0}', space=vmem, size = 0x8000, scoped, tag = 'output window, operand 1']
    #allocation12 [shape = 's32[2]{0}', space=sflag, size = 0x8, scoped, tag = 'scoped memory for tpu_custom_call.1']
    %20 = vsyncpa [#allocation5], 0
    %s21 = scalar_lea.sflag [#allocation5], 1
    %22 = vsyncpa %s21, 0
    %23 = vsyncpa [#allocation8], 0
    %24 = vsyncpa [#allocation6], 0
    %s25 = scalar_lea.sflag [#allocation6], 1
    %26 = vsyncpa %s25, 0
    %27 = vsyncpa [#allocation12], 0
    %s28 = scalar_lea.sflag [#allocation12], 1
    %29 = vsyncpa %s28, 0
    loop: start=0, step=1, limit=6
    $region2: #{tpu_custom_call.1} parent=1 // loop_pre_header
      _
    $region3: #{tpu_custom_call.1} parent=1 // loop_header
      %s31 = sphi 0, %s35
      %p32 = scmp.ge.s32.totalorder %s31, 6
      %s38 = sphi 0, %s50
      %s39 = sphi 0, %s46
      %s40 = sphi 0, %s38
      %s41 = sphi 0, %s39
      %s42 = sphi 0, %s40
      %s43 = sphi 0, %s41
      %s53 = sphi 0, %s55
      %s56 = sphi 0, %s53
      %s57 = sphi 0, %s56
      %s73 = sphi 0, %s57
      %s77 = sphi 0, %s77
      %s79 = sphi 0, %s77
      %s80 = sphi 0, %s79
      %s94 = sphi 0, %s80
      %s98 = sphi 0, %s98
      %s100 = sphi 0, %s98
      %s101 = sphi 0, %s100
      %s115 = sphi 0, %s101
      %s119 = sphi 0, %s119
      %s121 = sphi 0, %s119
      %s122 = sphi 0, %s121
      %s136 = sphi 0, %s122
      %s140 = sphi 0, %s140
      %s142 = sphi 0, %s140
      %s143 = sphi 0, %s142
      %s157 = sphi 0, %s143
      %s161 = sphi 0, %s161
      %s163 = sphi 0, %s161
      %s164 = sphi 0, %s163
      %s178 = sphi 0, %s164
      %s182 = sphi 0, %s182
      %s184 = sphi 0, %s182
      %s185 = sphi 0, %s184
      %s199 = sphi 0, %s185
      %s203 = sphi 0, %s203
      %s205 = sphi 0, %s203
      %s206 = sphi 0, %s205
      %s220 = sphi 0, %s206
      %s224 = sphi 0, %s224
      %s226 = sphi 0, %s224
      %s227 = sphi 0, %s226
      %s241 = sphi 0, %s227
      %s245 = sphi 0, %s245
      %s247 = sphi 0, %s245
      %s248 = sphi 0, %s247
      %s262 = sphi 0, %s248
      %s266 = sphi 0, %s266
      %s268 = sphi 0, %s266
      %s269 = sphi 0, %s268
      %s283 = sphi 0, %s269
      %s287 = sphi 0, %s287
      %s289 = sphi 0, %s287
      %s290 = sphi 0, %s289
      %s304 = sphi 0, %s290
      %s308 = sphi 0, %s308
      %s310 = sphi 0, %s308
      %s311 = sphi 0, %s310
      %s325 = sphi 0, %s311
      %s333 = sphi 0, %s335
      %s336 = sphi 0, %s333
      %s337 = sphi 0, %s336
      %s353 = sphi 0, %s337
      %s361 = sphi 0, %s363
      %s364 = sphi 0, %s361
      %s365 = sphi 0, %s364
      %s381 = sphi 0, %s365
    $region4: #{tpu_custom_call.1} parent=1 // loop_header_branch
      %34 = sbr.rel (%p32) target = $region8
    $region5: #{tpu_custom_call.1} parent=1 // loop_body
      %s36 = ssub.s32 %s31, 1
      %s37 = ssub.s32 %s31, 2
      %s44 = sadd.s32 1, %s39
      %p45 = scmp.ge.s32.totalorder %s44, 2
      %s46 = scalar_select %p45, 0, %s44
      %s47 = sadd.s32 1, %s38
      %s48 = scalar_select %p45, %s47, %s38
      %p49 = scmp.ge.s32.totalorder %s48, 2
      %s50 = scalar_select %p49, 0, %s48
      %s51 = ssub.s32 %s38, %s50
      %p52 = scmp.eq.s32.totalorder %s51, 0
      %s54 = sadd.s32 %s53, 1
      %s55 = scalar_select %p52, %s53, %s54
      %p58 = pneg %p52
      %p59 = scmp.eq.s32.totalorder %s31, 3
      %p60 = por %p58, %p59
      %p61 = scmp.ne.s32.totalorder %s53, %s56
      %p62 = scmp.eq.s32.totalorder %s31, 0
      %p63 = por %p61, %p62
      %p64 = scmp.ne.s32.totalorder %s53, %s56
      %p65 = scmp.eq.s32.totalorder %s36, 3
      %p66 = por %p64, %p65
      %p67 = scmp.ne.s32.totalorder %s56, %s57
      %p68 = scmp.eq.s32.totalorder %s36, 0
      %p69 = por %p67, %p68
      %p70 = scmp.ne.s32.totalorder %s56, %s57
      %p71 = scmp.eq.s32.totalorder %s37, 3
      %p72 = por %p70, %p71
      %p74 = scmp.ne.s32.totalorder %s57, %s73
      %p75 = scmp.eq.s32.totalorder %s37, 0
      %p76 = por %p74, %p75
      %s78 = sadd.s32 %s77, 1
      %p81 = scmp.eq.s32.totalorder %s31, 3
      %p82 = scmp.ne.s32.totalorder %s77, %s79
      %p83 = scmp.eq.s32.totalorder %s31, 0
      %p84 = por %p82, %p83
      %p85 = scmp.ne.s32.totalorder %s77, %s79
      %p86 = scmp.eq.s32.totalorder %s36, 3
      %p87 = por %p85, %p86
      %p88 = scmp.ne.s32.totalorder %s79, %s80
      %p89 = scmp.eq.s32.totalorder %s36, 0
      %p90 = por %p88, %p89
      %p91 = scmp.ne.s32.totalorder %s79, %s80
      %p92 = scmp.eq.s32.totalorder %s37, 3
      %p93 = por %p91, %p92
      %p95 = scmp.ne.s32.totalorder %s80, %s94
      %p96 = scmp.eq.s32.totalorder %s37, 0
      %p97 = por %p95, %p96
      %s99 = sadd.s32 %s98, 1
      %p102 = scmp.eq.s32.totalorder %s31, 3
      %p103 = scmp.ne.s32.totalorder %s98, %s100
      %p104 = scmp.eq.s32.totalorder %s31, 0
      %p105 = por %p103, %p104
      %p106 = scmp.ne.s32.totalorder %s98, %s100
      %p107 = scmp.eq.s32.totalorder %s36, 3
      %p108 = por %p106, %p107
      %p109 = scmp.ne.s32.totalorder %s100, %s101
      %p110 = scmp.eq.s32.totalorder %s36, 0
      %p111 = por %p109, %p110
      %p112 = scmp.ne.s32.totalorder %s100, %s101
      %p113 = scmp.eq.s32.totalorder %s37, 3
      %p114 = por %p112, %p113
      %p116 = scmp.ne.s32.totalorder %s101, %s115
      %p117 = scmp.eq.s32.totalorder %s37, 0
      %p118 = por %p116, %p117
      %s120 = sadd.s32 %s119, 1
      %p123 = scmp.eq.s32.totalorder %s31, 3
      %p124 = scmp.ne.s32.totalorder %s119, %s121
      %p125 = scmp.eq.s32.totalorder %s31, 0
      %p126 = por %p124, %p125
      %p127 = scmp.ne.s32.totalorder %s119, %s121
      %p128 = scmp.eq.s32.totalorder %s36, 3
      %p129 = por %p127, %p128
      %p130 = scmp.ne.s32.totalorder %s121, %s122
      %p131 = scmp.eq.s32.totalorder %s36, 0
      %p132 = por %p130, %p131
      %p133 = scmp.ne.s32.totalorder %s121, %s122
      %p134 = scmp.eq.s32.totalorder %s37, 3
      %p135 = por %p133, %p134
      %p137 = scmp.ne.s32.totalorder %s122, %s136
      %p138 = scmp.eq.s32.totalorder %s37, 0
      %p139 = por %p137, %p138
      %s141 = sadd.s32 %s140, 1
      %p144 = scmp.eq.s32.totalorder %s31, 3
      %p145 = scmp.ne.s32.totalorder %s140, %s142
      %p146 = scmp.eq.s32.totalorder %s31, 0
      %p147 = por %p145, %p146
      %p148 = scmp.ne.s32.totalorder %s140, %s142
      %p149 = scmp.eq.s32.totalorder %s36, 3
      %p150 = por %p148, %p149
      %p151 = scmp.ne.s32.totalorder %s142, %s143
      %p152 = scmp.eq.s32.totalorder %s36, 0
      %p153 = por %p151, %p152
      %p154 = scmp.ne.s32.totalorder %s142, %s143
      %p155 = scmp.eq.s32.totalorder %s37, 3
      %p156 = por %p154, %p155
      %p158 = scmp.ne.s32.totalorder %s143, %s157
      %p159 = scmp.eq.s32.totalorder %s37, 0
      %p160 = por %p158, %p159
      %s162 = sadd.s32 %s161, 1
      %p165 = scmp.eq.s32.totalorder %s31, 3
      %p166 = scmp.ne.s32.totalorder %s161, %s163
      %p167 = scmp.eq.s32.totalorder %s31, 0
      %p168 = por %p166, %p167
      %p169 = scmp.ne.s32.totalorder %s161, %s163
      %p170 = scmp.eq.s32.totalorder %s36, 3
      %p171 = por %p169, %p170
      %p172 = scmp.ne.s32.totalorder %s163, %s164
      %p173 = scmp.eq.s32.totalorder %s36, 0
      %p174 = por %p172, %p173
      %p175 = scmp.ne.s32.totalorder %s163, %s164
      %p176 = scmp.eq.s32.totalorder %s37, 3
      %p177 = por %p175, %p176
      %p179 = scmp.ne.s32.totalorder %s164, %s178
      %p180 = scmp.eq.s32.totalorder %s37, 0
      %p181 = por %p179, %p180
      %s183 = sadd.s32 %s182, 1
      %p186 = scmp.eq.s32.totalorder %s31, 3
      %p187 = scmp.ne.s32.totalorder %s182, %s184
      %p188 = scmp.eq.s32.totalorder %s31, 0
      %p189 = por %p187, %p188
      %p190 = scmp.ne.s32.totalorder %s182, %s184
      %p191 = scmp.eq.s32.totalorder %s36, 3
      %p192 = por %p190, %p191
      %p193 = scmp.ne.s32.totalorder %s184, %s185
      %p194 = scmp.eq.s32.totalorder %s36, 0
      %p195 = por %p193, %p194
      %p196 = scmp.ne.s32.totalorder %s184, %s185
      %p197 = scmp.eq.s32.totalorder %s37, 3
      %p198 = por %p196, %p197
      %p200 = scmp.ne.s32.totalorder %s185, %s199
      %p201 = scmp.eq.s32.totalorder %s37, 0
      %p202 = por %p200, %p201
      %s204 = sadd.s32 %s203, 1
      %p207 = scmp.eq.s32.totalorder %s31, 3
      %p208 = scmp.ne.s32.totalorder %s203, %s205
      %p209 = scmp.eq.s32.totalorder %s31, 0
      %p210 = por %p208, %p209
      %p211 = scmp.ne.s32.totalorder %s203, %s205
      %p212 = scmp.eq.s32.totalorder %s36, 3
      %p213 = por %p211, %p212
      %p214 = scmp.ne.s32.totalorder %s205, %s206
      %p215 = scmp.eq.s32.totalorder %s36, 0
      %p216 = por %p214, %p215
      %p217 = scmp.ne.s32.totalorder %s205, %s206
      %p218 = scmp.eq.s32.totalorder %s37, 3
      %p219 = por %p217, %p218
      %p221 = scmp.ne.s32.totalorder %s206, %s220
      %p222 = scmp.eq.s32.totalorder %s37, 0
      %p223 = por %p221, %p222
      %s225 = sadd.s32 %s224, 1
      %p228 = scmp.eq.s32.totalorder %s31, 3
      %p229 = scmp.ne.s32.totalorder %s224, %s226
      %p230 = scmp.eq.s32.totalorder %s31, 0
      %p231 = por %p229, %p230
      %p232 = scmp.ne.s32.totalorder %s224, %s226
      %p233 = scmp.eq.s32.totalorder %s36, 3
      %p234 = por %p232, %p233
      %p235 = scmp.ne.s32.totalorder %s226, %s227
      %p236 = scmp.eq.s32.totalorder %s36, 0
      %p237 = por %p235, %p236
      %p238 = scmp.ne.s32.totalorder %s226, %s227
      %p239 = scmp.eq.s32.totalorder %s37, 3
      %p240 = por %p238, %p239
      %p242 = scmp.ne.s32.totalorder %s227, %s241
      %p243 = scmp.eq.s32.totalorder %s37, 0
      %p244 = por %p242, %p243
      %s246 = sadd.s32 %s245, 1
      %p249 = scmp.eq.s32.totalorder %s31, 3
      %p250 = scmp.ne.s32.totalorder %s245, %s247
      %p251 = scmp.eq.s32.totalorder %s31, 0
      %p252 = por %p250, %p251
      %p253 = scmp.ne.s32.totalorder %s245, %s247
      %p254 = scmp.eq.s32.totalorder %s36, 3
      %p255 = por %p253, %p254
      %p256 = scmp.ne.s32.totalorder %s247, %s248
      %p257 = scmp.eq.s32.totalorder %s36, 0
      %p258 = por %p256, %p257
      %p259 = scmp.ne.s32.totalorder %s247, %s248
      %p260 = scmp.eq.s32.totalorder %s37, 3
      %p261 = por %p259, %p260
      %p263 = scmp.ne.s32.totalorder %s248, %s262
      %p264 = scmp.eq.s32.totalorder %s37, 0
      %p265 = por %p263, %p264
      %s267 = sadd.s32 %s266, 1
      %p270 = scmp.eq.s32.totalorder %s31, 3
      %p271 = scmp.ne.s32.totalorder %s266, %s268
      %p272 = scmp.eq.s32.totalorder %s31, 0
      %p273 = por %p271, %p272
      %p274 = scmp.ne.s32.totalorder %s266, %s268
      %p275 = scmp.eq.s32.totalorder %s36, 3
      %p276 = por %p274, %p275
      %p277 = scmp.ne.s32.totalorder %s268, %s269
      %p278 = scmp.eq.s32.totalorder %s36, 0
      %p279 = por %p277, %p278
      %p280 = scmp.ne.s32.totalorder %s268, %s269
      %p281 = scmp.eq.s32.totalorder %s37, 3
      %p282 = por %p280, %p281
      %p284 = scmp.ne.s32.totalorder %s269, %s283
      %p285 = scmp.eq.s32.totalorder %s37, 0
      %p286 = por %p284, %p285
      %s288 = sadd.s32 %s287, 1
      %p291 = scmp.eq.s32.totalorder %s31, 3
      %p292 = scmp.ne.s32.totalorder %s287, %s289
      %p293 = scmp.eq.s32.totalorder %s31, 0
      %p294 = por %p292, %p293
      %p295 = scmp.ne.s32.totalorder %s287, %s289
      %p296 = scmp.eq.s32.totalorder %s36, 3
      %p297 = por %p295, %p296
      %p298 = scmp.ne.s32.totalorder %s289, %s290
      %p299 = scmp.eq.s32.totalorder %s36, 0
      %p300 = por %p298, %p299
      %p301 = scmp.ne.s32.totalorder %s289, %s290
      %p302 = scmp.eq.s32.totalorder %s37, 3
      %p303 = por %p301, %p302
      %p305 = scmp.ne.s32.totalorder %s290, %s304
      %p306 = scmp.eq.s32.totalorder %s37, 0
      %p307 = por %p305, %p306
      %s309 = sadd.s32 %s308, 1
      %p312 = scmp.eq.s32.totalorder %s31, 3
      %p313 = scmp.ne.s32.totalorder %s308, %s310
      %p314 = scmp.eq.s32.totalorder %s31, 0
      %p315 = por %p313, %p314
      %p316 = scmp.ne.s32.totalorder %s308, %s310
      %p317 = scmp.eq.s32.totalorder %s36, 3
      %p318 = por %p316, %p317
      %p319 = scmp.ne.s32.totalorder %s310, %s311
      %p320 = scmp.eq.s32.totalorder %s36, 0
      %p321 = por %p319, %p320
      %p322 = scmp.ne.s32.totalorder %s310, %s311
      %p323 = scmp.eq.s32.totalorder %s37, 3
      %p324 = por %p322, %p323
      %p326 = scmp.ne.s32.totalorder %s311, %s325
      %p327 = scmp.eq.s32.totalorder %s37, 0
      %p328 = por %p326, %p327
      %s329 = ssub.s32 %s38, %s50
      %s330 = ssub.s32 %s39, %s46
      %s331 = sor.u32 %s329, %s330
      %p332 = scmp.eq.s32.totalorder %s331, 0
      %s334 = sadd.s32 %s333, 1
      %s335 = scalar_select %p332, %s333, %s334
      %p338 = pneg %p332
      %p339 = scmp.eq.s32.totalorder %s31, 3
      %p340 = por %p338, %p339
      %p341 = scmp.ne.s32.totalorder %s333, %s336
      %p342 = scmp.eq.s32.totalorder %s31, 0
      %p343 = por %p341, %p342
      %p344 = scmp.ne.s32.totalorder %s333, %s336
      %p345 = scmp.eq.s32.totalorder %s36, 3
      %p346 = por %p344, %p345
      %p347 = scmp.ne.s32.totalorder %s336, %s337
      %p348 = scmp.eq.s32.totalorder %s36, 0
      %p349 = por %p347, %p348
      %p350 = scmp.ne.s32.totalorder %s336, %s337
      %p351 = scmp.eq.s32.totalorder %s37, 3
      %p352 = por %p350, %p351
      %p354 = scmp.ne.s32.totalorder %s337, %s353
      %p355 = scmp.eq.s32.totalorder %s37, 0
      %p356 = por %p354, %p355
      %s357 = ssub.s32 %s38, %s50
      %s358 = ssub.s32 %s39, %s46
      %s359 = sor.u32 %s357, %s358
      %p360 = scmp.eq.s32.totalorder %s359, 0
      %s362 = sadd.s32 %s361, 1
      %s363 = scalar_select %p360, %s361, %s362
      %p366 = pneg %p360
      %p367 = scmp.eq.s32.totalorder %s31, 3
      %p368 = por %p366, %p367
      %p369 = scmp.ne.s32.totalorder %s361, %s364
      %p370 = scmp.eq.s32.totalorder %s31, 0
      %p371 = por %p369, %p370
      %p372 = scmp.ne.s32.totalorder %s361, %s364
      %p373 = scmp.eq.s32.totalorder %s36, 3
      %p374 = por %p372, %p373
      %p375 = scmp.ne.s32.totalorder %s364, %s365
      %p376 = scmp.eq.s32.totalorder %s36, 0
      %p377 = por %p375, %p376
      %p378 = scmp.ne.s32.totalorder %s364, %s365
      %p379 = scmp.eq.s32.totalorder %s37, 3
      %p380 = por %p378, %p379
      %p382 = scmp.ne.s32.totalorder %s365, %s381
      %p383 = scmp.eq.s32.totalorder %s37, 0
      %p384 = por %p382, %p383
      %p385 = scmp.le.s32.totalorder 1, %s31
      %p386 = scmp.lt.s32.totalorder %s31, 5
      %p387 = pnand %p385, %p386
      %p388 = pneg %p387
      // Predicated region
      $region9: #{tpu_custom_call.1} parent=5 // pred_check
        _
      $region10: #{tpu_custom_call.1} parent=5 // pred_check_branch
        %390 = sbr.rel (%p387) target = $region12
      $region11: #{tpu_custom_call.1} parent=5 // pred_region
        %s391 = ssub.s32 %s31, 1
        // Predicated region
        $region13: #{tpu_custom_call.1} parent=11 // pred_check
          %p392 = pneg %p90
        $region14: #{tpu_custom_call.1} parent=11 // pred_check_branch
          %394 = sbr.rel (%p392) target = $region16
        $region15: #{tpu_custom_call.1} parent=11 // pred_region
          _
        $region16: #{tpu_custom_call.1} parent=11 // pred_fallthru
          _
        // Predicated region
        $region17: #{tpu_custom_call.1} parent=11 // pred_check
          %p395 = pneg %p111
        $region18: #{tpu_custom_call.1} parent=11 // pred_check_branch
          %397 = sbr.rel (%p395) target = $region20
        $region19: #{tpu_custom_call.1} parent=11 // pred_region
          %399 = vsyncadd [#allocation8], 0
          %s401 = sshll.u32 %s2, 4
          %s402 = int_to_ptr.hbm [resolvable:$true] %s401
          %s403 = sshll.u32 [#allocation7], 4
          %s404 = int_to_ptr.vmem [resolvable:$true] %s403
          %406 = dma.hbm_to_vmem [thread:$0]  %s402, 32, %s404, [#allocation8]
        $region20: #{tpu_custom_call.1} parent=11 // pred_fallthru
          _
        // Predicated region
        $region21: #{tpu_custom_call.1} parent=11 // pred_check
          %p407 = pneg %p132
        $region22: #{tpu_custom_call.1} parent=11 // pred_check_branch
          %409 = sbr.rel (%p407) target = $region24
        $region23: #{tpu_custom_call.1} parent=11 // pred_region
          _
        $region24: #{tpu_custom_call.1} parent=11 // pred_fallthru
          _
        // Predicated region
        $region25: #{tpu_custom_call.1} parent=11 // pred_check
          %p410 = pneg %p153
        $region26: #{tpu_custom_call.1} parent=11 // pred_check_branch
          %412 = sbr.rel (%p410) target = $region28
        $region27: #{tpu_custom_call.1} parent=11 // pred_region
          _
        $region28: #{tpu_custom_call.1} parent=11 // pred_fallthru
          _
        // Predicated region
        $region29: #{tpu_custom_call.1} parent=11 // pred_check
          %p413 = pneg %p174
        $region30: #{tpu_custom_call.1} parent=11 // pred_check_branch
          %415 = sbr.rel (%p413) target = $region32
        $region31: #{tpu_custom_call.1} parent=11 // pred_region
          _
        $region32: #{tpu_custom_call.1} parent=11 // pred_fallthru
          _
        // Predicated region
        $region33: #{tpu_custom_call.1} parent=11 // pred_check
          %p416 = pneg %p195
        $region34: #{tpu_custom_call.1} parent=11 // pred_check_branch
          %418 = sbr.rel (%p416) target = $region36
        $region35: #{tpu_custom_call.1} parent=11 // pred_region
          _
        $region36: #{tpu_custom_call.1} parent=11 // pred_fallthru
          _
        // Predicated region
        $region37: #{tpu_custom_call.1} parent=11 // pred_check
          %p419 = pneg %p216
        $region38: #{tpu_custom_call.1} parent=11 // pred_check_branch
          %421 = sbr.rel (%p419) target = $region40
        $region39: #{tpu_custom_call.1} parent=11 // pred_region
          _
        $region40: #{tpu_custom_call.1} parent=11 // pred_fallthru
          _
        // Predicated region
        $region41: #{tpu_custom_call.1} parent=11 // pred_check
          %p422 = pneg %p237
        $region42: #{tpu_custom_call.1} parent=11 // pred_check_branch
          %424 = sbr.rel (%p422) target = $region44
        $region43: #{tpu_custom_call.1} parent=11 // pred_region
          _
        $region44: #{tpu_custom_call.1} parent=11 // pred_fallthru
          _
        // Predicated region
        $region45: #{tpu_custom_call.1} parent=11 // pred_check
          %p425 = pneg %p258
        $region46: #{tpu_custom_call.1} parent=11 // pred_check_branch
          %427 = sbr.rel (%p425) target = $region48
        $region47: #{tpu_custom_call.1} parent=11 // pred_region
          %429 = vsyncadd [#allocation8], 0
          %s430 = sshll.u32 %s9, 4
          %s431 = int_to_ptr.hbm [resolvable:$true] %s430
          %s432 = sshll.u32 [#allocation9], 4
          %s433 = int_to_ptr.vmem [resolvable:$true] %s432
          %438 = dma.hbm_to_vmem [thread:$0]  %s431, 1024, %s433, [#allocation8], 128, 128, 8
        $region48: #{tpu_custom_call.1} parent=11 // pred_fallthru
          _
        // Predicated region
        $region49: #{tpu_custom_call.1} parent=11 // pred_check
          %p439 = pneg %p279
        $region50: #{tpu_custom_call.1} parent=11 // pred_check_branch
          %441 = sbr.rel (%p439) target = $region52
        $region51: #{tpu_custom_call.1} parent=11 // pred_region
          _
        $region52: #{tpu_custom_call.1} parent=11 // pred_fallthru
          _
        // Predicated region
        $region53: #{tpu_custom_call.1} parent=11 // pred_check
          %p442 = pneg %p300
        $region54: #{tpu_custom_call.1} parent=11 // pred_check_branch
          %444 = sbr.rel (%p442) target = $region56
        $region55: #{tpu_custom_call.1} parent=11 // pred_region
          _
        $region56: #{tpu_custom_call.1} parent=11 // pred_fallthru
          _
        // Predicated region
        $region57: #{tpu_custom_call.1} parent=11 // pred_check
          %p445 = pneg %p321
        $region58: #{tpu_custom_call.1} parent=11 // pred_check_branch
          %447 = sbr.rel (%p445) target = $region60
        $region59: #{tpu_custom_call.1} parent=11 // pred_region
          _
        $region60: #{tpu_custom_call.1} parent=11 // pred_fallthru
          _
      $region12: #{tpu_custom_call.1} parent=5 // pred_fallthru
        _
      %p448 = scmp.lt.s32.totalorder %s31, 4
      // Predicated region
      $region61: #{tpu_custom_call.1} parent=5 // pred_check
        %p449 = pneg %p448
      $region62: #{tpu_custom_call.1} parent=5 // pred_check_branch
        %451 = sbr.rel (%p449) target = $region64
      $region63: #{tpu_custom_call.1} parent=5 // pred_region
        // Predicated region
        $region65: #{tpu_custom_call.1} parent=63 // pred_check
          %p452 = pneg %p63
        $region66: #{tpu_custom_call.1} parent=63 // pred_check_branch
          %454 = sbr.rel (%p452) target = $region68
        $region67: #{tpu_custom_call.1} parent=63 // pred_region
          %s455 = sand.u32 %s53, 1
          %s456 = scalar_lea.sflag [#allocation5], %s455
          %s457 = sand.u32 %s53, 1
          %s458 = smul.addr %s457, 16
          %s459 = scalar_lea.vmem [#allocation4], %s458
          %461 = vsyncadd %s456, 0
          %s462 = smul.addr %s38, 2
          %s463 = smul.addr %s462, 8
          %s464 = scalar_lea.hbm %s0, %s463
          %s465 = sshll.u32 %s464, 4
          %s466 = int_to_ptr.hbm [resolvable:$true] %s465
          %s467 = sshll.u32 %s459, 4
          %s468 = int_to_ptr.vmem [resolvable:$true] %s467
          %473 = dma.hbm_to_vmem [thread:$0]  %s466, 256, %s468, %s456, 128, 128, 8
        $region68: #{tpu_custom_call.1} parent=63 // pred_fallthru
          _
      $region64: #{tpu_custom_call.1} parent=5 // pred_fallthru
        _
      %p474 = scmp.le.s32.totalorder 1, %s31
      %p475 = scmp.lt.s32.totalorder %s31, 5
      %p476 = pnand %p474, %p475
      %p477 = pneg %p476
      // Predicated region
      $region69: #{tpu_custom_call.1} parent=5 // pred_check
        _
      $region70: #{tpu_custom_call.1} parent=5 // pred_check_branch
        %479 = sbr.rel (%p476) target = $region72
      $region71: #{tpu_custom_call.1} parent=5 // pred_region
        %s480 = ssub.s32 %s31, 1
        %s481 = sand.u32 %s56, 1
        %s482 = scalar_lea.sflag [#allocation5], %s481
        %s483 = sand.u32 %s56, 1
        %s484 = smul.addr %s483, 16
        %s485 = scalar_lea.vmem [#allocation4], %s484
        // Predicated region
        $region73: #{tpu_custom_call.1} parent=71 // pred_check
          %p486 = pneg %p69
        $region74: #{tpu_custom_call.1} parent=71 // pred_check_branch
          %488 = sbr.rel (%p486) target = $region76
        $region75: #{tpu_custom_call.1} parent=71 // pred_region
          %490 = dma.done %s482, 256
        $region76: #{tpu_custom_call.1} parent=71 // pred_fallthru
          _
        // Predicated region
        $region77: #{tpu_custom_call.1} parent=71 // pred_check
          %p491 = pneg %p111
        $region78: #{tpu_custom_call.1} parent=71 // pred_check_branch
          %493 = sbr.rel (%p491) target = $region80
        $region79: #{tpu_custom_call.1} parent=71 // pred_region
          %495 = dma.done [#allocation8], 32
        $region80: #{tpu_custom_call.1} parent=71 // pred_fallthru
          _
        // Predicated region
        $region81: #{tpu_custom_call.1} parent=71 // pred_check
          %p496 = pneg %p258
        $region82: #{tpu_custom_call.1} parent=71 // pred_check_branch
          %498 = sbr.rel (%p496) target = $region84
        $region83: #{tpu_custom_call.1} parent=71 // pred_region
          %500 = dma.done [#allocation8], 1024
        $region84: #{tpu_custom_call.1} parent=71 // pred_fallthru
          _
        %s501 = sand.u32 %s56, 1
        %s502 = scalar_lea.sflag [#allocation5], %s501
        %s503 = sand.u32 %s56, 1
        %s504 = smul.addr %s503, 16
        %s505 = scalar_lea.vmem [#allocation4], %s504
        %p506 = pneg %p69
        %p507 = pneg %p66
        %p508 = pneg %p90
        %p509 = pneg %p87
        %p510 = pneg %p111
        %p511 = pneg %p108
        %p512 = pneg %p132
        %p513 = pneg %p129
        %p514 = pneg %p153
        %p515 = pneg %p150
        %p516 = pneg %p174
        %p517 = pneg %p171
        %p518 = pneg %p195
        %p519 = pneg %p192
        %p520 = pneg %p216
        %p521 = pneg %p213
        %p522 = pneg %p237
        %p523 = pneg %p234
        %p524 = pneg %p258
        %p525 = pneg %p255
        %p526 = pneg %p279
        %p527 = pneg %p276
        %p528 = pneg %p300
        %p529 = pneg %p297
        %p530 = pneg %p321
        %p531 = pneg %p318
        %p532 = pneg %p349
        %p533 = pneg %p346
        %s534 = sand.u32 %s336, 1
        %s535 = scalar_lea.sflag [#allocation6], %s534
        %s536 = sand.u32 %s336, 1
        %s537 = smul.addr %s536, 8
        %s538 = scalar_lea.vmem [#allocation10], %s537
        %p539 = pneg %p377
        %p540 = pneg %p374
        %s541 = sand.u32 %s364, 1
        %s542 = scalar_lea.sflag [#allocation12], %s541
        %s543 = sand.u32 %s364, 1
        %s544 = smul.addr %s543, 32
        %s545 = scalar_lea.vmem [#allocation11], %s544
        %p546 = scmp.eq.s32.totalorder %s41, 0
        // Predicated region
        $region85: #{tpu_custom_call.1} parent=71 // pred_check
          %p547 = pneg %p546
        $region86: #{tpu_custom_call.1} parent=71 // pred_check_branch
          %549 = sbr.rel (%p547) target = $region88
        $region87: #{tpu_custom_call.1} parent=71 // pred_region
          %v550 = vld [vmem:[%s485] sm:$0xff]
          %v551 = vld [vmem:[%s485 + $0x8] sm:$0xff]
          %v552 = vld [vmem:[%s5] sm:$0x1]
          %v553 = vld [vmem:[%s6] sm:$0x1]
          %vm554 = vcmask 523264
          %v555 = vsel %vm554, %v550, 0.0
          %556 = vadd.xlane.f32.xlu0 %v555
          %v557 = vpop.xlane.xlu0 %556
          %v558 = vsel %vm554, %v551, 0.0
          %559 = vadd.xlane.f32.xlu0 %v558
          %v560 = vpop.xlane.xlu0 %559
          %v561 = vrcp.pop 64.0
          %v562 = vmul.f32 64.0, %v561
          %v563 = vsub.f32 1.0, %v562
          %v564 = vmul.f32 %v561, %v563
          %v565 = vadd.f32 %v561, %v564
          %vm566 = vweird.f32 %v561
          %v567 = vsel %vm566, %v561, %v565
          %v568 = vmul.f32 %v557, %v567
          %v569 = vmul.f32 %v560, %v567
          %v570 = vsub.f32 %v550, %v568
          %v571 = vsub.f32 %v551, %v569
          %v572 = vmul.f32 %v570, %v570
          %v573 = vmul.f32 %v571, %v571
          %v574 = vsel %vm554, %v572, 0.0
          %575 = vadd.xlane.f32.xlu0 %v574
          %v576 = vpop.xlane.xlu0 %575
          %v577 = vsel %vm554, %v573, 0.0
          %578 = vadd.xlane.f32.xlu0 %v577
          %v579 = vpop.xlane.xlu0 %578
          %v580 = vmul.f32 %v576, %v567
          %v581 = vmul.f32 %v579, %v567
          %v582 = vadd.f32 %v580, 1e-05
          %v583 = vadd.f32 %v581, 1e-05
          %v584 = vrsqrt.pop %v582
          %v585 = vmul.f32 %v584, %v582
          %v586 = vmul.f32 %v585, %v584
          %v587 = vmul.f32 0.5, %v586
          %v588 = vsub.f32 1.5, %v587
          %v589 = vmul.f32 %v584, %v588
          %vm590 = vweird.f32 %v582
          %vm591 = vweird.f32 %v584
          %vm592 = vmor %vm590, %vm591
          %v593 = vsel %vm592, %v584, %v589
          %v594 = vrsqrt.pop %v583
          %v595 = vmul.f32 %v594, %v583
          %v596 = vmul.f32 %v595, %v594
          %v597 = vmul.f32 0.5, %v596
          %v598 = vsub.f32 1.5, %v597
          %v599 = vmul.f32 %v594, %v598
          %vm600 = vweird.f32 %v583
          %vm601 = vweird.f32 %v594
          %vm602 = vmor %vm600, %vm601
          %v603 = vsel %vm602, %v594, %v599
          %v604 = vmul.f32 %v570, %v593
          %v605 = vmul.f32 %v571, %v603
          %v607 = vperm.slane %v552, 0
          %v609 = vmul.f32 %v604, %v607
          %v610 = vmul.f32 %v605, %v607
          %v612 = vperm.slane %v553, 0
          %v614 = vadd.f32 %v609, %v612
          %v615 = vadd.f32 %v610, %v612
          %v616 = vld [vmem:[%s1] sm:$0xff]
          %v617 = vld [vmem:[%s1 + $0x8] sm:$0xff]
          %v618 = vld [vmem:[%s1 + $0x10] sm:$0xff]
          %v619 = vld [vmem:[%s1 + $0x18] sm:$0xff]
          %v620 = vld [vmem:[%s1 + $0x20] sm:$0xff]
          %v621 = vld [vmem:[%s1 + $0x28] sm:$0xff]
          %v622 = vld [vmem:[%s1 + $0x30] sm:$0xff]
          %v623 = vld [vmem:[%s1 + $0x38] sm:$0xff]
          %v624 = vld [vmem:[%s1 + $0x40] sm:$0xff]
          %v625 = vld [vmem:[%s1 + $0x48] sm:$0xff]
          %v626 = vld [vmem:[%s1 + $0x50] sm:$0xff]
          %v627 = vld [vmem:[%s1 + $0x58] sm:$0xff]
          %v628 = vld [vmem:[%s1 + $0x60] sm:$0xff]
          %v629 = vld [vmem:[%s1 + $0x68] sm:$0xff]
          %v630 = vld [vmem:[%s1 + $0x70] sm:$0xff]
          %v631 = vld [vmem:[%s1 + $0x78] sm:$0xff]
          %v632 = vld [vmem:[#allocation7] sm:$0x3]
          %v634 = vperm.slane %v632, 0
          %v635 = vperm.slane %v632, 1
          %v639 = vsel %vm554, %v614, 0
          %v642 = vsel %vm554, %v615, 0
          %644 = vmatpush.msra.mxu0 0.0
          %645 = vmatpush.msra.mxu0 0.0
          %646 = vmatpush.msra.mxu0 0.0
          %647 = vmatpush.msra.mxu0 0.0
          %648 = vmatpush.msra.mxu0 0.0
          %649 = vmatpush.msra.mxu0 0.0
          %650 = vmatpush.msra.mxu0 0.0
          %651 = vmatpush.msra.mxu0 0.0
          %652 = vmatpush.msra.mxu0 %v630
          %653 = vmatpush.msra.mxu0 %v628
          %654 = vmatpush.msra.mxu0 %v626
          %655 = vmatpush.msra.mxu0 %v624
          %656 = vmatpush.msra.mxu0 %v622
          %657 = vmatpush.msra.mxu0 %v620
          %658 = vmatpush.msra.mxu0 %v618
          %659 = vmatpush.msra.mxu0 %v616
          %660 = vmatmul.f32.gmra.mxu0 %v639
          %v661 = vpop.f32.mrf.mxu0
          %v662 = vadd.f32 %v634, %v661
          %663 = vmatmul.f32.gmra.mxu0 %v642
          %v664 = vpop.f32.mrf.mxu0
          %v665 = vadd.f32 %v634, %v664
          %666 = vdwg.mxu0
          %667 = vmatpush.msra.mxu0 0.0
          %668 = vmatpush.msra.mxu0 0.0
          %669 = vmatpush.msra.mxu0 0.0
          %670 = vmatpush.msra.mxu0 0.0
          %671 = vmatpush.msra.mxu0 0.0
          %672 = vmatpush.msra.mxu0 0.0
          %673 = vmatpush.msra.mxu0 0.0
          %674 = vmatpush.msra.mxu0 0.0
          %675 = vmatpush.msra.mxu0 %v631
          %676 = vmatpush.msra.mxu0 %v629
          %677 = vmatpush.msra.mxu0 %v627
          %678 = vmatpush.msra.mxu0 %v625
          %679 = vmatpush.msra.mxu0 %v623
          %680 = vmatpush.msra.mxu0 %v621
          %681 = vmatpush.msra.mxu0 %v619
          %682 = vmatpush.msra.mxu0 %v617
          %683 = vmatmul.f32.gmra.mxu0 %v639
          %v684 = vpop.f32.mrf.mxu0
          %v685 = vadd.f32 %v635, %v684
          %686 = vmatmul.f32.gmra.mxu0 %v642
          %v687 = vpop.f32.mrf.mxu0
          %v688 = vadd.f32 %v635, %v687
          %689 = vdwg.mxu0
          %692 = vrot.lane.b32.xlu0 %v662, 112
          %v693 = vpop.permute.xlu0 %692
          %694 = vrot.lane.b32.xlu0 %v665, 112
          %v695 = vpop.permute.xlu0 %694
          %698 = vrot.lane.b32.xlu0 %v662, 96
          %v699 = vpop.permute.xlu0 %698
          %700 = vrot.lane.b32.xlu0 %v665, 96
          %v701 = vpop.permute.xlu0 %700
          %704 = vrot.lane.b32.xlu0 %v662, 80
          %v705 = vpop.permute.xlu0 %704
          %706 = vrot.lane.b32.xlu0 %v665, 80
          %v707 = vpop.permute.xlu0 %706
          %v710 = vrot.slane %v699, 4
          %vm711 = vcmask 1047556
          %v712 = vsel %vm711, %v710, %v662
          %v713 = vrot.slane %v662, 4
          %v714 = vsel %vm711, %v699, %v713
          %v716 = vunpack.c.l.s4 1983009808
          %v717 = vunpack.c.0.s8 %v716
          %v718 = vperm.slane %v712, %v717
          %v720 = vunpack.c.l.s4 1983009808
          %v721 = vunpack.c.0.s8 %v720
          %v722 = vperm.slane %v714, %v721
          %v723 = vrot.slane %v705, 4
          %v724 = vsel %vm711, %v723, %v693
          %v725 = vrot.slane %v693, 4
          %v726 = vsel %vm711, %v705, %v725
          %v728 = vunpack.c.l.s4 1983009808
          %v729 = vunpack.c.0.s8 %v728
          %v730 = vperm.slane %v724, %v729
          %v732 = vunpack.c.l.s4 1983009808
          %v733 = vunpack.c.0.s8 %v732
          %v734 = vperm.slane %v726, %v733
          %v735 = vrot.slane %v730, 4
          %v736 = vsel %vm711, %v735, %v718
          %v737 = vrot.slane %v718, 4
          %v738 = vsel %vm711, %v730, %v737
          %v740 = vunpack.c.l.s4 1934713408
          %v741 = vunpack.c.0.s8 %v740
          %v742 = vperm.slane %v736, %v741
          %v744 = vunpack.c.l.s4 1934713408
          %v745 = vunpack.c.0.s8 %v744
          %v746 = vperm.slane %v738, %v745
          %v747 = vrot.slane %v734, 4
          %v748 = vsel %vm711, %v747, %v722
          %v749 = vrot.slane %v722, 4
          %v750 = vsel %vm711, %v734, %v749
          %v752 = vunpack.c.l.s4 1934713408
          %v753 = vunpack.c.0.s8 %v752
          %v754 = vperm.slane %v748, %v753
          %v756 = vunpack.c.l.s4 1934713408
          %v757 = vunpack.c.0.s8 %v756
          %v758 = vperm.slane %v750, %v757
          %v759 = vrot.slane %v742, 4
          %v760 = vsel %vm711, 0.0, %v759
          %v761 = vrot.slane %v746, 4
          %v762 = vsel %vm711, 0.0, %v761
          %v763 = vrot.slane %v754, 4
          %v764 = vsel %vm711, 0.0, %v763
          %v765 = vrot.slane %v758, 4
          %v766 = vsel %vm711, 0.0, %v765
          %v767 = vrot.slane %v701, 4
          %v768 = vsel %vm711, %v767, %v665
          %v769 = vrot.slane %v665, 4
          %v770 = vsel %vm711, %v701, %v769
          %v772 = vunpack.c.l.s4 1983009808
          %v773 = vunpack.c.0.s8 %v772
          %v774 = vperm.slane %v768, %v773
          %v776 = vunpack.c.l.s4 1983009808
          %v777 = vunpack.c.0.s8 %v776
          %v778 = vperm.slane %v770, %v777
          %v779 = vrot.slane %v707, 4
          %v780 = vsel %vm711, %v779, %v695
          %v781 = vrot.slane %v695, 4
          %v782 = vsel %vm711, %v707, %v781
          %v784 = vunpack.c.l.s4 1983009808
          %v785 = vunpack.c.0.s8 %v784
          %v786 = vperm.slane %v780, %v785
          %v788 = vunpack.c.l.s4 1983009808
          %v789 = vunpack.c.0.s8 %v788
          %v790 = vperm.slane %v782, %v789
          %v791 = vrot.slane %v786, 4
          %v792 = vsel %vm711, %v791, %v774
          %v793 = vrot.slane %v774, 4
          %v794 = vsel %vm711, %v786, %v793
          %v796 = vunpack.c.l.s4 1934713408
          %v797 = vunpack.c.0.s8 %v796
          %v798 = vperm.slane %v792, %v797
          %v800 = vunpack.c.l.s4 1934713408
          %v801 = vunpack.c.0.s8 %v800
          %v802 = vperm.slane %v794, %v801
          %v803 = vrot.slane %v790, 4
          %v804 = vsel %vm711, %v803, %v778
          %v805 = vrot.slane %v778, 4
          %v806 = vsel %vm711, %v790, %v805
          %v808 = vunpack.c.l.s4 1934713408
          %v809 = vunpack.c.0.s8 %v808
          %v810 = vperm.slane %v804, %v809
          %v812 = vunpack.c.l.s4 1934713408
          %v813 = vunpack.c.0.s8 %v812
          %v814 = vperm.slane %v806, %v813
          %v815 = vrot.slane %v798, 4
          %v816 = vsel %vm711, 0.0, %v815
          %v817 = vrot.slane %v802, 4
          %v818 = vsel %vm711, 0.0, %v817
          %v819 = vrot.slane %v810, 4
          %v820 = vsel %vm711, 0.0, %v819
          %v821 = vrot.slane %v814, 4
          %v822 = vsel %vm711, 0.0, %v821
          %v823 = vsel %vm711, %v761, %v742
          %v825 = vunpack.c.l.s4 1983009808
          %v826 = vunpack.c.0.s8 %v825
          %v827 = vperm.slane %v823, %v826
          %v828 = vrot.slane %v762, 4
          %v829 = vsel %vm711, %v828, %v760
          %v831 = vunpack.c.l.s4 1983009808
          %v832 = vunpack.c.0.s8 %v831
          %v833 = vperm.slane %v829, %v832
          %v834 = vsel %vm711, %v765, %v754
          %v836 = vunpack.c.l.s4 1983009808
          %v837 = vunpack.c.0.s8 %v836
          %v838 = vperm.slane %v834, %v837
          %v839 = vrot.slane %v766, 4
          %v840 = vsel %vm711, %v839, %v764
          %v842 = vunpack.c.l.s4 1983009808
          %v843 = vunpack.c.0.s8 %v842
          %v844 = vperm.slane %v840, %v843
          %v845 = vrot.slane %v833, 4
          %v846 = vsel %vm711, %v845, %v827
          %v847 = vrot.slane %v827, 4
          %v848 = vsel %vm711, %v833, %v847
          %v850 = vunpack.c.l.s4 1934713408
          %v851 = vunpack.c.0.s8 %v850
          %v852 = vperm.slane %v846, %v851
          %v854 = vunpack.c.l.s4 1934713408
          %v855 = vunpack.c.0.s8 %v854
          %v856 = vperm.slane %v848, %v855
          %v857 = vrot.slane %v844, 4
          %v858 = vsel %vm711, %v857, %v838
          %v859 = vrot.slane %v838, 4
          %v860 = vsel %vm711, %v844, %v859
          %v862 = vunpack.c.l.s4 1934713408
          %v863 = vunpack.c.0.s8 %v862
          %v864 = vperm.slane %v858, %v863
          %v866 = vunpack.c.l.s4 1934713408
          %v867 = vunpack.c.0.s8 %v866
          %v868 = vperm.slane %v860, %v867
          %v869 = vrot.slane %v864, 4
          %v870 = vsel %vm711, %v869, %v852
          %v871 = vrot.slane %v852, 4
          %v872 = vsel %vm711, %v864, %v871
          %v873 = vrot.slane %v868, 4
          %v874 = vsel %vm711, %v873, %v856
          %v875 = vrot.slane %v856, 4
          %v876 = vsel %vm711, %v868, %v875
          %v877 = vsel %vm711, %v817, %v798
          %v879 = vunpack.c.l.s4 1983009808
          %v880 = vunpack.c.0.s8 %v879
          %v881 = vperm.slane %v877, %v880
          %v882 = vrot.slane %v818, 4
          %v883 = vsel %vm711, %v882, %v816
          %v885 = vunpack.c.l.s4 1983009808
          %v886 = vunpack.c.0.s8 %v885
          %v887 = vperm.slane %v883, %v886
          %v888 = vsel %vm711, %v821, %v810
          %v890 = vunpack.c.l.s4 1983009808
          %v891 = vunpack.c.0.s8 %v890
          %v892 = vperm.slane %v888, %v891
          %v893 = vrot.slane %v822, 4
          %v894 = vsel %vm711, %v893, %v820
          %v896 = vunpack.c.l.s4 1983009808
          %v897 = vunpack.c.0.s8 %v896
          %v898 = vperm.slane %v894, %v897
          %v899 = vrot.slane %v887, 4
          %v900 = vsel %vm711, %v899, %v881
          %v901 = vrot.slane %v881, 4
          %v902 = vsel %vm711, %v887, %v901
          %v904 = vunpack.c.l.s4 1934713408
          %v905 = vunpack.c.0.s8 %v904
          %v906 = vperm.slane %v900, %v905
          %v908 = vunpack.c.l.s4 1934713408
          %v909 = vunpack.c.0.s8 %v908
          %v910 = vperm.slane %v902, %v909
          %v911 = vrot.slane %v898, 4
          %v912 = vsel %vm711, %v911, %v892
          %v913 = vrot.slane %v892, 4
          %v914 = vsel %vm711, %v898, %v913
          %v916 = vunpack.c.l.s4 1934713408
          %v917 = vunpack.c.0.s8 %v916
          %v918 = vperm.slane %v912, %v917
          %v920 = vunpack.c.l.s4 1934713408
          %v921 = vunpack.c.0.s8 %v920
          %v922 = vperm.slane %v914, %v921
          %v923 = vrot.slane %v918, 4
          %v924 = vsel %vm711, %v923, %v906
          %v925 = vrot.slane %v906, 4
          %v926 = vsel %vm711, %v918, %v925
          %v927 = vrot.slane %v922, 4
          %v928 = vsel %vm711, %v927, %v910
          %v929 = vrot.slane %v910, 4
          %v930 = vsel %vm711, %v922, %v929
          %vm931 = vcmask 130048
          %932 = vst.msk [vmem:[#allocation2] sm:$0xff] %vm931, %v870
          %933 = vst.msk [vmem:[#allocation2 + $0x8] sm:$0xff] %vm931, %v924
          %934 = vst.msk [vmem:[#allocation2 + $0x10] sm:$0xff] %vm931, %v872
          %935 = vst.msk [vmem:[#allocation2 + $0x18] sm:$0xff] %vm931, %v926
          %936 = vst.msk [vmem:[#allocation2 + $0x20] sm:$0xff] %vm931, %v874
          %937 = vst.msk [vmem:[#allocation2 + $0x28] sm:$0xff] %vm931, %v928
          %938 = vst.msk [vmem:[#allocation2 + $0x30] sm:$0xff] %vm931, %v876
          %939 = vst.msk [vmem:[#allocation2 + $0x38] sm:$0xff] %vm931, %v930
          %940 = vrot.lane.b32.xlu0 %v662, 64
          %v941 = vpop.permute.xlu0 %940
          %942 = vrot.lane.b32.xlu0 %v665, 64
          %v943 = vpop.permute.xlu0 %942
          %944 = vrot.lane.b32.xlu0 %v693, 64
          %v945 = vpop.permute.xlu0 %944
          %946 = vrot.lane.b32.xlu0 %v695, 64
          %v947 = vpop.permute.xlu0 %946
          %948 = vrot.lane.b32.xlu0 %v699, 64
          %v949 = vpop.permute.xlu0 %948
          %950 = vrot.lane.b32.xlu0 %v701, 64
          %v951 = vpop.permute.xlu0 %950
          %952 = vrot.lane.b32.xlu0 %v705, 64
          %v953 = vpop.permute.xlu0 %952
          %954 = vrot.lane.b32.xlu0 %v707, 64
          %v955 = vpop.permute.xlu0 %954
          %v964 = vrot.slane %v949, 4
          %v965 = vsel %vm711, %v964, %v941
          %v966 = vrot.slane %v941, 4
          %v967 = vsel %vm711, %v949, %v966
          %v969 = vunpack.c.l.s4 1983009808
          %v970 = vunpack.c.0.s8 %v969
          %v971 = vperm.slane %v965, %v970
          %v973 = vunpack.c.l.s4 1983009808
          %v974 = vunpack.c.0.s8 %v973
          %v975 = vperm.slane %v967, %v974
          %v976 = vrot.slane %v953, 4
          %v977 = vsel %vm711, %v976, %v945
          %v978 = vrot.slane %v945, 4
          %v979 = vsel %vm711, %v953, %v978
          %v981 = vunpack.c.l.s4 1983009808
          %v982 = vunpack.c.0.s8 %v981
          %v983 = vperm.slane %v977, %v982
          %v985 = vunpack.c.l.s4 1983009808
          %v986 = vunpack.c.0.s8 %v985
          %v987 = vperm.slane %v979, %v986
          %v988 = vrot.slane %v983, 4
          %v989 = vsel %vm711, %v988, %v971
          %v990 = vrot.slane %v971, 4
          %v991 = vsel %vm711, %v983, %v990
          %v993 = vunpack.c.l.s4 1934713408
          %v994 = vunpack.c.0.s8 %v993
          %v995 = vperm.slane %v989, %v994
          %v997 = vunpack.c.l.s4 1934713408
          %v998 = vunpack.c.0.s8 %v997
          %v999 = vperm.slane %v991, %v998
          %v1000 = vrot.slane %v987, 4
          %v1001 = vsel %vm711, %v1000, %v975
          %v1002 = vrot.slane %v975, 4
          %v1003 = vsel %vm711, %v987, %v1002
          %v1005 = vunpack.c.l.s4 1934713408
          %v1006 = vunpack.c.0.s8 %v1005
          %v1007 = vperm.slane %v1001, %v1006
          %v1009 = vunpack.c.l.s4 1934713408
          %v1010 = vunpack.c.0.s8 %v1009
          %v1011 = vperm.slane %v1003, %v1010
          %v1012 = vrot.slane %v995, 4
          %v1013 = vsel %vm711, 0.0, %v1012
          %v1014 = vrot.slane %v999, 4
          %v1015 = vsel %vm711, 0.0, %v1014
          %v1016 = vrot.slane %v1007, 4
          %v1017 = vsel %vm711, 0.0, %v1016
          %v1018 = vrot.slane %v1011, 4
          %v1019 = vsel %vm711, 0.0, %v1018
          %v1020 = vrot.slane %v951, 4
          %v1021 = vsel %vm711, %v1020, %v943
          %v1022 = vrot.slane %v943, 4
          %v1023 = vsel %vm711, %v951, %v1022
          %v1025 = vunpack.c.l.s4 1983009808
          %v1026 = vunpack.c.0.s8 %v1025
          %v1027 = vperm.slane %v1021, %v1026
          %v1029 = vunpack.c.l.s4 1983009808
          %v1030 = vunpack.c.0.s8 %v1029
          %v1031 = vperm.slane %v1023, %v1030
          %v1032 = vrot.slane %v955, 4
          %v1033 = vsel %vm711, %v1032, %v947
          %v1034 = vrot.slane %v947, 4
          %v1035 = vsel %vm711, %v955, %v1034
          %v1037 = vunpack.c.l.s4 1983009808
          %v1038 = vunpack.c.0.s8 %v1037
          %v1039 = vperm.slane %v1033, %v1038
          %v1041 = vunpack.c.l.s4 1983009808
          %v1042 = vunpack.c.0.s8 %v1041
          %v1043 = vperm.slane %v1035, %v1042
          %v1044 = vrot.slane %v1039, 4
          %v1045 = vsel %vm711, %v1044, %v1027
          %v1046 = vrot.slane %v1027, 4
          %v1047 = vsel %vm711, %v1039, %v1046
          %v1049 = vunpack.c.l.s4 1934713408
          %v1050 = vunpack.c.0.s8 %v1049
          %v1051 = vperm.slane %v1045, %v1050
          %v1053 = vunpack.c.l.s4 1934713408
          %v1054 = vunpack.c.0.s8 %v1053
          %v1055 = vperm.slane %v1047, %v1054
          %v1056 = vrot.slane %v1043, 4
          %v1057 = vsel %vm711, %v1056, %v1031
          %v1058 = vrot.slane %v1031, 4
          %v1059 = vsel %vm711, %v1043, %v1058
          %v1061 = vunpack.c.l.s4 1934713408
          %v1062 = vunpack.c.0.s8 %v1061
          %v1063 = vperm.slane %v1057, %v1062
          %v1065 = vunpack.c.l.s4 1934713408
          %v1066 = vunpack.c.0.s8 %v1065
          %v1067 = vperm.slane %v1059, %v1066
          %v1068 = vrot.slane %v1051, 4
          %v1069 = vsel %vm711, 0.0, %v1068
          %v1070 = vrot.slane %v1055, 4
          %v1071 = vsel %vm711, 0.0, %v1070
          %v1072 = vrot.slane %v1063, 4
          %v1073 = vsel %vm711, 0.0, %v1072
          %v1074 = vrot.slane %v1067, 4
          %v1075 = vsel %vm711, 0.0, %v1074
          %v1076 = vsel %vm711, %v1014, %v995
          %v1078 = vunpack.c.l.s4 1983009808
          %v1079 = vunpack.c.0.s8 %v1078
          %v1080 = vperm.slane %v1076, %v1079
          %v1081 = vrot.slane %v1015, 4
          %v1082 = vsel %vm711, %v1081, %v1013
          %v1084 = vunpack.c.l.s4 1983009808
          %v1085 = vunpack.c.0.s8 %v1084
          %v1086 = vperm.slane %v1082, %v1085
          %v1087 = vsel %vm711, %v1018, %v1007
          %v1089 = vunpack.c.l.s4 1983009808
          %v1090 = vunpack.c.0.s8 %v1089
          %v1091 = vperm.slane %v1087, %v1090
          %v1092 = vrot.slane %v1019, 4
          %v1093 = vsel %vm711, %v1092, %v1017
          %v1095 = vunpack.c.l.s4 1983009808
          %v1096 = vunpack.c.0.s8 %v1095
          %v1097 = vperm.slane %v1093, %v1096
          %v1098 = vrot.slane %v1086, 4
          %v1099 = vsel %vm711, %v1098, %v1080
          %v1100 = vrot.slane %v1080, 4
          %v1101 = vsel %vm711, %v1086, %v1100
          %v1103 = vunpack.c.l.s4 1934713408
          %v1104 = vunpack.c.0.s8 %v1103
          %v1105 = vperm.slane %v1099, %v1104
          %v1107 = vunpack.c.l.s4 1934713408
          %v1108 = vunpack.c.0.s8 %v1107
          %v1109 = vperm.slane %v1101, %v1108
          %v1110 = vrot.slane %v1097, 4
          %v1111 = vsel %vm711, %v1110, %v1091
          %v1112 = vrot.slane %v1091, 4
          %v1113 = vsel %vm711, %v1097, %v1112
          %v1115 = vunpack.c.l.s4 1934713408
          %v1116 = vunpack.c.0.s8 %v1115
          %v1117 = vperm.slane %v1111, %v1116
          %v1119 = vunpack.c.l.s4 1934713408
          %v1120 = vunpack.c.0.s8 %v1119
          %v1121 = vperm.slane %v1113, %v1120
          %v1122 = vrot.slane %v1117, 4
          %v1123 = vsel %vm711, %v1122, %v1105
          %v1124 = vrot.slane %v1105, 4
          %v1125 = vsel %vm711, %v1117, %v1124
          %v1126 = vrot.slane %v1121, 4
          %v1127 = vsel %vm711, %v1126, %v1109
          %v1128 = vrot.slane %v1109, 4
          %v1129 = vsel %vm711, %v1121, %v1128
          %v1130 = vsel %vm711, %v1070, %v1051
          %v1132 = vunpack.c.l.s4 1983009808
          %v1133 = vunpack.c.0.s8 %v1132
          %v1134 = vperm.slane %v1130, %v1133
          %v1135 = vrot.slane %v1071, 4
          %v1136 = vsel %vm711, %v1135, %v1069
          %v1138 = vunpack.c.l.s4 1983009808
          %v1139 = vunpack.c.0.s8 %v1138
          %v1140 = vperm.slane %v1136, %v1139
          %v1141 = vsel %vm711, %v1074, %v1063
          %v1143 = vunpack.c.l.s4 1983009808
          %v1144 = vunpack.c.0.s8 %v1143
          %v1145 = vperm.slane %v1141, %v1144
          %v1146 = vrot.slane %v1075, 4
          %v1147 = vsel %vm711, %v1146, %v1073
          %v1149 = vunpack.c.l.s4 1983009808
          %v1150 = vunpack.c.0.s8 %v1149
          %v1151 = vperm.slane %v1147, %v1150
          %v1152 = vrot.slane %v1140, 4
          %v1153 = vsel %vm711, %v1152, %v1134
          %v1154 = vrot.slane %v1134, 4
          %v1155 = vsel %vm711, %v1140, %v1154
          %v1157 = vunpack.c.l.s4 1934713408
          %v1158 = vunpack.c.0.s8 %v1157
          %v1159 = vperm.slane %v1153, %v1158
          %v1161 = vunpack.c.l.s4 1934713408
          %v1162 = vunpack.c.0.s8 %v1161
          %v1163 = vperm.slane %v1155, %v1162
          %v1164 = vrot.slane %v1151, 4
          %v1165 = vsel %vm711, %v1164, %v1145
          %v1166 = vrot.slane %v1145, 4
          %v1167 = vsel %vm711, %v1151, %v1166
          %v1169 = vunpack.c.l.s4 1934713408
          %v1170 = vunpack.c.0.s8 %v1169
          %v1171 = vperm.slane %v1165, %v1170
          %v1173 = vunpack.c.l.s4 1934713408
          %v1174 = vunpack.c.0.s8 %v1173
          %v1175 = vperm.slane %v1167, %v1174
          %v1176 = vrot.slane %v1171, 4
          %v1177 = vsel %vm711, %v1176, %v1159
          %v1178 = vrot.slane %v1159, 4
          %v1179 = vsel %vm711, %v1171, %v1178
          %v1180 = vrot.slane %v1175, 4
          %v1181 = vsel %vm711, %v1180, %v1163
          %v1182 = vrot.slane %v1163, 4
          %v1183 = vsel %vm711, %v1175, %v1182
          %1184 = vst.msk [vmem:[#allocation3] sm:$0xff] %vm931, %v1123
          %1185 = vst.msk [vmem:[#allocation3 + $0x8] sm:$0xff] %vm931, %v1177
          %1186 = vst.msk [vmem:[#allocation3 + $0x10] sm:$0xff] %vm931, %v1125
          %1187 = vst.msk [vmem:[#allocation3 + $0x18] sm:$0xff] %vm931, %v1179
          %1188 = vst.msk [vmem:[#allocation3 + $0x20] sm:$0xff] %vm931, %v1127
          %1189 = vst.msk [vmem:[#allocation3 + $0x28] sm:$0xff] %vm931, %v1181
          %1190 = vst.msk [vmem:[#allocation3 + $0x30] sm:$0xff] %vm931, %v1129
          %1191 = vst.msk [vmem:[#allocation3 + $0x38] sm:$0xff] %vm931, %v1183
          %1194 = vrot.lane.b32.xlu0 %v685, 112
          %v1195 = vpop.permute.xlu0 %1194
          %1196 = vrot.lane.b32.xlu0 %v688, 112
          %v1197 = vpop.permute.xlu0 %1196
          %1200 = vrot.lane.b32.xlu0 %v685, 96
          %v1201 = vpop.permute.xlu0 %1200
          %1202 = vrot.lane.b32.xlu0 %v688, 96
          %v1203 = vpop.permute.xlu0 %1202
          %1206 = vrot.lane.b32.xlu0 %v685, 80
          %v1207 = vpop.permute.xlu0 %1206
          %1208 = vrot.lane.b32.xlu0 %v688, 80
          %v1209 = vpop.permute.xlu0 %1208
          %v1212 = vrot.slane %v1201, 4
          %v1213 = vsel %vm711, %v1212, %v685
          %v1214 = vrot.slane %v685, 4
          %v1215 = vsel %vm711, %v1201, %v1214
          %v1217 = vunpack.c.l.s4 1983009808
          %v1218 = vunpack.c.0.s8 %v1217
          %v1219 = vperm.slane %v1213, %v1218
          %v1221 = vunpack.c.l.s4 1983009808
          %v1222 = vunpack.c.0.s8 %v1221
          %v1223 = vperm.slane %v1215, %v1222
          %v1224 = vrot.slane %v1207, 4
          %v1225 = vsel %vm711, %v1224, %v1195
          %v1226 = vrot.slane %v1195, 4
          %v1227 = vsel %vm711, %v1207, %v1226
          %v1229 = vunpack.c.l.s4 1983009808
          %v1230 = vunpack.c.0.s8 %v1229
          %v1231 = vperm.slane %v1225, %v1230
          %v1233 = vunpack.c.l.s4 1983009808
          %v1234 = vunpack.c.0.s8 %v1233
          %v1235 = vperm.slane %v1227, %v1234
          %v1236 = vrot.slane %v1231, 4
          %v1237 = vsel %vm711, %v1236, %v1219
          %v1238 = vrot.slane %v1219, 4
          %v1239 = vsel %vm711, %v1231, %v1238
          %v1241 = vunpack.c.l.s4 1934713408
          %v1242 = vunpack.c.0.s8 %v1241
          %v1243 = vperm.slane %v1237, %v1242
          %v1245 = vunpack.c.l.s4 1934713408
          %v1246 = vunpack.c.0.s8 %v1245
          %v1247 = vperm.slane %v1239, %v1246
          %v1248 = vrot.slane %v1235, 4
          %v1249 = vsel %vm711, %v1248, %v1223
          %v1250 = vrot.slane %v1223, 4
          %v1251 = vsel %vm711, %v1235, %v1250
          %v1253 = vunpack.c.l.s4 1934713408
          %v1254 = vunpack.c.0.s8 %v1253
          %v1255 = vperm.slane %v1249, %v1254
          %v1257 = vunpack.c.l.s4 1934713408
          %v1258 = vunpack.c.0.s8 %v1257
          %v1259 = vperm.slane %v1251, %v1258
          %v1260 = vrot.slane %v1243, 4
          %v1261 = vsel %vm711, 0.0, %v1260
          %v1262 = vrot.slane %v1247, 4
          %v1263 = vsel %vm711, 0.0, %v1262
          %v1264 = vrot.slane %v1255, 4
          %v1265 = vsel %vm711, 0.0, %v1264
          %v1266 = vrot.slane %v1259, 4
          %v1267 = vsel %vm711, 0.0, %v1266
          %v1268 = vrot.slane %v1203, 4
          %v1269 = vsel %vm711, %v1268, %v688
          %v1270 = vrot.slane %v688, 4
          %v1271 = vsel %vm711, %v1203, %v1270
          %v1273 = vunpack.c.l.s4 1983009808
          %v1274 = vunpack.c.0.s8 %v1273
          %v1275 = vperm.slane %v1269, %v1274
          %v1277 = vunpack.c.l.s4 1983009808
          %v1278 = vunpack.c.0.s8 %v1277
          %v1279 = vperm.slane %v1271, %v1278
          %v1280 = vrot.slane %v1209, 4
          %v1281 = vsel %vm711, %v1280, %v1197
          %v1282 = vrot.slane %v1197, 4
          %v1283 = vsel %vm711, %v1209, %v1282
          %v1285 = vunpack.c.l.s4 1983009808
          %v1286 = vunpack.c.0.s8 %v1285
          %v1287 = vperm.slane %v1281, %v1286
          %v1289 = vunpack.c.l.s4 1983009808
          %v1290 = vunpack.c.0.s8 %v1289
          %v1291 = vperm.slane %v1283, %v1290
          %v1292 = vrot.slane %v1287, 4
          %v1293 = vsel %vm711, %v1292, %v1275
          %v1294 = vrot.slane %v1275, 4
          %v1295 = vsel %vm711, %v1287, %v1294
          %v1297 = vunpack.c.l.s4 1934713408
          %v1298 = vunpack.c.0.s8 %v1297
          %v1299 = vperm.slane %v1293, %v1298
          %v1301 = vunpack.c.l.s4 1934713408
          %v1302 = vunpack.c.0.s8 %v1301
          %v1303 = vperm.slane %v1295, %v1302
          %v1304 = vrot.slane %v1291, 4
          %v1305 = vsel %vm711, %v1304, %v1279
          %v1306 = vrot.slane %v1279, 4
          %v1307 = vsel %vm711, %v1291, %v1306
          %v1309 = vunpack.c.l.s4 1934713408
          %v1310 = vunpack.c.0.s8 %v1309
          %v1311 = vperm.slane %v1305, %v1310
          %v1313 = vunpack.c.l.s4 1934713408
          %v1314 = vunpack.c.0.s8 %v1313
          %v1315 = vperm.slane %v1307, %v1314
          %v1316 = vrot.slane %v1299, 4
          %v1317 = vsel %vm711, 0.0, %v1316
          %v1318 = vrot.slane %v1303, 4
          %v1319 = vsel %vm711, 0.0, %v1318
          %v1320 = vrot.slane %v1311, 4
          %v1321 = vsel %vm711, 0.0, %v1320
          %v1322 = vrot.slane %v1315, 4
          %v1323 = vsel %vm711, 0.0, %v1322
          %v1324 = vsel %vm711, %v1262, %v1243
          %v1326 = vunpack.c.l.s4 1983009808
          %v1327 = vunpack.c.0.s8 %v1326
          %v1328 = vperm.slane %v1324, %v1327
          %v1329 = vrot.slane %v1263, 4
          %v1330 = vsel %vm711, %v1329, %v1261
          %v1332 = vunpack.c.l.s4 1983009808
          %v1333 = vunpack.c.0.s8 %v1332
          %v1334 = vperm.slane %v1330, %v1333
          %v1335 = vsel %vm711, %v1266, %v1255
          %v1337 = vunpack.c.l.s4 1983009808
          %v1338 = vunpack.c.0.s8 %v1337
          %v1339 = vperm.slane %v1335, %v1338
          %v1340 = vrot.slane %v1267, 4
          %v1341 = vsel %vm711, %v1340, %v1265
          %v1343 = vunpack.c.l.s4 1983009808
          %v1344 = vunpack.c.0.s8 %v1343
          %v1345 = vperm.slane %v1341, %v1344
          %v1346 = vrot.slane %v1334, 4
          %v1347 = vsel %vm711, %v1346, %v1328
          %v1348 = vrot.slane %v1328, 4
          %v1349 = vsel %vm711, %v1334, %v1348
          %v1351 = vunpack.c.l.s4 1934713408
          %v1352 = vunpack.c.0.s8 %v1351
          %v1353 = vperm.slane %v1347, %v1352
          %v1355 = vunpack.c.l.s4 1934713408
          %v1356 = vunpack.c.0.s8 %v1355
          %v1357 = vperm.slane %v1349, %v1356
          %v1358 = vrot.slane %v1345, 4
          %v1359 = vsel %vm711, %v1358, %v1339
          %v1360 = vrot.slane %v1339, 4
          %v1361 = vsel %vm711, %v1345, %v1360
          %v1363 = vunpack.c.l.s4 1934713408
          %v1364 = vunpack.c.0.s8 %v1363
          %v1365 = vperm.slane %v1359, %v1364
          %v1367 = vunpack.c.l.s4 1934713408
          %v1368 = vunpack.c.0.s8 %v1367
          %v1369 = vperm.slane %v1361, %v1368
          %v1370 = vrot.slane %v1365, 4
          %v1371 = vsel %vm711, %v1370, %v1353
          %v1372 = vrot.slane %v1353, 4
          %v1373 = vsel %vm711, %v1365, %v1372
          %v1374 = vrot.slane %v1369, 4
          %v1375 = vsel %vm711, %v1374, %v1357
          %v1376 = vrot.slane %v1357, 4
          %v1377 = vsel %vm711, %v1369, %v1376
          %v1378 = vsel %vm711, %v1318, %v1299
          %v1380 = vunpack.c.l.s4 1983009808
          %v1381 = vunpack.c.0.s8 %v1380
          %v1382 = vperm.slane %v1378, %v1381
          %v1383 = vrot.slane %v1319, 4
          %v1384 = vsel %vm711, %v1383, %v1317
          %v1386 = vunpack.c.l.s4 1983009808
          %v1387 = vunpack.c.0.s8 %v1386
          %v1388 = vperm.slane %v1384, %v1387
          %v1389 = vsel %vm711, %v1322, %v1311
          %v1391 = vunpack.c.l.s4 1983009808
          %v1392 = vunpack.c.0.s8 %v1391
          %v1393 = vperm.slane %v1389, %v1392
          %v1394 = vrot.slane %v1323, 4
          %v1395 = vsel %vm711, %v1394, %v1321
          %v1397 = vunpack.c.l.s4 1983009808
          %v1398 = vunpack.c.0.s8 %v1397
          %v1399 = vperm.slane %v1395, %v1398
          %v1400 = vrot.slane %v1388, 4
          %v1401 = vsel %vm711, %v1400, %v1382
          %v1402 = vrot.slane %v1382, 4
          %v1403 = vsel %vm711, %v1388, %v1402
          %v1405 = vunpack.c.l.s4 1934713408
          %v1406 = vunpack.c.0.s8 %v1405
          %v1407 = vperm.slane %v1401, %v1406
          %v1409 = vunpack.c.l.s4 1934713408
          %v1410 = vunpack.c.0.s8 %v1409
          %v1411 = vperm.slane %v1403, %v1410
          %v1412 = vrot.slane %v1399, 4
          %v1413 = vsel %vm711, %v1412, %v1393
          %v1414 = vrot.slane %v1393, 4
          %v1415 = vsel %vm711, %v1399, %v1414
          %v1417 = vunpack.c.l.s4 1934713408
          %v1418 = vunpack.c.0.s8 %v1417
          %v1419 = vperm.slane %v1413, %v1418
          %v1421 = vunpack.c.l.s4 1934713408
          %v1422 = vunpack.c.0.s8 %v1421
          %v1423 = vperm.slane %v1415, %v1422
          %v1424 = vrot.slane %v1419, 4
          %v1425 = vsel %vm711, %v1424, %v1407
          %v1426 = vrot.slane %v1407, 4
          %v1427 = vsel %vm711, %v1419, %v1426
          %v1428 = vrot.slane %v1423, 4
          %v1429 = vsel %vm711, %v1428, %v1411
          %v1430 = vrot.slane %v1411, 4
          %v1431 = vsel %vm711, %v1423, %v1430
          %s1432 = scalar_lea.vmem [#allocation3], 64
          %1433 = vst.msk [vmem:[%s1432] sm:$0xff] %vm931, %v1371
          %1434 = vst.msk [vmem:[%s1432 + $0x8] sm:$0xff] %vm931, %v1425
          %1435 = vst.msk [vmem:[%s1432 + $0x10] sm:$0xff] %vm931, %v1373
          %1436 = vst.msk [vmem:[%s1432 + $0x18] sm:$0xff] %vm931, %v1427
          %1437 = vst.msk [vmem:[%s1432 + $0x20] sm:$0xff] %vm931, %v1375
          %1438 = vst.msk [vmem:[%s1432 + $0x28] sm:$0xff] %vm931, %v1429
          %1439 = vst.msk [vmem:[%s1432 + $0x30] sm:$0xff] %vm931, %v1377
          %1440 = vst.msk [vmem:[%s1432 + $0x38] sm:$0xff] %vm931, %v1431
        $region88: #{tpu_custom_call.1} parent=71 // pred_fallthru
          _
        %s1441 = smul.u32 %s41, 8
        %s1442 = scalar_lea.vmem [#allocation2], %s1441
        %v1443 = vld [vmem:[%s1442] sm:$0xff]
        %v1444 = vld [vmem:[%s1442 + $0x10] sm:$0xff]
        %v1445 = vld [vmem:[%s1442 + $0x20] sm:$0xff]
        %v1446 = vld [vmem:[%s1442 + $0x30] sm:$0xff]
        %v1447 = vld [vmem:[#allocation3] sm:$0xff]
        %v1448 = vld [vmem:[#allocation3 + $0x8] sm:$0xff]
        %v1449 = vld [vmem:[#allocation3 + $0x10] sm:$0xff]
        %v1450 = vld [vmem:[#allocation3 + $0x18] sm:$0xff]
        %v1451 = vld [vmem:[#allocation3 + $0x20] sm:$0xff]
        %v1452 = vld [vmem:[#allocation3 + $0x28] sm:$0xff]
        %v1453 = vld [vmem:[#allocation3 + $0x30] sm:$0xff]
        %v1454 = vld [vmem:[#allocation3 + $0x38] sm:$0xff]
        %s1455 = scalar_lea.vmem [#allocation3], 64
        %v1456 = vld [vmem:[%s1455] sm:$0xff]
        %v1457 = vld [vmem:[%s1455 + $0x8] sm:$0xff]
        %v1458 = vld [vmem:[%s1455 + $0x10] sm:$0xff]
        %v1459 = vld [vmem:[%s1455 + $0x18] sm:$0xff]
        %v1460 = vld [vmem:[%s1455 + $0x20] sm:$0xff]
        %v1461 = vld [vmem:[%s1455 + $0x28] sm:$0xff]
        %v1462 = vld [vmem:[%s1455 + $0x30] sm:$0xff]
        %v1463 = vld [vmem:[%s1455 + $0x38] sm:$0xff]
        %vm1464 = vcmask 130048
        %v1466 = vsel %vm1464, %v1443, 0
        %v1469 = vsel %vm1464, %v1447, 0
        %v1472 = vsel %vm1464, %v1448, 0
        %1474 = vmatpush.xpose.msra.mxu0 0.0
        %1475 = vmatpush.xpose.msra.mxu0 0.0
        %1476 = vmatpush.xpose.msra.mxu0 0.0
        %1477 = vmatpush.xpose.msra.mxu0 0.0
        %1478 = vmatpush.xpose.msra.mxu0 0.0
        %1479 = vmatpush.xpose.msra.mxu0 0.0
        %1480 = vmatpush.xpose.msra.mxu0 0.0
        %1481 = vmatpush.xpose.msra.mxu0 0.0
        %1482 = vmatpush.xpose.msra.mxu0 0.0
        %1483 = vmatpush.xpose.msra.mxu0 0.0
        %1484 = vmatpush.xpose.msra.mxu0 0.0
        %1485 = vmatpush.xpose.msra.mxu0 0.0
        %1486 = vmatpush.xpose.msra.mxu0 0.0
        %1487 = vmatpush.xpose.msra.mxu0 0.0
        %1488 = vmatpush.xpose.msra.mxu0 %v1472
        %1489 = vmatpush.xpose.msra.mxu0 %v1469
        %1490 = vmatmul.f32.gmra.mxu0 %v1466
        %v1491 = vpop.f32.mrf.mxu0
        %v1492 = vadd.f32 0.0, %v1491
        %1493 = vdwg.mxu0
        %v1495 = vsel %vm1464, %v1444, 0
        %v1498 = vsel %vm1464, %v1449, 0
        %v1501 = vsel %vm1464, %v1450, 0
        %1503 = vmatpush.xpose.msra.mxu0 0.0
        %1504 = vmatpush.xpose.msra.mxu0 0.0
        %1505 = vmatpush.xpose.msra.mxu0 0.0
        %1506 = vmatpush.xpose.msra.mxu0 0.0
        %1507 = vmatpush.xpose.msra.mxu0 0.0
        %1508 = vmatpush.xpose.msra.mxu0 0.0
        %1509 = vmatpush.xpose.msra.mxu0 0.0
        %1510 = vmatpush.xpose.msra.mxu0 0.0
        %1511 = vmatpush.xpose.msra.mxu0 0.0
        %1512 = vmatpush.xpose.msra.mxu0 0.0
        %1513 = vmatpush.xpose.msra.mxu0 0.0
        %1514 = vmatpush.xpose.msra.mxu0 0.0
        %1515 = vmatpush.xpose.msra.mxu0 0.0
        %1516 = vmatpush.xpose.msra.mxu0 0.0
        %1517 = vmatpush.xpose.msra.mxu0 %v1501
        %1518 = vmatpush.xpose.msra.mxu0 %v1498
        %1519 = vmatmul.f32.gmra.mxu0 %v1495
        %v1520 = vpop.f32.mrf.mxu0
        %v1521 = vadd.f32 0.0, %v1520
        %1522 = vdwg.mxu0
        %v1524 = vsel %vm1464, %v1445, 0
        %v1527 = vsel %vm1464, %v1451, 0
        %v1530 = vsel %vm1464, %v1452, 0
        %1532 = vmatpush.xpose.msra.mxu0 0.0
        %1533 = vmatpush.xpose.msra.mxu0 0.0
        %1534 = vmatpush.xpose.msra.mxu0 0.0
        %1535 = vmatpush.xpose.msra.mxu0 0.0
        %1536 = vmatpush.xpose.msra.mxu0 0.0
        %1537 = vmatpush.xpose.msra.mxu0 0.0
        %1538 = vmatpush.xpose.msra.mxu0 0.0
        %1539 = vmatpush.xpose.msra.mxu0 0.0
        %1540 = vmatpush.xpose.msra.mxu0 0.0
        %1541 = vmatpush.xpose.msra.mxu0 0.0
        %1542 = vmatpush.xpose.msra.mxu0 0.0
        %1543 = vmatpush.xpose.msra.mxu0 0.0
        %1544 = vmatpush.xpose.msra.mxu0 0.0
        %1545 = vmatpush.xpose.msra.mxu0 0.0
        %1546 = vmatpush.xpose.msra.mxu0 %v1530
        %1547 = vmatpush.xpose.msra.mxu0 %v1527
        %1548 = vmatmul.f32.gmra.mxu0 %v1524
        %v1549 = vpop.f32.mrf.mxu0
        %v1550 = vadd.f32 0.0, %v1549
        %1551 = vdwg.mxu0
        %v1553 = vsel %vm1464, %v1446, 0
        %v1556 = vsel %vm1464, %v1453, 0
        %v1559 = vsel %vm1464, %v1454, 0
        %1561 = vmatpush.xpose.msra.mxu0 0.0
        %1562 = vmatpush.xpose.msra.mxu0 0.0
        %1563 = vmatpush.xpose.msra.mxu0 0.0
        %1564 = vmatpush.xpose.msra.mxu0 0.0
        %1565 = vmatpush.xpose.msra.mxu0 0.0
        %1566 = vmatpush.xpose.msra.mxu0 0.0
        %1567 = vmatpush.xpose.msra.mxu0 0.0
        %1568 = vmatpush.xpose.msra.mxu0 0.0
        %1569 = vmatpush.xpose.msra.mxu0 0.0
        %1570 = vmatpush.xpose.msra.mxu0 0.0
        %1571 = vmatpush.xpose.msra.mxu0 0.0
        %1572 = vmatpush.xpose.msra.mxu0 0.0
        %1573 = vmatpush.xpose.msra.mxu0 0.0
        %1574 = vmatpush.xpose.msra.mxu0 0.0
        %1575 = vmatpush.xpose.msra.mxu0 %v1559
        %1576 = vmatpush.xpose.msra.mxu0 %v1556
        %1577 = vmatmul.f32.gmra.mxu0 %v1553
        %v1578 = vpop.f32.mrf.mxu0
        %v1579 = vadd.f32 0.0, %v1578
        %1580 = vdwg.mxu0
        %v1581 = vsel %vm1464, %v1492, -inf
        %1582 = vmax.xlane.f32.xlu0 %v1581
        %v1583 = vpop.xlane.xlu0 %1582
        %v1584 = vsel %vm1464, %v1521, -inf
        %1585 = vmax.xlane.f32.xlu0 %v1584
        %v1586 = vpop.xlane.xlu0 %1585
        %v1587 = vsel %vm1464, %v1550, -inf
        %1588 = vmax.xlane.f32.xlu0 %v1587
        %v1589 = vpop.xlane.xlu0 %1588
        %v1590 = vsel %vm1464, %v1579, -inf
        %1591 = vmax.xlane.f32.xlu0 %v1590
        %v1592 = vpop.xlane.xlu0 %1591
        %v1593 = vsub.f32 %v1492, %v1583
        %v1594 = vsub.f32 %v1521, %v1586
        %v1595 = vsub.f32 %v1550, %v1589
        %v1596 = vsub.f32 %v1579, %v1592
        %v1597 = vmul.f32 %v1593, 1.442695
        %v1598 = vpow.pop %v1597
        %v1599 = vmul.f32 %v1594, 1.442695
        %v1600 = vpow.pop %v1599
        %v1601 = vmul.f32 %v1595, 1.442695
        %v1602 = vpow.pop %v1601
        %v1603 = vmul.f32 %v1596, 1.442695
        %v1604 = vpow.pop %v1603
        %v1605 = vsel %vm1464, %v1598, 0.0
        %1606 = vadd.xlane.f32.xlu0 %v1605
        %v1607 = vpop.xlane.xlu0 %1606
        %v1608 = vsel %vm1464, %v1600, 0.0
        %1609 = vadd.xlane.f32.xlu0 %v1608
        %v1610 = vpop.xlane.xlu0 %1609
        %v1611 = vsel %vm1464, %v1602, 0.0
        %1612 = vadd.xlane.f32.xlu0 %v1611
        %v1613 = vpop.xlane.xlu0 %1612
        %v1614 = vsel %vm1464, %v1604, 0.0
        %1615 = vadd.xlane.f32.xlu0 %v1614
        %v1616 = vpop.xlane.xlu0 %1615
        %v1617 = vrcp.pop %v1607
        %v1618 = vrcp.pop %v1610
        %v1619 = vrcp.pop %v1613
        %v1620 = vrcp.pop %v1616
        %v1621 = vmul.f32 %v1607, %v1617
        %v1622 = vmul.f32 %v1610, %v1618
        %v1623 = vmul.f32 %v1613, %v1619
        %v1624 = vmul.f32 %v1616, %v1620
        %v1625 = vsub.f32 2.0, %v1621
        %v1626 = vsub.f32 2.0, %v1622
        %v1627 = vsub.f32 2.0, %v1623
        %v1628 = vsub.f32 2.0, %v1624
        %v1629 = vmul.f32 %v1617, %v1625
        %v1630 = vmul.f32 %v1618, %v1626
        %v1631 = vmul.f32 %v1619, %v1627
        %v1632 = vmul.f32 %v1620, %v1628
        %v1633 = vmul.f32 %v1598, %v1629
        %v1634 = vmul.f32 %v1600, %v1630
        %v1635 = vmul.f32 %v1602, %v1631
        %v1636 = vmul.f32 %v1604, %v1632
        %1637 = vst.msk [vmem:[%s545] sm:$0xff] %vm1464, %v1633
        %1638 = vst.msk [vmem:[%s545 + $0x8] sm:$0xff] %vm1464, %v1634
        %1639 = vst.msk [vmem:[%s545 + $0x10] sm:$0xff] %vm1464, %v1635
        %1640 = vst.msk [vmem:[%s545 + $0x18] sm:$0xff] %vm1464, %v1636
        %v1642 = vsel %vm1464, %v1633, 0
        %1644 = vmatpush.msra.mxu0 0.0
        %1645 = vmatpush.msra.mxu0 0.0
        %1646 = vmatpush.msra.mxu0 0.0
        %1647 = vmatpush.msra.mxu0 0.0
        %1648 = vmatpush.msra.mxu0 0.0
        %1649 = vmatpush.msra.mxu0 0.0
        %1650 = vmatpush.msra.mxu0 0.0
        %1651 = vmatpush.msra.mxu0 0.0
        %1652 = vmatpush.msra.mxu0 0.0
        %1653 = vmatpush.msra.mxu0 0.0
        %1654 = vmatpush.msra.mxu0 0.0
        %1655 = vmatpush.msra.mxu0 0.0
        %1656 = vmatpush.msra.mxu0 0.0
        %1657 = vmatpush.msra.mxu0 0.0
        %1658 = vmatpush.msra.mxu0 %v1457
        %1659 = vmatpush.msra.mxu0 %v1456
        %1660 = vmatmul.f32.gmra.mxu0 %v1642
        %v1661 = vpop.f32.mrf.mxu0
        %v1662 = vadd.f32 0.0, %v1661
        %1663 = vdwg.mxu0
        %v1665 = vsel %vm1464, %v1634, 0
        %1667 = vmatpush.msra.mxu0 0.0
        %1668 = vmatpush.msra.mxu0 0.0
        %1669 = vmatpush.msra.mxu0 0.0
        %1670 = vmatpush.msra.mxu0 0.0
        %1671 = vmatpush.msra.mxu0 0.0
        %1672 = vmatpush.msra.mxu0 0.0
        %1673 = vmatpush.msra.mxu0 0.0
        %1674 = vmatpush.msra.mxu0 0.0
        %1675 = vmatpush.msra.mxu0 0.0
        %1676 = vmatpush.msra.mxu0 0.0
        %1677 = vmatpush.msra.mxu0 0.0
        %1678 = vmatpush.msra.mxu0 0.0
        %1679 = vmatpush.msra.mxu0 0.0
        %1680 = vmatpush.msra.mxu0 0.0
        %1681 = vmatpush.msra.mxu0 %v1459
        %1682 = vmatpush.msra.mxu0 %v1458
        %1683 = vmatmul.f32.gmra.mxu0 %v1665
        %v1684 = vpop.f32.mrf.mxu0
        %v1685 = vadd.f32 0.0, %v1684
        %1686 = vdwg.mxu0
        %v1688 = vsel %vm1464, %v1635, 0
        %1690 = vmatpush.msra.mxu0 0.0
        %1691 = vmatpush.msra.mxu0 0.0
        %1692 = vmatpush.msra.mxu0 0.0
        %1693 = vmatpush.msra.mxu0 0.0
        %1694 = vmatpush.msra.mxu0 0.0
        %1695 = vmatpush.msra.mxu0 0.0
        %1696 = vmatpush.msra.mxu0 0.0
        %1697 = vmatpush.msra.mxu0 0.0
        %1698 = vmatpush.msra.mxu0 0.0
        %1699 = vmatpush.msra.mxu0 0.0
        %1700 = vmatpush.msra.mxu0 0.0
        %1701 = vmatpush.msra.mxu0 0.0
        %1702 = vmatpush.msra.mxu0 0.0
        %1703 = vmatpush.msra.mxu0 0.0
        %1704 = vmatpush.msra.mxu0 %v1461
        %1705 = vmatpush.msra.mxu0 %v1460
        %1706 = vmatmul.f32.gmra.mxu0 %v1688
        %v1707 = vpop.f32.mrf.mxu0
        %v1708 = vadd.f32 0.0, %v1707
        %1709 = vdwg.mxu0
        %v1711 = vsel %vm1464, %v1636, 0
        %1713 = vmatpush.msra.mxu0 0.0
        %1714 = vmatpush.msra.mxu0 0.0
        %1715 = vmatpush.msra.mxu0 0.0
        %1716 = vmatpush.msra.mxu0 0.0
        %1717 = vmatpush.msra.mxu0 0.0
        %1718 = vmatpush.msra.mxu0 0.0
        %1719 = vmatpush.msra.mxu0 0.0
        %1720 = vmatpush.msra.mxu0 0.0
        %1721 = vmatpush.msra.mxu0 0.0
        %1722 = vmatpush.msra.mxu0 0.0
        %1723 = vmatpush.msra.mxu0 0.0
        %1724 = vmatpush.msra.mxu0 0.0
        %1725 = vmatpush.msra.mxu0 0.0
        %1726 = vmatpush.msra.mxu0 0.0
        %1727 = vmatpush.msra.mxu0 %v1463
        %1728 = vmatpush.msra.mxu0 %v1462
        %1729 = vmatmul.f32.gmra.mxu0 %v1711
        %v1730 = vpop.f32.mrf.mxu0
        %v1731 = vadd.f32 0.0, %v1730
        %1732 = vdwg.mxu0
        %v1733 = vrot.slane %v1708, 4
        %vm1734 = vcmask 1047556
        %v1735 = vsel %vm1734, %v1733, %v1662
        %v1736 = vrot.slane %v1662, 4
        %v1737 = vsel %vm1734, %v1708, %v1736
        %v1739 = vunpack.c.l.s4 1983009808
        %v1740 = vunpack.c.0.s8 %v1739
        %v1741 = vperm.slane %v1735, %v1740
        %v1743 = vunpack.c.l.s4 1983009808
        %v1744 = vunpack.c.0.s8 %v1743
        %v1745 = vperm.slane %v1737, %v1744
        %v1746 = vrot.slane %v1731, 4
        %v1747 = vsel %vm1734, %v1746, %v1685
        %v1748 = vrot.slane %v1685, 4
        %v1749 = vsel %vm1734, %v1731, %v1748
        %v1751 = vunpack.c.l.s4 1983009808
        %v1752 = vunpack.c.0.s8 %v1751
        %v1753 = vperm.slane %v1747, %v1752
        %v1755 = vunpack.c.l.s4 1983009808
        %v1756 = vunpack.c.0.s8 %v1755
        %v1757 = vperm.slane %v1749, %v1756
        %v1758 = vrot.slane %v1753, 4
        %v1759 = vsel %vm1734, %v1758, %v1741
        %v1760 = vrot.slane %v1741, 4
        %v1761 = vsel %vm1734, %v1753, %v1760
        %v1763 = vunpack.c.l.s4 1934713408
        %v1764 = vunpack.c.0.s8 %v1763
        %v1765 = vperm.slane %v1759, %v1764
        %v1767 = vunpack.c.l.s4 1934713408
        %v1768 = vunpack.c.0.s8 %v1767
        %v1769 = vperm.slane %v1761, %v1768
        %v1770 = vrot.slane %v1757, 4
        %v1771 = vsel %vm1734, %v1770, %v1745
        %v1772 = vrot.slane %v1745, 4
        %v1773 = vsel %vm1734, %v1757, %v1772
        %v1775 = vunpack.c.l.s4 1934713408
        %v1776 = vunpack.c.0.s8 %v1775
        %v1777 = vperm.slane %v1771, %v1776
        %v1779 = vunpack.c.l.s4 1934713408
        %v1780 = vunpack.c.0.s8 %v1779
        %v1781 = vperm.slane %v1773, %v1780
        %v1782 = vrot.slane %v1765, 4
        %v1783 = vsel %vm1734, 0.0, %v1782
        %v1784 = vrot.slane %v1769, 4
        %v1785 = vsel %vm1734, 0.0, %v1784
        %v1786 = vrot.slane %v1777, 4
        %v1787 = vsel %vm1734, 0.0, %v1786
        %v1788 = vrot.slane %v1781, 4
        %v1789 = vsel %vm1734, 0.0, %v1788
        %v1790 = vsel %vm1734, %v1784, %v1765
        %v1792 = vunpack.c.l.s4 1983009808
        %v1793 = vunpack.c.0.s8 %v1792
        %v1794 = vperm.slane %v1790, %v1793
        %v1795 = vrot.slane %v1785, 4
        %v1796 = vsel %vm1734, %v1795, %v1783
        %v1798 = vunpack.c.l.s4 1983009808
        %v1799 = vunpack.c.0.s8 %v1798
        %v1800 = vperm.slane %v1796, %v1799
        %v1801 = vsel %vm1734, %v1788, %v1777
        %v1803 = vunpack.c.l.s4 1983009808
        %v1804 = vunpack.c.0.s8 %v1803
        %v1805 = vperm.slane %v1801, %v1804
        %v1806 = vrot.slane %v1789, 4
        %v1807 = vsel %vm1734, %v1806, %v1787
        %v1809 = vunpack.c.l.s4 1983009808
        %v1810 = vunpack.c.0.s8 %v1809
        %v1811 = vperm.slane %v1807, %v1810
        %v1812 = vrot.slane %v1800, 4
        %v1813 = vsel %vm1734, %v1812, %v1794
        %v1814 = vrot.slane %v1794, 4
        %v1815 = vsel %vm1734, %v1800, %v1814
        %v1817 = vunpack.c.l.s4 1934713408
        %v1818 = vunpack.c.0.s8 %v1817
        %v1819 = vperm.slane %v1813, %v1818
        %v1821 = vunpack.c.l.s4 1934713408
        %v1822 = vunpack.c.0.s8 %v1821
        %v1823 = vperm.slane %v1815, %v1822
        %v1824 = vrot.slane %v1811, 4
        %v1825 = vsel %vm1734, %v1824, %v1805
        %v1826 = vrot.slane %v1805, 4
        %v1827 = vsel %vm1734, %v1811, %v1826
        %v1829 = vunpack.c.l.s4 1934713408
        %v1830 = vunpack.c.0.s8 %v1829
        %v1831 = vperm.slane %v1825, %v1830
        %v1833 = vunpack.c.l.s4 1934713408
        %v1834 = vunpack.c.0.s8 %v1833
        %v1835 = vperm.slane %v1827, %v1834
        %v1836 = vrot.slane %v1831, 4
        %v1837 = vsel %vm1734, %v1836, %v1819
        %v1838 = vrot.slane %v1819, 4
        %v1839 = vsel %vm1734, %v1831, %v1838
        %v1840 = vrot.slane %v1835, 4
        %v1841 = vsel %vm1734, %v1840, %v1823
        %v1842 = vrot.slane %v1823, 4
        %v1843 = vsel %vm1734, %v1835, %v1842
        %1845 = vrot.lane.b32.xlu0 %v1839, 16
        %v1846 = vpop.permute.xlu0 %1845
        %1849 = vrot.lane.b32.xlu0 %v1841, 32
        %v1850 = vpop.permute.xlu0 %1849
        %1853 = vrot.lane.b32.xlu0 %v1843, 48
        %v1854 = vpop.permute.xlu0 %1853
        %v1856 = vsel %vm1464, %v1837, %v1846
        %vm1857 = vcmask 261120
        %v1858 = vsel %vm1857, %v1856, %v1850
        %vm1859 = vcmask 392192
        %v1860 = vsel %vm1859, %v1858, %v1854
        %v1861 = vld [vmem:[%s3] sm:$0xff]
        %v1862 = vld [vmem:[%s3 + $0x8] sm:$0xff]
        %v1863 = vld [vmem:[%s3 + $0x10] sm:$0xff]
        %v1864 = vld [vmem:[%s3 + $0x18] sm:$0xff]
        %v1865 = vld [vmem:[%s3 + $0x20] sm:$0xff]
        %v1866 = vld [vmem:[%s3 + $0x28] sm:$0xff]
        %v1867 = vld [vmem:[%s3 + $0x30] sm:$0xff]
        %v1868 = vld [vmem:[%s3 + $0x38] sm:$0xff]
        %v1869 = vld [vmem:[%s4] sm:$0x1]
        %v1871 = vperm.slane %v1869, 0
        %vm1873 = vcmask 523264
        %v1875 = vsel %vm1873, %v1860, 0
        %1877 = vmatpush.msra.mxu0 0.0
        %1878 = vmatpush.msra.mxu0 0.0
        %1879 = vmatpush.msra.mxu0 0.0
        %1880 = vmatpush.msra.mxu0 0.0
        %1881 = vmatpush.msra.mxu0 0.0
        %1882 = vmatpush.msra.mxu0 0.0
        %1883 = vmatpush.msra.mxu0 0.0
        %1884 = vmatpush.msra.mxu0 0.0
        %1885 = vmatpush.msra.mxu0 %v1868
        %1886 = vmatpush.msra.mxu0 %v1867
        %1887 = vmatpush.msra.mxu0 %v1866
        %1888 = vmatpush.msra.mxu0 %v1865
        %1889 = vmatpush.msra.mxu0 %v1864
        %1890 = vmatpush.msra.mxu0 %v1863
        %1891 = vmatpush.msra.mxu0 %v1862
        %1892 = vmatpush.msra.mxu0 %v1861
        %1893 = vmatmul.f32.gmra.mxu0 %v1875
        %v1894 = vpop.f32.mrf.mxu0
        %v1895 = vadd.f32 %v1871, %v1894
        %1896 = vdwg.mxu0
        %s1897 = scalar_lea.vmem %s485, %s1441 [#allocation4]
        %v1898 = vld [vmem:[%s1897] sm:$0xff]
        %v1899 = vadd.f32 %v1898, %v1895
        %v1900 = vld [vmem:[%s7] sm:$0x1]
        %v1901 = vld [vmem:[%s8] sm:$0x1]
        %v1902 = vsel %vm1873, %v1899, 0.0
        %1903 = vadd.xlane.f32.xlu0 %v1902
        %v1904 = vpop.xlane.xlu0 %1903
        %v1905 = vrcp.pop 64.0
        %v1906 = vmul.f32 64.0, %v1905
        %v1907 = vsub.f32 1.0, %v1906
        %v1908 = vmul.f32 %v1905, %v1907
        %v1909 = vadd.f32 %v1905, %v1908
        %vm1910 = vweird.f32 %v1905
        %v1911 = vsel %vm1910, %v1905, %v1909
        %v1912 = vmul.f32 %v1904, %v1911
        %v1913 = vsub.f32 %v1899, %v1912
        %v1914 = vmul.f32 %v1913, %v1913
        %v1915 = vsel %vm1873, %v1914, 0.0
        %1916 = vadd.xlane.f32.xlu0 %v1915
        %v1917 = vpop.xlane.xlu0 %1916
        %v1918 = vmul.f32 %v1917, %v1911
        %v1919 = vadd.f32 %v1918, 1e-05
        %v1920 = vrsqrt.pop %v1919
        %v1921 = vmul.f32 %v1920, %v1919
        %v1922 = vmul.f32 %v1921, %v1920
        %v1923 = vmul.f32 0.5, %v1922
        %v1924 = vsub.f32 1.5, %v1923
        %v1925 = vmul.f32 %v1920, %v1924
        %vm1926 = vweird.f32 %v1919
        %vm1927 = vweird.f32 %v1920
        %vm1928 = vmor %vm1926, %vm1927
        %v1929 = vsel %vm1928, %v1920, %v1925
        %v1930 = vmul.f32 %v1913, %v1929
        %v1932 = vperm.slane %v1900, 0
        %v1934 = vmul.f32 %v1930, %v1932
        %v1936 = vperm.slane %v1901, 0
        %v1938 = vadd.f32 %v1934, %v1936
        %v1939 = vld [vmem:[#allocation9] sm:$0xff]
        %v1940 = vld [vmem:[#allocation9 + $0x8] sm:$0xff]
        %v1941 = vld [vmem:[#allocation9 + $0x10] sm:$0xff]
        %v1942 = vld [vmem:[#allocation9 + $0x18] sm:$0xff]
        %v1943 = vld [vmem:[#allocation9 + $0x20] sm:$0xff]
        %v1944 = vld [vmem:[#allocation9 + $0x28] sm:$0xff]
        %v1945 = vld [vmem:[#allocation9 + $0x30] sm:$0xff]
        %v1946 = vld [vmem:[#allocation9 + $0x38] sm:$0xff]
        %v1947 = vld [vmem:[%s10] sm:$0x1]
        %v1949 = vperm.slane %v1947, 0
        %v1952 = vsel %vm1873, %v1938, 0
        %1954 = vmatpush.msra.mxu0 0.0
        %1955 = vmatpush.msra.mxu0 0.0
        %1956 = vmatpush.msra.mxu0 0.0
        %1957 = vmatpush.msra.mxu0 0.0
        %1958 = vmatpush.msra.mxu0 0.0
        %1959 = vmatpush.msra.mxu0 0.0
        %1960 = vmatpush.msra.mxu0 0.0
        %1961 = vmatpush.msra.mxu0 0.0
        %1962 = vmatpush.msra.mxu0 %v1946
        %1963 = vmatpush.msra.mxu0 %v1945
        %1964 = vmatpush.msra.mxu0 %v1944
        %1965 = vmatpush.msra.mxu0 %v1943
        %1966 = vmatpush.msra.mxu0 %v1942
        %1967 = vmatpush.msra.mxu0 %v1941
        %1968 = vmatpush.msra.mxu0 %v1940
        %1969 = vmatpush.msra.mxu0 %v1939
        %1970 = vmatmul.f32.gmra.mxu0 %v1952
        %v1971 = vpop.f32.mrf.mxu0
        %v1972 = vadd.f32 %v1949, %v1971
        %1973 = vdwg.mxu0
        %v1974 = vmax.f32 %v1972, 0.0
        %v1975 = vld [vmem:[%s11] sm:$0xff]
        %v1976 = vld [vmem:[%s11 + $0x8] sm:$0xff]
        %v1977 = vld [vmem:[%s11 + $0x10] sm:$0xff]
        %v1978 = vld [vmem:[%s11 + $0x18] sm:$0xff]
        %v1979 = vld [vmem:[%s11 + $0x20] sm:$0xff]
        %v1980 = vld [vmem:[%s11 + $0x28] sm:$0xff]
        %v1981 = vld [vmem:[%s11 + $0x30] sm:$0xff]
        %v1982 = vld [vmem:[%s11 + $0x38] sm:$0xff]
        %v1983 = vld [vmem:[%s11 + $0x40] sm:$0xff]
        %v1984 = vld [vmem:[%s11 + $0x48] sm:$0xff]
        %v1985 = vld [vmem:[%s11 + $0x50] sm:$0xff]
        %v1986 = vld [vmem:[%s11 + $0x58] sm:$0xff]
        %v1987 = vld [vmem:[%s11 + $0x60] sm:$0xff]
        %v1988 = vld [vmem:[%s11 + $0x68] sm:$0xff]
        %v1989 = vld [vmem:[%s11 + $0x70] sm:$0xff]
        %v1990 = vld [vmem:[%s11 + $0x78] sm:$0xff]
        %v1991 = vld [vmem:[%s12] sm:$0x1]
        %v1993 = vperm.slane %v1991, 0
        %1995 = vmatpush.msra.mxu0 %v1990
        %1996 = vmatpush.msra.mxu0 %v1989
        %1997 = vmatpush.msra.mxu0 %v1988
        %1998 = vmatpush.msra.mxu0 %v1987
        %1999 = vmatpush.msra.mxu0 %v1986
        %2000 = vmatpush.msra.mxu0 %v1985
        %2001 = vmatpush.msra.mxu0 %v1984
        %2002 = vmatpush.msra.mxu0 %v1983
        %2003 = vmatpush.msra.mxu0 %v1982
        %2004 = vmatpush.msra.mxu0 %v1981
        %2005 = vmatpush.msra.mxu0 %v1980
        %2006 = vmatpush.msra.mxu0 %v1979
        %2007 = vmatpush.msra.mxu0 %v1978
        %2008 = vmatpush.msra.mxu0 %v1977
        %2009 = vmatpush.msra.mxu0 %v1976
        %2010 = vmatpush.msra.mxu0 %v1975
        %2011 = vmatmul.f32.gmra.mxu0 %v1974
        %v2012 = vpop.f32.mrf.mxu0
        %v2013 = vadd.f32 %v1993, %v2012
        %2014 = vdwg.mxu0
        %v2015 = vadd.f32 %v1899, %v2013
        %2016 = vst.msk [vmem:[%s538] sm:$0xff] %vm1873, %v2015
        %s2017 = sand.u32 %s336, 1
        %s2018 = scalar_lea.sflag [#allocation6], %s2017
        %s2019 = sand.u32 %s336, 1
        %s2020 = smul.addr %s2019, 8
        %s2021 = scalar_lea.vmem [#allocation10], %s2020
        %s2022 = sand.u32 %s364, 1
        %s2023 = scalar_lea.sflag [#allocation12], %s2022
        %s2024 = sand.u32 %s364, 1
        %s2025 = smul.addr %s2024, 32
        %s2026 = scalar_lea.vmem [#allocation11], %s2025
        // Predicated region
        $region89: #{tpu_custom_call.1} parent=71 // pred_check
          %p2027 = pneg %p346
        $region90: #{tpu_custom_call.1} parent=71 // pred_check_branch
          %2029 = sbr.rel (%p2027) target = $region92
        $region91: #{tpu_custom_call.1} parent=71 // pred_region
          %2031 = vsyncadd %s2018, 0
          %s2032 = smul.addr %s40, 2
          %s2033 = sadd.s32 %s41, %s2032
          %s2034 = smul.addr %s2033, 8
          %s2035 = scalar_lea.hbm %s13, %s2034
          %s2037 = sshll.u32 %s2021, 4
          %s2038 = int_to_ptr.vmem [resolvable:$true] %s2037
          %s2039 = sshll.u32 %s2035, 4
          %s2040 = int_to_ptr.hbm [resolvable:$true] %s2039
          %2042 = dma.vmem_to_hbm [thread:$0]  %s2038, 128, %s2040, %s2018
        $region92: #{tpu_custom_call.1} parent=71 // pred_fallthru
          _
        // Predicated region
        $region93: #{tpu_custom_call.1} parent=71 // pred_check
          %p2043 = pneg %p374
        $region94: #{tpu_custom_call.1} parent=71 // pred_check_branch
          %2045 = sbr.rel (%p2043) target = $region96
        $region95: #{tpu_custom_call.1} parent=71 // pred_region
          %2047 = vsyncadd %s2023, 0
          %s2048 = smul.addr %s40, 8
          %s2049 = sadd.s32 %s41, %s2048
          %s2050 = smul.addr %s2049, 8
          %s2051 = scalar_lea.hbm %s14, %s2050
          %s2052 = sshll.u32 %s2026, 4
          %s2053 = int_to_ptr.vmem [resolvable:$true] %s2052
          %s2054 = sshll.u32 %s2051, 4
          %s2055 = int_to_ptr.hbm [resolvable:$true] %s2054
          %2060 = dma.vmem_to_hbm [thread:$0]  %s2053, 512, %s2055, %s2023, 128, 256, 8
        $region96: #{tpu_custom_call.1} parent=71 // pred_fallthru
          _
      $region72: #{tpu_custom_call.1} parent=5 // pred_fallthru
        _
      %p2061 = scmp.le.s32.totalorder 2, %s31
      // Predicated region
      $region97: #{tpu_custom_call.1} parent=5 // pred_check
        %p2062 = pneg %p2061
      $region98: #{tpu_custom_call.1} parent=5 // pred_check_branch
        %2064 = sbr.rel (%p2062) target = $region100
      $region99: #{tpu_custom_call.1} parent=5 // pred_region
        %s2065 = ssub.s32 %s31, 2
        // Predicated region
        $region101: #{tpu_custom_call.1} parent=99 // pred_check
          %p2066 = pneg %p352
        $region102: #{tpu_custom_call.1} parent=99 // pred_check_branch
          %2068 = sbr.rel (%p2066) target = $region104
        $region103: #{tpu_custom_call.1} parent=99 // pred_region
          %s2069 = sand.u32 %s337, 1
          %s2070 = scalar_lea.sflag [#allocation6], %s2069
          %s2071 = sand.u32 %s337, 1
          %s2072 = smul.addr %s2071, 8
          %s2073 = scalar_lea.vmem [#allocation10], %s2072
          %2075 = dma.done %s2070, 128
        $region104: #{tpu_custom_call.1} parent=99 // pred_fallthru
          _
        // Predicated region
        $region105: #{tpu_custom_call.1} parent=99 // pred_check
          %p2076 = pneg %p380
        $region106: #{tpu_custom_call.1} parent=99 // pred_check_branch
          %2078 = sbr.rel (%p2076) target = $region108
        $region107: #{tpu_custom_call.1} parent=99 // pred_region
          %s2079 = sand.u32 %s365, 1
          %s2080 = scalar_lea.sflag [#allocation12], %s2079
          %s2081 = sand.u32 %s365, 1
          %s2082 = smul.addr %s2081, 32
          %s2083 = scalar_lea.vmem [#allocation11], %s2082
          %2085 = dma.done %s2080, 512
        $region108: #{tpu_custom_call.1} parent=99 // pred_fallthru
          _
      $region100: #{tpu_custom_call.1} parent=5 // pred_fallthru
        _
    $region6: #{tpu_custom_call.1} parent=1 // loop_footer
      %s35 = sadd.s32 1, %s31
    $region7: #{tpu_custom_call.1} parent=1 // loop_footer_branch
      %30 = sbr.rel target = $region3
    $region8: #{tpu_custom_call.1} parent=1 // loop_exit
      _
    %2086 = vsyncpa [#allocation5], 1
    %s2087 = scalar_lea.sflag [#allocation5], 1
    %2088 = vsyncpa %s2087, 1
    %2089 = vsyncpa [#allocation8], 1
    %2090 = vsyncpa [#allocation6], 1
    %s2091 = scalar_lea.sflag [#allocation6], 1
    %2092 = vsyncpa %s2091, 1
    %2093 = vsyncpa [#allocation12], 1
    %s2094 = scalar_lea.sflag [#allocation12], 1
    %2095 = vsyncpa %s2094, 1

</llo_original>
